<compile_context>
chip_gen: v5e
topology: v5e:2x2
jax: 0.10.0
libtpu: 0.0.40
codegen_flags: <defaults>
</compile_context>

<pallas_src>
import functools

import jax
import jax.numpy as jnp
from jax.experimental import pallas as pl
from jax.experimental.pallas import tpu as pltpu

LATENT_DIM = 32
OUT_DIM = 64
BATCH = 8
BN_EPS = 0.8          # nn.BatchNorm1d(out_feat, 0.8) -> eps = 0.8
LEAKY_SLOPE = 0.2

HIDDEN = (128, 256, 512, 1024)


def _leaky_relu(x):
    return jnp.where(x > 0, x, LEAKY_SLOPE * x)


def generator_kernel(z_ref,
                     w1_ref, b1_ref,
                     w2_ref, g2_ref, be2_ref,
                     w3_ref, g3_ref, be3_ref,
                     w4_ref, g4_ref, be4_ref,
                     w5_ref, b5_ref,
                     out_ref):
    """Fused 5-layer MLP. Weights bf16; f32 accumulation and f32 BN math."""

    def bn_block(h_f32, w_ref, g_ref, be_ref):
        # Linear (bias omitted: exactly cancelled by BN mean subtraction),
        # training-mode BatchNorm1d (biased var, eps=0.8), LeakyReLU(0.2).
        y = jnp.dot(h_f32.astype(jnp.bfloat16), w_ref[...],
                    preferred_element_type=jnp.float32)
        mean = jnp.mean(y, axis=0, keepdims=True)
        mean_sq = jnp.mean(y * y, axis=0, keepdims=True)
        var = mean_sq - mean * mean                        # one-pass variance
        scale = g_ref[...] * jax.lax.rsqrt(var + BN_EPS)   # gamma folded in
        return _leaky_relu((y - mean) * scale + be_ref[...])

    # Block 1: Linear -> LeakyReLU (no norm, so bias is kept)
    h = jnp.dot(z_ref[...].astype(jnp.bfloat16), w1_ref[...],
                preferred_element_type=jnp.float32)
    h = _leaky_relu(h + b1_ref[...])

    # Blocks 2-4: Linear -> BatchNorm -> LeakyReLU
    h = bn_block(h, w2_ref, g2_ref, be2_ref)
    h = bn_block(h, w3_ref, g3_ref, be3_ref)
    h = bn_block(h, w4_ref, g4_ref, be4_ref)

    # Output head: Linear(1024, dim)
    out = jnp.dot(h.astype(jnp.bfloat16), w5_ref[...],
                  preferred_element_type=jnp.float32) + b5_ref[...]
    out_ref[...] = out.astype(out_ref.dtype)


def _cost_estimate(batch):
    dims = (LATENT_DIM,) + HIDDEN + (OUT_DIM,)
    macs = sum(fi * fo for fi, fo in zip(dims[:-1], dims[1:]))
    flops = 2 * batch * macs
    transcendentals = sum(HIDDEN[1:])               # one rsqrt per BN feature
    small_f32 = HIDDEN[0] + OUT_DIM + 2 * sum(HIDDEN[1:])   # b1,b5,gamma,beta
    bytes_accessed = (2 * macs                       # bf16 weights
                      + 4 * small_f32
                      + 4 * batch * LATENT_DIM       # z in
                      + 4 * batch * OUT_DIM)         # img out
    return pl.CostEstimate(flops=flops,
                           transcendentals=transcendentals,
                           bytes_accessed=bytes_accessed)


@jax.jit
def generator_forward(z, params):
    """z: (B, latent_dim) float32 -> img: (B, dim) float32."""
    flat = [
        params["w1"], params["b1"],
        params["w2"], params["g2"], params["be2"],
        params["w3"], params["g3"], params["be3"],
        params["w4"], params["g4"], params["be4"],
        params["w5"], params["b5"],
    ]
    n_in = 1 + len(flat)
    vmem_spec = pl.BlockSpec(memory_space=pltpu.MemorySpace.VMEM)
    out = pl.pallas_call(
        generator_kernel,
        out_shape=jax.ShapeDtypeStruct((z.shape[0], OUT_DIM), jnp.float32),
        in_specs=[vmem_spec] * n_in,
        out_specs=vmem_spec,
        compiler_params=pltpu.CompilerParams(vmem_limit_bytes=16 << 20),
        cost_estimate=_cost_estimate(z.shape[0]),
    )(z, *flat)
    # img = img.view(img.size(0), opt.dim)  -- already (B, dim)
    return out


def init_params(key):
    """Deterministic synthetic params; shapes match the PyTorch module.

    Weights are stored as bf16 (streamed to the kernel as-is); biases and
    BatchNorm affine params stay f32.
    """
    dims = (LATENT_DIM,) + HIDDEN + (OUT_DIM,)
    params = {}
    keys = jax.random.split(key, len(dims) - 1)
    for i, (fan_in, fan_out) in enumerate(zip(dims[:-1], dims[1:]), start=1):
        kw, kb = jax.random.split(keys[i - 1])
        bound = 1.0 / jnp.sqrt(fan_in)
        w = jax.random.uniform(kw, (fan_in, fan_out), jnp.float32, -bound, bound)
        params[f"w{i}"] = w.astype(jnp.bfloat16)
        params[f"b{i}"] = jax.random.uniform(
            kb, (1, fan_out), jnp.float32, -bound, bound)
    # BatchNorm affine params for blocks 2..4 (gamma=1, beta=0 at init)
    for i, feat in zip((2, 3, 4), HIDDEN[1:]):
        params[f"g{i}"] = jnp.ones((1, feat), jnp.float32)
        params[f"be{i}"] = jnp.zeros((1, feat), jnp.float32)
    return params


def reference_forward(z, params):
    """Pure-JAX reference with the original PyTorch structure.

    Keeps the b2/b3/b4 biases, unfolded gamma and two-pass variance; uses the
    same bf16-weight / f32-accumulate matmul policy as the kernel.
    """
    def dot(h, w):
        return jnp.dot(h.astype(jnp.bfloat16), w,
                       preferred_element_type=jnp.float32)

    h = _leaky_relu(dot(z, params["w1"]) + params["b1"])
    for i in (2, 3, 4):
        y = dot(h, params[f"w{i}"]) + params[f"b{i}"]
        mean = jnp.mean(y, axis=0, keepdims=True)
        var = jnp.mean((y - mean) ** 2, axis=0, keepdims=True)
        h = _leaky_relu((y - mean) * jax.lax.rsqrt(var + BN_EPS)
                        * params[f"g{i}"] + params[f"be{i}"])
    return dot(h, params["w5"]) + params["b5"]


if __name__ == "__main__":
    key = jax.random.PRNGKey(0)
    kp, kz = jax.random.split(key)
    params = init_params(kp)
    # z ~ N(0, 1), matching Generator.generate's prior
    z = jax.random.normal(kz, (BATCH, LATENT_DIM), dtype=jnp.float32)

    img = generator_forward(z, params)
    jax.block_until_ready(img)

    ref = reference_forward(z, params)
    assert img.shape == (BATCH, OUT_DIM)
    # Kernel drops BN-cancelled biases, folds gamma, and uses one-pass
    # variance; these are exact in real arithmetic, tolerance covers rounding.
    assert jnp.allclose(img, ref, atol=1e-2, rtol=1e-2)

    print("KERNEL_OK")
</pallas_src>

<mosaic_0001>
module attributes {stable_mosaic.version = 11 : i64} {
  func.func @generator_kernel(%arg0: memref<8x32xf32, #tpu.memory_space<vmem>>, %arg1: memref<32x128xbf16, #tpu.memory_space<vmem>>, %arg2: memref<1x128xf32, #tpu.memory_space<vmem>>, %arg3: memref<128x256xbf16, #tpu.memory_space<vmem>>, %arg4: memref<1x256xf32, #tpu.memory_space<vmem>>, %arg5: memref<1x256xf32, #tpu.memory_space<vmem>>, %arg6: memref<256x512xbf16, #tpu.memory_space<vmem>>, %arg7: memref<1x512xf32, #tpu.memory_space<vmem>>, %arg8: memref<1x512xf32, #tpu.memory_space<vmem>>, %arg9: memref<512x1024xbf16, #tpu.memory_space<vmem>>, %arg10: memref<1x1024xf32, #tpu.memory_space<vmem>>, %arg11: memref<1x1024xf32, #tpu.memory_space<vmem>>, %arg12: memref<1024x64xbf16, #tpu.memory_space<vmem>>, %arg13: memref<1x64xf32, #tpu.memory_space<vmem>>, %arg14: memref<8x64xf32, #tpu.memory_space<vmem>>) attributes {dimension_semantics = [], scalar_prefetch = 0 : i64, scratch_operands = 0 : i64, tpu.core_type = #tpu.core_type<tc>} {
    %c0 = arith.constant 0 : index
    %c0_0 = arith.constant 0 : index
    %0 = vector.load %arg0[%c0, %c0_0] : memref<8x32xf32, #tpu.memory_space<vmem>>, vector<8x32xf32>
    %1 = arith.truncf %0 : vector<8x32xf32> to vector<8x32xbf16>
    %c0_1 = arith.constant 0 : index
    %c0_2 = arith.constant 0 : index
    %2 = vector.load %arg1[%c0_1, %c0_2] : memref<32x128xbf16, #tpu.memory_space<vmem>>, vector<32x128xbf16>
    %cst = arith.constant dense<0.000000e+00> : vector<8x128xf32>
    %3 = tpu.matmul %1, %2, %cst {dimension_numbers = #tpu.dot_dimension_numbers<[1], [0], [0], [1], [0, 0, 1, 1], [], []>} : vector<8x32xbf16>, vector<32x128xbf16>, vector<8x128xf32> -> vector<8x128xf32>
    %c0_3 = arith.constant 0 : index
    %c0_4 = arith.constant 0 : index
    %4 = vector.load %arg2[%c0_3, %c0_4] : memref<1x128xf32, #tpu.memory_space<vmem>>, vector<1x128xf32>
    %5 = vector.broadcast %4 : vector<1x128xf32> to vector<8x128xf32>
    %6 = arith.addf %3, %5 : vector<8x128xf32>
    %cst_5 = arith.constant 0.000000e+00 : f32
    %7 = vector.broadcast %cst_5 : f32 to vector<8x128xf32>
    %8 = arith.cmpf ogt, %6, %7 : vector<8x128xf32>
    %cst_6 = arith.constant 2.000000e-01 : f32
    %9 = vector.broadcast %cst_6 : f32 to vector<8x128xf32>
    %10 = arith.mulf %9, %6 : vector<8x128xf32>
    %11 = arith.select %8, %6, %10 : vector<8x128xi1>, vector<8x128xf32>
    %12 = arith.truncf %11 : vector<8x128xf32> to vector<8x128xbf16>
    %c0_7 = arith.constant 0 : index
    %c0_8 = arith.constant 0 : index
    %13 = vector.load %arg3[%c0_7, %c0_8] : memref<128x256xbf16, #tpu.memory_space<vmem>>, vector<128x256xbf16>
    %cst_9 = arith.constant dense<0.000000e+00> : vector<8x256xf32>
    %14 = tpu.matmul %12, %13, %cst_9 {dimension_numbers = #tpu.dot_dimension_numbers<[1], [0], [0], [1], [0, 0, 1, 1], [], []>} : vector<8x128xbf16>, vector<128x256xbf16>, vector<8x256xf32> -> vector<8x256xf32>
    %cst_10 = arith.constant dense<0.000000e+00> : vector<256xf32>
    %15 = vector.multi_reduction <add>, %14, %cst_10 [0] : vector<8x256xf32> to vector<256xf32>
    %16 = vector.shape_cast %15 : vector<256xf32> to vector<1x256xf32>
    %cst_11 = arith.constant 8.000000e+00 : f32
    %17 = vector.broadcast %cst_11 : f32 to vector<1x256xf32>
    %18 = arith.divf %16, %17 : vector<1x256xf32>
    %19 = arith.mulf %14, %14 : vector<8x256xf32>
    %cst_12 = arith.constant dense<0.000000e+00> : vector<256xf32>
    %20 = vector.multi_reduction <add>, %19, %cst_12 [0] : vector<8x256xf32> to vector<256xf32>
    %21 = vector.shape_cast %20 : vector<256xf32> to vector<1x256xf32>
    %cst_13 = arith.constant 8.000000e+00 : f32
    %22 = vector.broadcast %cst_13 : f32 to vector<1x256xf32>
    %23 = arith.divf %21, %22 : vector<1x256xf32>
    %24 = arith.mulf %18, %18 : vector<1x256xf32>
    %25 = arith.subf %23, %24 : vector<1x256xf32>
    %c0_14 = arith.constant 0 : index
    %c0_15 = arith.constant 0 : index
    %26 = vector.load %arg4[%c0_14, %c0_15] : memref<1x256xf32, #tpu.memory_space<vmem>>, vector<1x256xf32>
    %cst_16 = arith.constant 8.000000e-01 : f32
    %27 = vector.broadcast %cst_16 : f32 to vector<1x256xf32>
    %28 = arith.addf %25, %27 : vector<1x256xf32>
    %29 = math.rsqrt %28 : vector<1x256xf32>
    %30 = arith.mulf %26, %29 : vector<1x256xf32>
    %31 = vector.broadcast %18 : vector<1x256xf32> to vector<8x256xf32>
    %32 = arith.subf %14, %31 : vector<8x256xf32>
    %33 = vector.broadcast %30 : vector<1x256xf32> to vector<8x256xf32>
    %34 = arith.mulf %32, %33 : vector<8x256xf32>
    %c0_17 = arith.constant 0 : index
    %c0_18 = arith.constant 0 : index
    %35 = vector.load %arg5[%c0_17, %c0_18] : memref<1x256xf32, #tpu.memory_space<vmem>>, vector<1x256xf32>
    %36 = vector.broadcast %35 : vector<1x256xf32> to vector<8x256xf32>
    %37 = arith.addf %34, %36 : vector<8x256xf32>
    %cst_19 = arith.constant 0.000000e+00 : f32
    %38 = vector.broadcast %cst_19 : f32 to vector<8x256xf32>
    %39 = arith.cmpf ogt, %37, %38 : vector<8x256xf32>
    %cst_20 = arith.constant 2.000000e-01 : f32
    %40 = vector.broadcast %cst_20 : f32 to vector<8x256xf32>
    %41 = arith.mulf %40, %37 : vector<8x256xf32>
    %42 = arith.select %39, %37, %41 : vector<8x256xi1>, vector<8x256xf32>
    %43 = arith.truncf %42 : vector<8x256xf32> to vector<8x256xbf16>
    %c0_21 = arith.constant 0 : index
    %c0_22 = arith.constant 0 : index
    %44 = vector.load %arg6[%c0_21, %c0_22] : memref<256x512xbf16, #tpu.memory_space<vmem>>, vector<256x512xbf16>
    %cst_23 = arith.constant dense<0.000000e+00> : vector<8x512xf32>
    %45 = tpu.matmul %43, %44, %cst_23 {dimension_numbers = #tpu.dot_dimension_numbers<[1], [0], [0], [1], [0, 0, 1, 1], [], []>} : vector<8x256xbf16>, vector<256x512xbf16>, vector<8x512xf32> -> vector<8x512xf32>
    %cst_24 = arith.constant dense<0.000000e+00> : vector<512xf32>
    %46 = vector.multi_reduction <add>, %45, %cst_24 [0] : vector<8x512xf32> to vector<512xf32>
    %47 = vector.shape_cast %46 : vector<512xf32> to vector<1x512xf32>
    %cst_25 = arith.constant 8.000000e+00 : f32
    %48 = vector.broadcast %cst_25 : f32 to vector<1x512xf32>
    %49 = arith.divf %47, %48 : vector<1x512xf32>
    %50 = arith.mulf %45, %45 : vector<8x512xf32>
    %cst_26 = arith.constant dense<0.000000e+00> : vector<512xf32>
    %51 = vector.multi_reduction <add>, %50, %cst_26 [0] : vector<8x512xf32> to vector<512xf32>
    %52 = vector.shape_cast %51 : vector<512xf32> to vector<1x512xf32>
    %cst_27 = arith.constant 8.000000e+00 : f32
    %53 = vector.broadcast %cst_27 : f32 to vector<1x512xf32>
    %54 = arith.divf %52, %53 : vector<1x512xf32>
    %55 = arith.mulf %49, %49 : vector<1x512xf32>
    %56 = arith.subf %54, %55 : vector<1x512xf32>
    %c0_28 = arith.constant 0 : index
    %c0_29 = arith.constant 0 : index
    %57 = vector.load %arg7[%c0_28, %c0_29] : memref<1x512xf32, #tpu.memory_space<vmem>>, vector<1x512xf32>
    %cst_30 = arith.constant 8.000000e-01 : f32
    %58 = vector.broadcast %cst_30 : f32 to vector<1x512xf32>
    %59 = arith.addf %56, %58 : vector<1x512xf32>
    %60 = math.rsqrt %59 : vector<1x512xf32>
    %61 = arith.mulf %57, %60 : vector<1x512xf32>
    %62 = vector.broadcast %49 : vector<1x512xf32> to vector<8x512xf32>
    %63 = arith.subf %45, %62 : vector<8x512xf32>
    %64 = vector.broadcast %61 : vector<1x512xf32> to vector<8x512xf32>
    %65 = arith.mulf %63, %64 : vector<8x512xf32>
    %c0_31 = arith.constant 0 : index
    %c0_32 = arith.constant 0 : index
    %66 = vector.load %arg8[%c0_31, %c0_32] : memref<1x512xf32, #tpu.memory_space<vmem>>, vector<1x512xf32>
    %67 = vector.broadcast %66 : vector<1x512xf32> to vector<8x512xf32>
    %68 = arith.addf %65, %67 : vector<8x512xf32>
    %cst_33 = arith.constant 0.000000e+00 : f32
    %69 = vector.broadcast %cst_33 : f32 to vector<8x512xf32>
    %70 = arith.cmpf ogt, %68, %69 : vector<8x512xf32>
    %cst_34 = arith.constant 2.000000e-01 : f32
    %71 = vector.broadcast %cst_34 : f32 to vector<8x512xf32>
    %72 = arith.mulf %71, %68 : vector<8x512xf32>
    %73 = arith.select %70, %68, %72 : vector<8x512xi1>, vector<8x512xf32>
    %74 = arith.truncf %73 : vector<8x512xf32> to vector<8x512xbf16>
    %c0_35 = arith.constant 0 : index
    %c0_36 = arith.constant 0 : index
    %75 = vector.load %arg9[%c0_35, %c0_36] : memref<512x1024xbf16, #tpu.memory_space<vmem>>, vector<512x1024xbf16>
    %cst_37 = arith.constant dense<0.000000e+00> : vector<8x1024xf32>
    %76 = tpu.matmul %74, %75, %cst_37 {dimension_numbers = #tpu.dot_dimension_numbers<[1], [0], [0], [1], [0, 0, 1, 1], [], []>} : vector<8x512xbf16>, vector<512x1024xbf16>, vector<8x1024xf32> -> vector<8x1024xf32>
    %cst_38 = arith.constant dense<0.000000e+00> : vector<1024xf32>
    %77 = vector.multi_reduction <add>, %76, %cst_38 [0] : vector<8x1024xf32> to vector<1024xf32>
    %78 = vector.shape_cast %77 : vector<1024xf32> to vector<1x1024xf32>
    %cst_39 = arith.constant 8.000000e+00 : f32
    %79 = vector.broadcast %cst_39 : f32 to vector<1x1024xf32>
    %80 = arith.divf %78, %79 : vector<1x1024xf32>
    %81 = arith.mulf %76, %76 : vector<8x1024xf32>
    %cst_40 = arith.constant dense<0.000000e+00> : vector<1024xf32>
    %82 = vector.multi_reduction <add>, %81, %cst_40 [0] : vector<8x1024xf32> to vector<1024xf32>
    %83 = vector.shape_cast %82 : vector<1024xf32> to vector<1x1024xf32>
    %cst_41 = arith.constant 8.000000e+00 : f32
    %84 = vector.broadcast %cst_41 : f32 to vector<1x1024xf32>
    %85 = arith.divf %83, %84 : vector<1x1024xf32>
    %86 = arith.mulf %80, %80 : vector<1x1024xf32>
    %87 = arith.subf %85, %86 : vector<1x1024xf32>
    %c0_42 = arith.constant 0 : index
    %c0_43 = arith.constant 0 : index
    %88 = vector.load %arg10[%c0_42, %c0_43] : memref<1x1024xf32, #tpu.memory_space<vmem>>, vector<1x1024xf32>
    %cst_44 = arith.constant 8.000000e-01 : f32
    %89 = vector.broadcast %cst_44 : f32 to vector<1x1024xf32>
    %90 = arith.addf %87, %89 : vector<1x1024xf32>
    %91 = math.rsqrt %90 : vector<1x1024xf32>
    %92 = arith.mulf %88, %91 : vector<1x1024xf32>
    %93 = vector.broadcast %80 : vector<1x1024xf32> to vector<8x1024xf32>
    %94 = arith.subf %76, %93 : vector<8x1024xf32>
    %95 = vector.broadcast %92 : vector<1x1024xf32> to vector<8x1024xf32>
    %96 = arith.mulf %94, %95 : vector<8x1024xf32>
    %c0_45 = arith.constant 0 : index
    %c0_46 = arith.constant 0 : index
    %97 = vector.load %arg11[%c0_45, %c0_46] : memref<1x1024xf32, #tpu.memory_space<vmem>>, vector<1x1024xf32>
    %98 = vector.broadcast %97 : vector<1x1024xf32> to vector<8x1024xf32>
    %99 = arith.addf %96, %98 : vector<8x1024xf32>
    %cst_47 = arith.constant 0.000000e+00 : f32
    %100 = vector.broadcast %cst_47 : f32 to vector<8x1024xf32>
    %101 = arith.cmpf ogt, %99, %100 : vector<8x1024xf32>
    %cst_48 = arith.constant 2.000000e-01 : f32
    %102 = vector.broadcast %cst_48 : f32 to vector<8x1024xf32>
    %103 = arith.mulf %102, %99 : vector<8x1024xf32>
    %104 = arith.select %101, %99, %103 : vector<8x1024xi1>, vector<8x1024xf32>
    %105 = arith.truncf %104 : vector<8x1024xf32> to vector<8x1024xbf16>
    %c0_49 = arith.constant 0 : index
    %c0_50 = arith.constant 0 : index
    %106 = vector.load %arg12[%c0_49, %c0_50] : memref<1024x64xbf16, #tpu.memory_space<vmem>>, vector<1024x64xbf16>
    %cst_51 = arith.constant dense<0.000000e+00> : vector<8x64xf32>
    %107 = tpu.matmul %105, %106, %cst_51 {dimension_numbers = #tpu.dot_dimension_numbers<[1], [0], [0], [1], [0, 0, 1, 1], [], []>} : vector<8x1024xbf16>, vector<1024x64xbf16>, vector<8x64xf32> -> vector<8x64xf32>
    %c0_52 = arith.constant 0 : index
    %c0_53 = arith.constant 0 : index
    %108 = vector.load %arg13[%c0_52, %c0_53] : memref<1x64xf32, #tpu.memory_space<vmem>>, vector<1x64xf32>
    %109 = vector.broadcast %108 : vector<1x64xf32> to vector<8x64xf32>
    %110 = arith.addf %107, %109 : vector<8x64xf32>
    %c0_54 = arith.constant 0 : index
    %c0_55 = arith.constant 0 : index
    %111 = vector.load %arg14[%c0_54, %c0_55] : memref<8x64xf32, #tpu.memory_space<vmem>>, vector<8x64xf32>
    tpu.vector_store %arg14[%c0_54, %c0_55], %110 {strides = array<i32>} : memref<8x64xf32, #tpu.memory_space<vmem>>, vector<8x64xf32>,
    return
  }
}

</mosaic_0001>

<llo_original>
// kernel: generator_forward.1
$region0: #{generator_forward.1}
  #allocation0 [shape = 'u32[]', space=smem, size = 0x4, offset = 0x4, fixed_abs, tag = 'smem constant byte address 0x4 - core index']
  #allocation1 [shape = 'u32[72,128]{1,0:T(1,128)}', space=vmem, size = 0x9000, scoped, tag = 'internal scratch']
  %s0 = inlined_call_operand.vmem [shape: f32[8,32], index: 0, kind: input, shape index: {}]
  %s1 = inlined_call_operand.vmem [shape: bf16[32,128], index: 1, kind: input, shape index: {}]
  %s2 = inlined_call_operand.vmem [shape: f32[1,128], index: 2, kind: input, shape index: {}]
  %s3 = inlined_call_operand.vmem [shape: bf16[128,256], index: 3, kind: input, shape index: {}]
  %s4 = inlined_call_operand.vmem [shape: f32[1,256], index: 4, kind: input, shape index: {}]
  %s5 = inlined_call_operand.vmem [shape: f32[1,256], index: 5, kind: input, shape index: {}]
  %s6 = inlined_call_operand.vmem [shape: bf16[256,512], index: 6, kind: input, shape index: {}]
  %s7 = inlined_call_operand.vmem [shape: f32[1,512], index: 7, kind: input, shape index: {}]
  %s8 = inlined_call_operand.vmem [shape: f32[1,512], index: 8, kind: input, shape index: {}]
  %s9 = inlined_call_operand.hbm [shape: bf16[512,1024], index: 9, kind: input, shape index: {}]
  %s10 = inlined_call_operand.vmem [shape: f32[1,1024], index: 10, kind: input, shape index: {}]
  %s11 = inlined_call_operand.vmem [shape: f32[1,1024], index: 11, kind: input, shape index: {}]
  %s12 = inlined_call_operand.vmem [shape: bf16[1024,64], index: 12, kind: input, shape index: {}]
  %s13 = inlined_call_operand.vmem [shape: f32[1,64], index: 13, kind: input, shape index: {}]
  %s14 = inlined_call_operand.hbm [shape: f32[8,64], index: 14, kind: output, shape index: {}]
  %s15 = sld [smem:[#allocation0]]
  $region70: #{generator_forward.1} parent=0
    _
  %s17 = ssub.s32 1, %s15
  %s18 = scalar_select 0, %s17, %s15
  $region1: #{generator_forward.1} parent=0
    #allocation2 [shape = 'u8[1048576]{0}', space=vmem, size = 0x100000, scoped, tag = 'input window, operand 9, single buffered']
    #allocation3 [shape = 's32[1]{0}', space=sflag, size = 0x4, scoped, tag = 'scoped memory for generator_forward.1']
    #allocation4 [shape = 's32[1]{0}', space=sflag, size = 0x4, scoped, tag = 'scoped memory for generator_forward.1']
    #allocation5 [shape = 'u8[4096]{0}', space=vmem, size = 0x1000, scoped, tag = 'output window, operand 0, single buffered']
    %19 = vsyncpa [#allocation3], 0
    %20 = vsyncpa [#allocation4], 0
    // Predicated region
    $region2: #{generator_forward.1} parent=1 // pred_check
      _
    $region3: #{generator_forward.1} parent=1 // pred_check_branch
      %22 = sbr.rel (0) target = $region5
    $region4: #{generator_forward.1} parent=1 // pred_region
      _
    $region5: #{generator_forward.1} parent=1 // pred_fallthru
      _
    // Predicated region
    $region6: #{generator_forward.1} parent=1 // pred_check
      _
    $region7: #{generator_forward.1} parent=1 // pred_check_branch
      %24 = sbr.rel (0) target = $region9
    $region8: #{generator_forward.1} parent=1 // pred_region
      _
    $region9: #{generator_forward.1} parent=1 // pred_fallthru
      _
    // Predicated region
    $region10: #{generator_forward.1} parent=1 // pred_check
      _
    $region11: #{generator_forward.1} parent=1 // pred_check_branch
      %26 = sbr.rel (0) target = $region13
    $region12: #{generator_forward.1} parent=1 // pred_region
      _
    $region13: #{generator_forward.1} parent=1 // pred_fallthru
      _
    // Predicated region
    $region14: #{generator_forward.1} parent=1 // pred_check
      _
    $region15: #{generator_forward.1} parent=1 // pred_check_branch
      %28 = sbr.rel (0) target = $region17
    $region16: #{generator_forward.1} parent=1 // pred_region
      _
    $region17: #{generator_forward.1} parent=1 // pred_fallthru
      _
    // Predicated region
    $region18: #{generator_forward.1} parent=1 // pred_check
      _
    $region19: #{generator_forward.1} parent=1 // pred_check_branch
      %30 = sbr.rel (0) target = $region21
    $region20: #{generator_forward.1} parent=1 // pred_region
      _
    $region21: #{generator_forward.1} parent=1 // pred_fallthru
      _
    // Predicated region
    $region22: #{generator_forward.1} parent=1 // pred_check
      _
    $region23: #{generator_forward.1} parent=1 // pred_check_branch
      %32 = sbr.rel (0) target = $region25
    $region24: #{generator_forward.1} parent=1 // pred_region
      _
    $region25: #{generator_forward.1} parent=1 // pred_fallthru
      _
    // Predicated region
    $region26: #{generator_forward.1} parent=1 // pred_check
      _
    $region27: #{generator_forward.1} parent=1 // pred_check_branch
      %34 = sbr.rel (0) target = $region29
    $region28: #{generator_forward.1} parent=1 // pred_region
      _
    $region29: #{generator_forward.1} parent=1 // pred_fallthru
      _
    // Predicated region
    $region30: #{generator_forward.1} parent=1 // pred_check
      _
    $region31: #{generator_forward.1} parent=1 // pred_check_branch
      %36 = sbr.rel (0) target = $region33
    $region32: #{generator_forward.1} parent=1 // pred_region
      _
    $region33: #{generator_forward.1} parent=1 // pred_fallthru
      _
    // Predicated region
    $region34: #{generator_forward.1} parent=1 // pred_check
      _
    $region35: #{generator_forward.1} parent=1 // pred_check_branch
      %38 = sbr.rel (0) target = $region37
    $region36: #{generator_forward.1} parent=1 // pred_region
      _
    $region37: #{generator_forward.1} parent=1 // pred_fallthru
      _
    // Predicated region
    $region38: #{generator_forward.1} parent=1 // pred_check
      _
    $region39: #{generator_forward.1} parent=1 // pred_check_branch
      %40 = sbr.rel (0) target = $region41
    $region40: #{generator_forward.1} parent=1 // pred_region
      %42 = vsyncadd [#allocation3], 0
      %s43 = sshll.u32 %s9, 4
      %s44 = int_to_ptr.hbm [resolvable:$true] %s43
      %s45 = sshll.u32 [#allocation2], 4
      %s46 = int_to_ptr.vmem [resolvable:$true] %s45
      %51 = dma.hbm_to_vmem [thread:$0]  %s44, 32768, %s46, [#allocation3], 512, 512, 32
    $region41: #{generator_forward.1} parent=1 // pred_fallthru
      _
    // Predicated region
    $region42: #{generator_forward.1} parent=1 // pred_check
      _
    $region43: #{generator_forward.1} parent=1 // pred_check_branch
      %53 = sbr.rel (0) target = $region45
    $region44: #{generator_forward.1} parent=1 // pred_region
      _
    $region45: #{generator_forward.1} parent=1 // pred_fallthru
      _
    // Predicated region
    $region46: #{generator_forward.1} parent=1 // pred_check
      _
    $region47: #{generator_forward.1} parent=1 // pred_check_branch
      %55 = sbr.rel (0) target = $region49
    $region48: #{generator_forward.1} parent=1 // pred_region
      _
    $region49: #{generator_forward.1} parent=1 // pred_fallthru
      _
    // Predicated region
    $region50: #{generator_forward.1} parent=1 // pred_check
      _
    $region51: #{generator_forward.1} parent=1 // pred_check_branch
      %57 = sbr.rel (0) target = $region53
    $region52: #{generator_forward.1} parent=1 // pred_region
      _
    $region53: #{generator_forward.1} parent=1 // pred_fallthru
      _
    // Predicated region
    $region54: #{generator_forward.1} parent=1 // pred_check
      _
    $region55: #{generator_forward.1} parent=1 // pred_check_branch
      %59 = sbr.rel (0) target = $region57
    $region56: #{generator_forward.1} parent=1 // pred_region
      _
    $region57: #{generator_forward.1} parent=1 // pred_fallthru
      _
    // Predicated region
    $region58: #{generator_forward.1} parent=1 // pred_check
      _
    $region59: #{generator_forward.1} parent=1 // pred_check_branch
      %61 = sbr.rel (0) target = $region61
    $region60: #{generator_forward.1} parent=1 // pred_region
      %63 = dma.done [#allocation3], 32768
    $region61: #{generator_forward.1} parent=1 // pred_fallthru
      _
    %v65 = vld [vmem:[%s0] sm:$0xff]
    %v66 = vpack.c.bf16 %v65, %v65
    %v67 = vld [vmem:[%s1] sm:$0xf]
    %v68 = vld [vmem:[%s1 + $0x4] sm:$0xf]
    %v69 = vld [vmem:[%s1 + $0x8] sm:$0xf]
    %v70 = vld [vmem:[%s1 + $0xc] sm:$0xf]
    %v71 = vld [vmem:[%s2] sm:$0x1]
    %v73 = vperm.slane %v71, 0
    %v79 = vunpack.c.l.b16 %v67
    %v80 = vunpack.c.l.b16 %v68
    %v81 = vunpack.c.l.b16 %v69
    %v82 = vunpack.c.l.b16 %v70
    %v83 = vpack.c.b16 %v80, %v79
    %v84 = vpack.c.b16 %v82, %v81
    %vm87 = vcmask 261120
    %v89 = vsel %vm87, %v66, 0
    %91 = vmatpush.bf16.msra.mxu0 0
    %92 = vmatpush.bf16.msra.mxu0 0
    %93 = vmatpush.bf16.msra.mxu0 0
    %94 = vmatpush.bf16.msra.mxu0 0
    %95 = vmatpush.bf16.msra.mxu0 0
    %96 = vmatpush.bf16.msra.mxu0 0
    %97 = vmatpush.bf16.msra.mxu0 %v84
    %98 = vmatpush.bf16.msra.mxu0 %v83
    %99 = vmatmul.bf16.gmra.mxu0 %v89
    %v100 = vpop.f32.mrf.mxu0
    %v101 = vadd.f32 %v73, %v100
    %v102 = vpop.f32.mrf.mxu0
    %103 = vdwg.mxu0
    %vm104 = vcmp.gt.f32.partialorder %v101, 0.0
    %v105 = vmul.f32 %v101, 0.2
    %v106 = vsel %vm104, %v101, %v105
    %v107 = vpack.c.bf16 %v106, %v106
    %v108 = vld [vmem:[%s3] sm:$0xff]
    %v109 = vld [vmem:[%s3 + $0x8] sm:$0xff]
    %v110 = vld [vmem:[%s3 + $0x10] sm:$0xff]
    %v111 = vld [vmem:[%s3 + $0x18] sm:$0xff]
    %v112 = vld [vmem:[%s3 + $0x20] sm:$0xff]
    %v113 = vld [vmem:[%s3 + $0x28] sm:$0xff]
    %v114 = vld [vmem:[%s3 + $0x30] sm:$0xff]
    %v115 = vld [vmem:[%s3 + $0x38] sm:$0xff]
    %v116 = vld [vmem:[%s3 + $0x40] sm:$0xff]
    %v117 = vld [vmem:[%s3 + $0x48] sm:$0xff]
    %v118 = vld [vmem:[%s3 + $0x50] sm:$0xff]
    %v119 = vld [vmem:[%s3 + $0x58] sm:$0xff]
    %v120 = vld [vmem:[%s3 + $0x60] sm:$0xff]
    %v121 = vld [vmem:[%s3 + $0x68] sm:$0xff]
    %v122 = vld [vmem:[%s3 + $0x70] sm:$0xff]
    %v123 = vld [vmem:[%s3 + $0x78] sm:$0xff]
    %v140 = vunpack.c.l.b16 %v108
    %v141 = vunpack.c.h.b16 %v108
    %v142 = vunpack.c.l.b16 %v109
    %v143 = vunpack.c.h.b16 %v109
    %v144 = vunpack.c.l.b16 %v110
    %v145 = vunpack.c.h.b16 %v110
    %v146 = vunpack.c.l.b16 %v111
    %v147 = vunpack.c.h.b16 %v111
    %v148 = vunpack.c.l.b16 %v112
    %v149 = vunpack.c.h.b16 %v112
    %v150 = vunpack.c.l.b16 %v113
    %v151 = vunpack.c.h.b16 %v113
    %v152 = vunpack.c.l.b16 %v114
    %v153 = vunpack.c.h.b16 %v114
    %v154 = vunpack.c.l.b16 %v115
    %v155 = vunpack.c.h.b16 %v115
    %v156 = vunpack.c.l.b16 %v116
    %v157 = vunpack.c.h.b16 %v116
    %v158 = vunpack.c.l.b16 %v117
    %v159 = vunpack.c.h.b16 %v117
    %v160 = vunpack.c.l.b16 %v118
    %v161 = vunpack.c.h.b16 %v118
    %v162 = vunpack.c.l.b16 %v119
    %v163 = vunpack.c.h.b16 %v119
    %v164 = vunpack.c.l.b16 %v120
    %v165 = vunpack.c.h.b16 %v120
    %v166 = vunpack.c.l.b16 %v121
    %v167 = vunpack.c.h.b16 %v121
    %v168 = vunpack.c.l.b16 %v122
    %v169 = vunpack.c.h.b16 %v122
    %v170 = vunpack.c.l.b16 %v123
    %v171 = vunpack.c.h.b16 %v123
    %v172 = vpack.c.b16 %v142, %v140
    %v173 = vpack.c.b16 %v143, %v141
    %v174 = vpack.c.b16 %v146, %v144
    %v175 = vpack.c.b16 %v147, %v145
    %v176 = vpack.c.b16 %v150, %v148
    %v177 = vpack.c.b16 %v151, %v149
    %v178 = vpack.c.b16 %v154, %v152
    %v179 = vpack.c.b16 %v155, %v153
    %v180 = vpack.c.b16 %v158, %v156
    %v181 = vpack.c.b16 %v159, %v157
    %v182 = vpack.c.b16 %v162, %v160
    %v183 = vpack.c.b16 %v163, %v161
    %v184 = vpack.c.b16 %v166, %v164
    %v185 = vpack.c.b16 %v167, %v165
    %v186 = vpack.c.b16 %v170, %v168
    %v187 = vpack.c.b16 %v171, %v169
    %204 = vmatpush.bf16.msra.mxu0 %v186
    %205 = vmatpush.bf16.msra.mxu0 %v184
    %206 = vmatpush.bf16.msra.mxu0 %v182
    %207 = vmatpush.bf16.msra.mxu0 %v180
    %208 = vmatpush.bf16.msra.mxu0 %v178
    %209 = vmatpush.bf16.msra.mxu0 %v176
    %210 = vmatpush.bf16.msra.mxu0 %v174
    %211 = vmatpush.bf16.msra.mxu0 %v172
    %212 = vmatmul.bf16.gmra.mxu0 %v107
    %v213 = vpop.f32.mrf.mxu0
    %v214 = vadd.f32 0.0, %v213
    %v215 = vpop.f32.mrf.mxu0
    %216 = vdwg.mxu0
    %217 = vmatpush.bf16.msra.mxu0 %v187
    %218 = vmatpush.bf16.msra.mxu0 %v185
    %219 = vmatpush.bf16.msra.mxu0 %v183
    %220 = vmatpush.bf16.msra.mxu0 %v181
    %221 = vmatpush.bf16.msra.mxu0 %v179
    %222 = vmatpush.bf16.msra.mxu0 %v177
    %223 = vmatpush.bf16.msra.mxu0 %v175
    %224 = vmatpush.bf16.msra.mxu0 %v173
    %225 = vmatmul.bf16.gmra.mxu0 %v107
    %v226 = vpop.f32.mrf.mxu0
    %v227 = vadd.f32 0.0, %v226
    %v228 = vpop.f32.mrf.mxu0
    %229 = vdwg.mxu0
    %v230 = vrot.slane %v214, 4
    %v231 = vadd.f32 %v214, %v230
    %v232 = vrot.slane %v231, 2
    %v233 = vadd.f32 %v231, %v232
    %v234 = vrot.slane %v233, 1
    %v235 = vadd.f32 %v233, %v234
    %v236 = vrot.slane %v227, 4
    %v237 = vadd.f32 %v227, %v236
    %v238 = vrot.slane %v237, 2
    %v239 = vadd.f32 %v237, %v238
    %v240 = vrot.slane %v239, 1
    %v241 = vadd.f32 %v239, %v240
    %v242 = vrcp.pop 8.0
    %v243 = vmul.f32 8.0, %v242
    %v244 = vsub.f32 1.0, %v243
    %v245 = vmul.f32 %v242, %v244
    %v246 = vadd.f32 %v242, %v245
    %vm247 = vweird.f32 %v242
    %v248 = vsel %vm247, %v242, %v246
    %v249 = vmul.f32 %v235, %v248
    %v250 = vmul.f32 %v241, %v248
    %v251 = vmul.f32 %v214, %v214
    %v252 = vmul.f32 %v227, %v227
    %v253 = vrot.slane %v251, 4
    %v254 = vadd.f32 %v251, %v253
    %v255 = vrot.slane %v254, 2
    %v256 = vadd.f32 %v254, %v255
    %v257 = vrot.slane %v256, 1
    %v258 = vadd.f32 %v256, %v257
    %v259 = vrot.slane %v252, 4
    %v260 = vadd.f32 %v252, %v259
    %v261 = vrot.slane %v260, 2
    %v262 = vadd.f32 %v260, %v261
    %v263 = vrot.slane %v262, 1
    %v264 = vadd.f32 %v262, %v263
    %v265 = vmul.f32 %v258, %v248
    %v266 = vmul.f32 %v264, %v248
    %v267 = vmul.f32 %v249, %v249
    %v268 = vmul.f32 %v250, %v250
    %v269 = vsub.f32 %v265, %v267
    %v270 = vsub.f32 %v266, %v268
    %v271 = vld [vmem:[%s4] sm:$0x3]
    %v272 = vadd.f32 %v269, 0.8
    %v273 = vadd.f32 %v270, 0.8
    %v274 = vrsqrt.pop %v272
    %v275 = vmul.f32 %v274, %v272
    %v276 = vmul.f32 %v275, %v274
    %v277 = vmul.f32 0.5, %v276
    %v278 = vsub.f32 1.5, %v277
    %v279 = vmul.f32 %v274, %v278
    %vm280 = vweird.f32 %v272
    %vm281 = vweird.f32 %v274
    %vm282 = vmor %vm280, %vm281
    %v283 = vsel %vm282, %v274, %v279
    %v284 = vrsqrt.pop %v273
    %v285 = vmul.f32 %v284, %v273
    %v286 = vmul.f32 %v285, %v284
    %v287 = vmul.f32 0.5, %v286
    %v288 = vsub.f32 1.5, %v287
    %v289 = vmul.f32 %v284, %v288
    %vm290 = vweird.f32 %v273
    %vm291 = vweird.f32 %v284
    %vm292 = vmor %vm290, %vm291
    %v293 = vsel %vm292, %v284, %v289
    %v296 = vrot.slane %v293, 7
    %vm297 = vcmask 1040384
    %v298 = vsel %vm297, %v283, %v296
    %v300 = vmul.f32 %v271, %v298
    %v301 = vsub.f32 %v214, %v249
    %v302 = vsub.f32 %v227, %v250
    %v304 = vperm.slane %v300, 0
    %v305 = vperm.slane %v300, 1
    %v308 = vmul.f32 %v301, %v304
    %v309 = vmul.f32 %v302, %v305
    %v310 = vld [vmem:[%s5] sm:$0x3]
    %v312 = vperm.slane %v310, 0
    %v313 = vperm.slane %v310, 1
    %v316 = vadd.f32 %v308, %v312
    %v317 = vadd.f32 %v309, %v313
    %vm318 = vcmp.gt.f32.partialorder %v316, 0.0
    %vm319 = vcmp.gt.f32.partialorder %v317, 0.0
    %v320 = vmul.f32 %v316, 0.2
    %v321 = vmul.f32 %v317, 0.2
    %v322 = vsel %vm318, %v316, %v320
    %v323 = vsel %vm319, %v317, %v321
    %v324 = vpack.c.bf16 %v322, %v322
    %v325 = vpack.c.bf16 %v323, %v323
    %v326 = vld [vmem:[%s6] sm:$0xff]
    %v327 = vld [vmem:[%s6 + $0x8] sm:$0xff]
    %v328 = vld [vmem:[%s6 + $0x10] sm:$0xff]
    %v329 = vld [vmem:[%s6 + $0x18] sm:$0xff]
    %v330 = vld [vmem:[%s6 + $0x20] sm:$0xff]
    %v331 = vld [vmem:[%s6 + $0x28] sm:$0xff]
    %v332 = vld [vmem:[%s6 + $0x30] sm:$0xff]
    %v333 = vld [vmem:[%s6 + $0x38] sm:$0xff]
    %v334 = vld [vmem:[%s6 + $0x40] sm:$0xff]
    %v335 = vld [vmem:[%s6 + $0x48] sm:$0xff]
    %v336 = vld [vmem:[%s6 + $0x50] sm:$0xff]
    %v337 = vld [vmem:[%s6 + $0x58] sm:$0xff]
    %v338 = vld [vmem:[%s6 + $0x60] sm:$0xff]
    %v339 = vld [vmem:[%s6 + $0x68] sm:$0xff]
    %v340 = vld [vmem:[%s6 + $0x70] sm:$0xff]
    %v341 = vld [vmem:[%s6 + $0x78] sm:$0xff]
    %v342 = vld [vmem:[%s6 + $0x80] sm:$0xff]
    %v343 = vld [vmem:[%s6 + $0x88] sm:$0xff]
    %v344 = vld [vmem:[%s6 + $0x90] sm:$0xff]
    %v345 = vld [vmem:[%s6 + $0x98] sm:$0xff]
    %v346 = vld [vmem:[%s6 + $0xa0] sm:$0xff]
    %v347 = vld [vmem:[%s6 + $0xa8] sm:$0xff]
    %v348 = vld [vmem:[%s6 + $0xb0] sm:$0xff]
    %v349 = vld [vmem:[%s6 + $0xb8] sm:$0xff]
    %v350 = vld [vmem:[%s6 + $0xc0] sm:$0xff]
    %v351 = vld [vmem:[%s6 + $0xc8] sm:$0xff]
    %v352 = vld [vmem:[%s6 + $0xd0] sm:$0xff]
    %v353 = vld [vmem:[%s6 + $0xd8] sm:$0xff]
    %v354 = vld [vmem:[%s6 + $0xe0] sm:$0xff]
    %v355 = vld [vmem:[%s6 + $0xe8] sm:$0xff]
    %v356 = vld [vmem:[%s6 + $0xf0] sm:$0xff]
    %v357 = vld [vmem:[%s6 + $0xf8] sm:$0xff]
    %v358 = vld [vmem:[%s6 + $0x100] sm:$0xff]
    %v359 = vld [vmem:[%s6 + $0x108] sm:$0xff]
    %v360 = vld [vmem:[%s6 + $0x110] sm:$0xff]
    %v361 = vld [vmem:[%s6 + $0x118] sm:$0xff]
    %v362 = vld [vmem:[%s6 + $0x120] sm:$0xff]
    %v363 = vld [vmem:[%s6 + $0x128] sm:$0xff]
    %v364 = vld [vmem:[%s6 + $0x130] sm:$0xff]
    %v365 = vld [vmem:[%s6 + $0x138] sm:$0xff]
    %v366 = vld [vmem:[%s6 + $0x140] sm:$0xff]
    %v367 = vld [vmem:[%s6 + $0x148] sm:$0xff]
    %v368 = vld [vmem:[%s6 + $0x150] sm:$0xff]
    %v369 = vld [vmem:[%s6 + $0x158] sm:$0xff]
    %v370 = vld [vmem:[%s6 + $0x160] sm:$0xff]
    %v371 = vld [vmem:[%s6 + $0x168] sm:$0xff]
    %v372 = vld [vmem:[%s6 + $0x170] sm:$0xff]
    %v373 = vld [vmem:[%s6 + $0x178] sm:$0xff]
    %v374 = vld [vmem:[%s6 + $0x180] sm:$0xff]
    %v375 = vld [vmem:[%s6 + $0x188] sm:$0xff]
    %v376 = vld [vmem:[%s6 + $0x190] sm:$0xff]
    %v377 = vld [vmem:[%s6 + $0x198] sm:$0xff]
    %v378 = vld [vmem:[%s6 + $0x1a0] sm:$0xff]
    %v379 = vld [vmem:[%s6 + $0x1a8] sm:$0xff]
    %v380 = vld [vmem:[%s6 + $0x1b0] sm:$0xff]
    %v381 = vld [vmem:[%s6 + $0x1b8] sm:$0xff]
    %v382 = vld [vmem:[%s6 + $0x1c0] sm:$0xff]
    %v383 = vld [vmem:[%s6 + $0x1c8] sm:$0xff]
    %v384 = vld [vmem:[%s6 + $0x1d0] sm:$0xff]
    %v385 = vld [vmem:[%s6 + $0x1d8] sm:$0xff]
    %v386 = vld [vmem:[%s6 + $0x1e0] sm:$0xff]
    %v387 = vld [vmem:[%s6 + $0x1e8] sm:$0xff]
    %v388 = vld [vmem:[%s6 + $0x1f0] sm:$0xff]
    %v389 = vld [vmem:[%s6 + $0x1f8] sm:$0xff]
    %v454 = vunpack.c.l.b16 %v326
    %v455 = vunpack.c.h.b16 %v326
    %v456 = vunpack.c.l.b16 %v327
    %v457 = vunpack.c.h.b16 %v327
    %v458 = vunpack.c.l.b16 %v328
    %v459 = vunpack.c.h.b16 %v328
    %v460 = vunpack.c.l.b16 %v329
    %v461 = vunpack.c.h.b16 %v329
    %v462 = vunpack.c.l.b16 %v330
    %v463 = vunpack.c.h.b16 %v330
    %v464 = vunpack.c.l.b16 %v331
    %v465 = vunpack.c.h.b16 %v331
    %v466 = vunpack.c.l.b16 %v332
    %v467 = vunpack.c.h.b16 %v332
    %v468 = vunpack.c.l.b16 %v333
    %v469 = vunpack.c.h.b16 %v333
    %v470 = vunpack.c.l.b16 %v334
    %v471 = vunpack.c.h.b16 %v334
    %v472 = vunpack.c.l.b16 %v335
    %v473 = vunpack.c.h.b16 %v335
    %v474 = vunpack.c.l.b16 %v336
    %v475 = vunpack.c.h.b16 %v336
    %v476 = vunpack.c.l.b16 %v337
    %v477 = vunpack.c.h.b16 %v337
    %v478 = vunpack.c.l.b16 %v338
    %v479 = vunpack.c.h.b16 %v338
    %v480 = vunpack.c.l.b16 %v339
    %v481 = vunpack.c.h.b16 %v339
    %v482 = vunpack.c.l.b16 %v340
    %v483 = vunpack.c.h.b16 %v340
    %v484 = vunpack.c.l.b16 %v341
    %v485 = vunpack.c.h.b16 %v341
    %v486 = vunpack.c.l.b16 %v342
    %v487 = vunpack.c.h.b16 %v342
    %v488 = vunpack.c.l.b16 %v343
    %v489 = vunpack.c.h.b16 %v343
    %v490 = vunpack.c.l.b16 %v344
    %v491 = vunpack.c.h.b16 %v344
    %v492 = vunpack.c.l.b16 %v345
    %v493 = vunpack.c.h.b16 %v345
    %v494 = vunpack.c.l.b16 %v346
    %v495 = vunpack.c.h.b16 %v346
    %v496 = vunpack.c.l.b16 %v347
    %v497 = vunpack.c.h.b16 %v347
    %v498 = vunpack.c.l.b16 %v348
    %v499 = vunpack.c.h.b16 %v348
    %v500 = vunpack.c.l.b16 %v349
    %v501 = vunpack.c.h.b16 %v349
    %v502 = vunpack.c.l.b16 %v350
    %v503 = vunpack.c.h.b16 %v350
    %v504 = vunpack.c.l.b16 %v351
    %v505 = vunpack.c.h.b16 %v351
    %v506 = vunpack.c.l.b16 %v352
    %v507 = vunpack.c.h.b16 %v352
    %v508 = vunpack.c.l.b16 %v353
    %v509 = vunpack.c.h.b16 %v353
    %v510 = vunpack.c.l.b16 %v354
    %v511 = vunpack.c.h.b16 %v354
    %v512 = vunpack.c.l.b16 %v355
    %v513 = vunpack.c.h.b16 %v355
    %v514 = vunpack.c.l.b16 %v356
    %v515 = vunpack.c.h.b16 %v356
    %v516 = vunpack.c.l.b16 %v357
    %v517 = vunpack.c.h.b16 %v357
    %v518 = vunpack.c.l.b16 %v358
    %v519 = vunpack.c.h.b16 %v358
    %v520 = vunpack.c.l.b16 %v359
    %v521 = vunpack.c.h.b16 %v359
    %v522 = vunpack.c.l.b16 %v360
    %v523 = vunpack.c.h.b16 %v360
    %v524 = vunpack.c.l.b16 %v361
    %v525 = vunpack.c.h.b16 %v361
    %v526 = vunpack.c.l.b16 %v362
    %v527 = vunpack.c.h.b16 %v362
    %v528 = vunpack.c.l.b16 %v363
    %v529 = vunpack.c.h.b16 %v363
    %v530 = vunpack.c.l.b16 %v364
    %v531 = vunpack.c.h.b16 %v364
    %v532 = vunpack.c.l.b16 %v365
    %v533 = vunpack.c.h.b16 %v365
    %v534 = vunpack.c.l.b16 %v366
    %v535 = vunpack.c.h.b16 %v366
    %v536 = vunpack.c.l.b16 %v367
    %v537 = vunpack.c.h.b16 %v367
    %v538 = vunpack.c.l.b16 %v368
    %v539 = vunpack.c.h.b16 %v368
    %v540 = vunpack.c.l.b16 %v369
    %v541 = vunpack.c.h.b16 %v369
    %v542 = vunpack.c.l.b16 %v370
    %v543 = vunpack.c.h.b16 %v370
    %v544 = vunpack.c.l.b16 %v371
    %v545 = vunpack.c.h.b16 %v371
    %v546 = vunpack.c.l.b16 %v372
    %v547 = vunpack.c.h.b16 %v372
    %v548 = vunpack.c.l.b16 %v373
    %v549 = vunpack.c.h.b16 %v373
    %v550 = vunpack.c.l.b16 %v374
    %v551 = vunpack.c.h.b16 %v374
    %v552 = vunpack.c.l.b16 %v375
    %v553 = vunpack.c.h.b16 %v375
    %v554 = vunpack.c.l.b16 %v376
    %v555 = vunpack.c.h.b16 %v376
    %v556 = vunpack.c.l.b16 %v377
    %v557 = vunpack.c.h.b16 %v377
    %v558 = vunpack.c.l.b16 %v378
    %v559 = vunpack.c.h.b16 %v378
    %v560 = vunpack.c.l.b16 %v379
    %v561 = vunpack.c.h.b16 %v379
    %v562 = vunpack.c.l.b16 %v380
    %v563 = vunpack.c.h.b16 %v380
    %v564 = vunpack.c.l.b16 %v381
    %v565 = vunpack.c.h.b16 %v381
    %v566 = vunpack.c.l.b16 %v382
    %v567 = vunpack.c.h.b16 %v382
    %v568 = vunpack.c.l.b16 %v383
    %v569 = vunpack.c.h.b16 %v383
    %v570 = vunpack.c.l.b16 %v384
    %v571 = vunpack.c.h.b16 %v384
    %v572 = vunpack.c.l.b16 %v385
    %v573 = vunpack.c.h.b16 %v385
    %v574 = vunpack.c.l.b16 %v386
    %v575 = vunpack.c.h.b16 %v386
    %v576 = vunpack.c.l.b16 %v387
    %v577 = vunpack.c.h.b16 %v387
    %v578 = vunpack.c.l.b16 %v388
    %v579 = vunpack.c.h.b16 %v388
    %v580 = vunpack.c.l.b16 %v389
    %v581 = vunpack.c.h.b16 %v389
    %v582 = vpack.c.b16 %v458, %v454
    %v583 = vpack.c.b16 %v459, %v455
    %v584 = vpack.c.b16 %v460, %v456
    %v585 = vpack.c.b16 %v461, %v457
    %v586 = vpack.c.b16 %v466, %v462
    %v587 = vpack.c.b16 %v467, %v463
    %v588 = vpack.c.b16 %v468, %v464
    %v589 = vpack.c.b16 %v469, %v465
    %v590 = vpack.c.b16 %v474, %v470
    %v591 = vpack.c.b16 %v475, %v471
    %v592 = vpack.c.b16 %v476, %v472
    %v593 = vpack.c.b16 %v477, %v473
    %v594 = vpack.c.b16 %v482, %v478
    %v595 = vpack.c.b16 %v483, %v479
    %v596 = vpack.c.b16 %v484, %v480
    %v597 = vpack.c.b16 %v485, %v481
    %v598 = vpack.c.b16 %v490, %v486
    %v599 = vpack.c.b16 %v491, %v487
    %v600 = vpack.c.b16 %v492, %v488
    %v601 = vpack.c.b16 %v493, %v489
    %v602 = vpack.c.b16 %v498, %v494
    %v603 = vpack.c.b16 %v499, %v495
    %v604 = vpack.c.b16 %v500, %v496
    %v605 = vpack.c.b16 %v501, %v497
    %v606 = vpack.c.b16 %v506, %v502
    %v607 = vpack.c.b16 %v507, %v503
    %v608 = vpack.c.b16 %v508, %v504
    %v609 = vpack.c.b16 %v509, %v505
    %v610 = vpack.c.b16 %v514, %v510
    %v611 = vpack.c.b16 %v515, %v511
    %v612 = vpack.c.b16 %v516, %v512
    %v613 = vpack.c.b16 %v517, %v513
    %v614 = vpack.c.b16 %v522, %v518
    %v615 = vpack.c.b16 %v523, %v519
    %v616 = vpack.c.b16 %v524, %v520
    %v617 = vpack.c.b16 %v525, %v521
    %v618 = vpack.c.b16 %v530, %v526
    %v619 = vpack.c.b16 %v531, %v527
    %v620 = vpack.c.b16 %v532, %v528
    %v621 = vpack.c.b16 %v533, %v529
    %v622 = vpack.c.b16 %v538, %v534
    %v623 = vpack.c.b16 %v539, %v535
    %v624 = vpack.c.b16 %v540, %v536
    %v625 = vpack.c.b16 %v541, %v537
    %v626 = vpack.c.b16 %v546, %v542
    %v627 = vpack.c.b16 %v547, %v543
    %v628 = vpack.c.b16 %v548, %v544
    %v629 = vpack.c.b16 %v549, %v545
    %v630 = vpack.c.b16 %v554, %v550
    %v631 = vpack.c.b16 %v555, %v551
    %v632 = vpack.c.b16 %v556, %v552
    %v633 = vpack.c.b16 %v557, %v553
    %v634 = vpack.c.b16 %v562, %v558
    %v635 = vpack.c.b16 %v563, %v559
    %v636 = vpack.c.b16 %v564, %v560
    %v637 = vpack.c.b16 %v565, %v561
    %v638 = vpack.c.b16 %v570, %v566
    %v639 = vpack.c.b16 %v571, %v567
    %v640 = vpack.c.b16 %v572, %v568
    %v641 = vpack.c.b16 %v573, %v569
    %v642 = vpack.c.b16 %v578, %v574
    %v643 = vpack.c.b16 %v579, %v575
    %v644 = vpack.c.b16 %v580, %v576
    %v645 = vpack.c.b16 %v581, %v577
    %710 = vmatpush.bf16.msra.mxu0 %v610
    %711 = vmatpush.bf16.msra.mxu0 %v606
    %712 = vmatpush.bf16.msra.mxu0 %v602
    %713 = vmatpush.bf16.msra.mxu0 %v598
    %714 = vmatpush.bf16.msra.mxu0 %v594
    %715 = vmatpush.bf16.msra.mxu0 %v590
    %716 = vmatpush.bf16.msra.mxu0 %v586
    %717 = vmatpush.bf16.msra.mxu0 %v582
    %718 = vmatmul.bf16.gmra.mxu0 %v324
    %v719 = vpop.f32.mrf.mxu0
    %v720 = vadd.f32 0.0, %v719
    %v721 = vpop.f32.mrf.mxu0
    %722 = vdwg.mxu0
    %723 = vmatpush.bf16.msra.mxu0 %v642
    %724 = vmatpush.bf16.msra.mxu0 %v638
    %725 = vmatpush.bf16.msra.mxu0 %v634
    %726 = vmatpush.bf16.msra.mxu0 %v630
    %727 = vmatpush.bf16.msra.mxu0 %v626
    %728 = vmatpush.bf16.msra.mxu0 %v622
    %729 = vmatpush.bf16.msra.mxu0 %v618
    %730 = vmatpush.bf16.msra.mxu0 %v614
    %731 = vmatmul.bf16.gmra.mxu0 %v325
    %v732 = vpop.f32.mrf.mxu0
    %v733 = vadd.f32 %v720, %v732
    %v734 = vpop.f32.mrf.mxu0
    %735 = vdwg.mxu0
    %736 = vmatpush.bf16.msra.mxu0 %v611
    %737 = vmatpush.bf16.msra.mxu0 %v607
    %738 = vmatpush.bf16.msra.mxu0 %v603
    %739 = vmatpush.bf16.msra.mxu0 %v599
    %740 = vmatpush.bf16.msra.mxu0 %v595
    %741 = vmatpush.bf16.msra.mxu0 %v591
    %742 = vmatpush.bf16.msra.mxu0 %v587
    %743 = vmatpush.bf16.msra.mxu0 %v583
    %744 = vmatmul.bf16.gmra.mxu0 %v324
    %v745 = vpop.f32.mrf.mxu0
    %v746 = vadd.f32 0.0, %v745
    %v747 = vpop.f32.mrf.mxu0
    %748 = vdwg.mxu0
    %749 = vmatpush.bf16.msra.mxu0 %v643
    %750 = vmatpush.bf16.msra.mxu0 %v639
    %751 = vmatpush.bf16.msra.mxu0 %v635
    %752 = vmatpush.bf16.msra.mxu0 %v631
    %753 = vmatpush.bf16.msra.mxu0 %v627
    %754 = vmatpush.bf16.msra.mxu0 %v623
    %755 = vmatpush.bf16.msra.mxu0 %v619
    %756 = vmatpush.bf16.msra.mxu0 %v615
    %757 = vmatmul.bf16.gmra.mxu0 %v325
    %v758 = vpop.f32.mrf.mxu0
    %v759 = vadd.f32 %v746, %v758
    %v760 = vpop.f32.mrf.mxu0
    %761 = vdwg.mxu0
    %762 = vmatpush.bf16.msra.mxu0 %v612
    %763 = vmatpush.bf16.msra.mxu0 %v608
    %764 = vmatpush.bf16.msra.mxu0 %v604
    %765 = vmatpush.bf16.msra.mxu0 %v600
    %766 = vmatpush.bf16.msra.mxu0 %v596
    %767 = vmatpush.bf16.msra.mxu0 %v592
    %768 = vmatpush.bf16.msra.mxu0 %v588
    %769 = vmatpush.bf16.msra.mxu0 %v584
    %770 = vmatmul.bf16.gmra.mxu0 %v324
    %v771 = vpop.f32.mrf.mxu0
    %v772 = vadd.f32 0.0, %v771
    %v773 = vpop.f32.mrf.mxu0
    %774 = vdwg.mxu0
    %775 = vmatpush.bf16.msra.mxu0 %v644
    %776 = vmatpush.bf16.msra.mxu0 %v640
    %777 = vmatpush.bf16.msra.mxu0 %v636
    %778 = vmatpush.bf16.msra.mxu0 %v632
    %779 = vmatpush.bf16.msra.mxu0 %v628
    %780 = vmatpush.bf16.msra.mxu0 %v624
    %781 = vmatpush.bf16.msra.mxu0 %v620
    %782 = vmatpush.bf16.msra.mxu0 %v616
    %783 = vmatmul.bf16.gmra.mxu0 %v325
    %v784 = vpop.f32.mrf.mxu0
    %v785 = vadd.f32 %v772, %v784
    %v786 = vpop.f32.mrf.mxu0
    %787 = vdwg.mxu0
    %788 = vmatpush.bf16.msra.mxu0 %v613
    %789 = vmatpush.bf16.msra.mxu0 %v609
    %790 = vmatpush.bf16.msra.mxu0 %v605
    %791 = vmatpush.bf16.msra.mxu0 %v601
    %792 = vmatpush.bf16.msra.mxu0 %v597
    %793 = vmatpush.bf16.msra.mxu0 %v593
    %794 = vmatpush.bf16.msra.mxu0 %v589
    %795 = vmatpush.bf16.msra.mxu0 %v585
    %796 = vmatmul.bf16.gmra.mxu0 %v324
    %v797 = vpop.f32.mrf.mxu0
    %v798 = vadd.f32 0.0, %v797
    %v799 = vpop.f32.mrf.mxu0
    %800 = vdwg.mxu0
    %801 = vmatpush.bf16.msra.mxu0 %v645
    %802 = vmatpush.bf16.msra.mxu0 %v641
    %803 = vmatpush.bf16.msra.mxu0 %v637
    %804 = vmatpush.bf16.msra.mxu0 %v633
    %805 = vmatpush.bf16.msra.mxu0 %v629
    %806 = vmatpush.bf16.msra.mxu0 %v625
    %807 = vmatpush.bf16.msra.mxu0 %v621
    %808 = vmatpush.bf16.msra.mxu0 %v617
    %809 = vmatmul.bf16.gmra.mxu0 %v325
    %v810 = vpop.f32.mrf.mxu0
    %v811 = vadd.f32 %v798, %v810
    %v812 = vpop.f32.mrf.mxu0
    %813 = vdwg.mxu0
    %v814 = vrot.slane %v733, 4
    %v815 = vadd.f32 %v733, %v814
    %v816 = vrot.slane %v815, 2
    %v817 = vadd.f32 %v815, %v816
    %v818 = vrot.slane %v817, 1
    %v819 = vadd.f32 %v817, %v818
    %v820 = vrot.slane %v759, 4
    %v821 = vadd.f32 %v759, %v820
    %v822 = vrot.slane %v821, 2
    %v823 = vadd.f32 %v821, %v822
    %v824 = vrot.slane %v823, 1
    %v825 = vadd.f32 %v823, %v824
    %v826 = vrot.slane %v785, 4
    %v827 = vadd.f32 %v785, %v826
    %v828 = vrot.slane %v827, 2
    %v829 = vadd.f32 %v827, %v828
    %v830 = vrot.slane %v829, 1
    %v831 = vadd.f32 %v829, %v830
    %v832 = vrot.slane %v811, 4
    %v833 = vadd.f32 %v811, %v832
    %v834 = vrot.slane %v833, 2
    %v835 = vadd.f32 %v833, %v834
    %v836 = vrot.slane %v835, 1
    %v837 = vadd.f32 %v835, %v836
    %v838 = vmul.f32 %v819, %v248
    %v839 = vmul.f32 %v825, %v248
    %v840 = vmul.f32 %v831, %v248
    %v841 = vmul.f32 %v837, %v248
    %v842 = vmul.f32 %v733, %v733
    %v843 = vmul.f32 %v759, %v759
    %v844 = vmul.f32 %v785, %v785
    %v845 = vmul.f32 %v811, %v811
    %v846 = vrot.slane %v842, 4
    %v847 = vadd.f32 %v842, %v846
    %v848 = vrot.slane %v847, 2
    %v849 = vadd.f32 %v847, %v848
    %v850 = vrot.slane %v849, 1
    %v851 = vadd.f32 %v849, %v850
    %v852 = vrot.slane %v843, 4
    %v853 = vadd.f32 %v843, %v852
    %v854 = vrot.slane %v853, 2
    %v855 = vadd.f32 %v853, %v854
    %v856 = vrot.slane %v855, 1
    %v857 = vadd.f32 %v855, %v856
    %v858 = vrot.slane %v844, 4
    %v859 = vadd.f32 %v844, %v858
    %v860 = vrot.slane %v859, 2
    %v861 = vadd.f32 %v859, %v860
    %v862 = vrot.slane %v861, 1
    %v863 = vadd.f32 %v861, %v862
    %v864 = vrot.slane %v845, 4
    %v865 = vadd.f32 %v845, %v864
    %v866 = vrot.slane %v865, 2
    %v867 = vadd.f32 %v865, %v866
    %v868 = vrot.slane %v867, 1
    %v869 = vadd.f32 %v867, %v868
    %v870 = vmul.f32 %v851, %v248
    %v871 = vmul.f32 %v857, %v248
    %v872 = vmul.f32 %v863, %v248
    %v873 = vmul.f32 %v869, %v248
    %v874 = vmul.f32 %v838, %v838
    %v875 = vmul.f32 %v839, %v839
    %v876 = vmul.f32 %v840, %v840
    %v877 = vmul.f32 %v841, %v841
    %v878 = vsub.f32 %v870, %v874
    %v879 = vsub.f32 %v871, %v875
    %v880 = vsub.f32 %v872, %v876
    %v881 = vsub.f32 %v873, %v877
    %v882 = vld [vmem:[%s7] sm:$0xf]
    %v883 = vadd.f32 %v878, 0.8
    %v884 = vadd.f32 %v879, 0.8
    %v885 = vadd.f32 %v880, 0.8
    %v886 = vadd.f32 %v881, 0.8
    %v887 = vrsqrt.pop %v883
    %v888 = vmul.f32 %v887, %v883
    %v889 = vmul.f32 %v888, %v887
    %v890 = vmul.f32 0.5, %v889
    %v891 = vsub.f32 1.5, %v890
    %v892 = vmul.f32 %v887, %v891
    %vm893 = vweird.f32 %v883
    %vm894 = vweird.f32 %v887
    %vm895 = vmor %vm893, %vm894
    %v896 = vsel %vm895, %v887, %v892
    %v897 = vrsqrt.pop %v884
    %v898 = vmul.f32 %v897, %v884
    %v899 = vmul.f32 %v898, %v897
    %v900 = vmul.f32 0.5, %v899
    %v901 = vsub.f32 1.5, %v900
    %v902 = vmul.f32 %v897, %v901
    %vm903 = vweird.f32 %v884
    %vm904 = vweird.f32 %v897
    %vm905 = vmor %vm903, %vm904
    %v906 = vsel %vm905, %v897, %v902
    %v907 = vrsqrt.pop %v885
    %v908 = vmul.f32 %v907, %v885
    %v909 = vmul.f32 %v908, %v907
    %v910 = vmul.f32 0.5, %v909
    %v911 = vsub.f32 1.5, %v910
    %v912 = vmul.f32 %v907, %v911
    %vm913 = vweird.f32 %v885
    %vm914 = vweird.f32 %v907
    %vm915 = vmor %vm913, %vm914
    %v916 = vsel %vm915, %v907, %v912
    %v917 = vrsqrt.pop %v886
    %v918 = vmul.f32 %v917, %v886
    %v919 = vmul.f32 %v918, %v917
    %v920 = vmul.f32 0.5, %v919
    %v921 = vsub.f32 1.5, %v920
    %v922 = vmul.f32 %v917, %v921
    %vm923 = vweird.f32 %v886
    %vm924 = vweird.f32 %v917
    %vm925 = vmor %vm923, %vm924
    %v926 = vsel %vm925, %v917, %v922
    %v931 = vrot.slane %v906, 7
    %v932 = vrot.slane %v916, 6
    %v933 = vrot.slane %v926, 5
    %v934 = vsel %vm297, %v896, %v931
    %vm935 = vcmask 1042434
    %v936 = vsel %vm935, %v932, %v933
    %vm937 = vcmask 1041408
    %v938 = vsel %vm937, %v934, %v936
    %v940 = vmul.f32 %v882, %v938
    %v941 = vsub.f32 %v733, %v838
    %v942 = vsub.f32 %v759, %v839
    %v943 = vsub.f32 %v785, %v840
    %v944 = vsub.f32 %v811, %v841
    %v946 = vperm.slane %v940, 0
    %v947 = vperm.slane %v940, 1
    %v948 = vperm.slane %v940, 2
    %v949 = vperm.slane %v940, 3
    %v954 = vmul.f32 %v941, %v946
    %v955 = vmul.f32 %v942, %v947
    %v956 = vmul.f32 %v943, %v948
    %v957 = vmul.f32 %v944, %v949
    %v958 = vld [vmem:[%s8] sm:$0xf]
    %v960 = vperm.slane %v958, 0
    %v961 = vperm.slane %v958, 1
    %v962 = vperm.slane %v958, 2
    %v963 = vperm.slane %v958, 3
    %v968 = vadd.f32 %v954, %v960
    %v969 = vadd.f32 %v955, %v961
    %v970 = vadd.f32 %v956, %v962
    %v971 = vadd.f32 %v957, %v963
    %vm972 = vcmp.gt.f32.partialorder %v968, 0.0
    %vm973 = vcmp.gt.f32.partialorder %v969, 0.0
    %vm974 = vcmp.gt.f32.partialorder %v970, 0.0
    %vm975 = vcmp.gt.f32.partialorder %v971, 0.0
    %v976 = vmul.f32 %v968, 0.2
    %v977 = vmul.f32 %v969, 0.2
    %v978 = vmul.f32 %v970, 0.2
    %v979 = vmul.f32 %v971, 0.2
    %v980 = vsel %vm972, %v968, %v976
    %v981 = vsel %vm973, %v969, %v977
    %v982 = vsel %vm974, %v970, %v978
    %v983 = vsel %vm975, %v971, %v979
    %v984 = vpack.c.bf16 %v980, %v980
    %v985 = vpack.c.bf16 %v981, %v981
    %v986 = vpack.c.bf16 %v982, %v982
    %v987 = vpack.c.bf16 %v983, %v983
    %v988 = vld [vmem:[#allocation2] sm:$0xff]
    %v989 = vld [vmem:[#allocation2 + $0x8] sm:$0xff]
    %v990 = vld [vmem:[#allocation2 + $0x10] sm:$0xff]
    %v991 = vld [vmem:[#allocation2 + $0x18] sm:$0xff]
    %v992 = vld [vmem:[#allocation2 + $0x20] sm:$0xff]
    %v993 = vld [vmem:[#allocation2 + $0x28] sm:$0xff]
    %v994 = vld [vmem:[#allocation2 + $0x30] sm:$0xff]
    %v995 = vld [vmem:[#allocation2 + $0x38] sm:$0xff]
    %v996 = vld [vmem:[#allocation2 + $0x40] sm:$0xff]
    %v997 = vld [vmem:[#allocation2 + $0x48] sm:$0xff]
    %v998 = vld [vmem:[#allocation2 + $0x50] sm:$0xff]
    %v999 = vld [vmem:[#allocation2 + $0x58] sm:$0xff]
    %v1000 = vld [vmem:[#allocation2 + $0x60] sm:$0xff]
    %v1001 = vld [vmem:[#allocation2 + $0x68] sm:$0xff]
    %v1002 = vld [vmem:[#allocation2 + $0x70] sm:$0xff]
    %v1003 = vld [vmem:[#allocation2 + $0x78] sm:$0xff]
    %v1004 = vld [vmem:[#allocation2 + $0x80] sm:$0xff]
    %v1005 = vld [vmem:[#allocation2 + $0x88] sm:$0xff]
    %v1006 = vld [vmem:[#allocation2 + $0x90] sm:$0xff]
    %v1007 = vld [vmem:[#allocation2 + $0x98] sm:$0xff]
    %v1008 = vld [vmem:[#allocation2 + $0xa0] sm:$0xff]
    %v1009 = vld [vmem:[#allocation2 + $0xa8] sm:$0xff]
    %v1010 = vld [vmem:[#allocation2 + $0xb0] sm:$0xff]
    %v1011 = vld [vmem:[#allocation2 + $0xb8] sm:$0xff]
    %v1012 = vld [vmem:[#allocation2 + $0xc0] sm:$0xff]
    %v1013 = vld [vmem:[#allocation2 + $0xc8] sm:$0xff]
    %v1014 = vld [vmem:[#allocation2 + $0xd0] sm:$0xff]
    %v1015 = vld [vmem:[#allocation2 + $0xd8] sm:$0xff]
    %v1016 = vld [vmem:[#allocation2 + $0xe0] sm:$0xff]
    %v1017 = vld [vmem:[#allocation2 + $0xe8] sm:$0xff]
    %v1018 = vld [vmem:[#allocation2 + $0xf0] sm:$0xff]
    %v1019 = vld [vmem:[#allocation2 + $0xf8] sm:$0xff]
    %v1020 = vld [vmem:[#allocation2 + $0x100] sm:$0xff]
    %v1021 = vld [vmem:[#allocation2 + $0x108] sm:$0xff]
    %v1022 = vld [vmem:[#allocation2 + $0x110] sm:$0xff]
    %v1023 = vld [vmem:[#allocation2 + $0x118] sm:$0xff]
    %v1024 = vld [vmem:[#allocation2 + $0x120] sm:$0xff]
    %v1025 = vld [vmem:[#allocation2 + $0x128] sm:$0xff]
    %v1026 = vld [vmem:[#allocation2 + $0x130] sm:$0xff]
    %v1027 = vld [vmem:[#allocation2 + $0x138] sm:$0xff]
    %v1028 = vld [vmem:[#allocation2 + $0x140] sm:$0xff]
    %v1029 = vld [vmem:[#allocation2 + $0x148] sm:$0xff]
    %v1030 = vld [vmem:[#allocation2 + $0x150] sm:$0xff]
    %v1031 = vld [vmem:[#allocation2 + $0x158] sm:$0xff]
    %v1032 = vld [vmem:[#allocation2 + $0x160] sm:$0xff]
    %v1033 = vld [vmem:[#allocation2 + $0x168] sm:$0xff]
    %v1034 = vld [vmem:[#allocation2 + $0x170] sm:$0xff]
    %v1035 = vld [vmem:[#allocation2 + $0x178] sm:$0xff]
    %v1036 = vld [vmem:[#allocation2 + $0x180] sm:$0xff]
    %v1037 = vld [vmem:[#allocation2 + $0x188] sm:$0xff]
    %v1038 = vld [vmem:[#allocation2 + $0x190] sm:$0xff]
    %v1039 = vld [vmem:[#allocation2 + $0x198] sm:$0xff]
    %v1040 = vld [vmem:[#allocation2 + $0x1a0] sm:$0xff]
    %v1041 = vld [vmem:[#allocation2 + $0x1a8] sm:$0xff]
    %v1042 = vld [vmem:[#allocation2 + $0x1b0] sm:$0xff]
    %v1043 = vld [vmem:[#allocation2 + $0x1b8] sm:$0xff]
    %v1044 = vld [vmem:[#allocation2 + $0x1c0] sm:$0xff]
    %v1045 = vld [vmem:[#allocation2 + $0x1c8] sm:$0xff]
    %v1046 = vld [vmem:[#allocation2 + $0x1d0] sm:$0xff]
    %v1047 = vld [vmem:[#allocation2 + $0x1d8] sm:$0xff]
    %v1048 = vld [vmem:[#allocation2 + $0x1e0] sm:$0xff]
    %v1049 = vld [vmem:[#allocation2 + $0x1e8] sm:$0xff]
    %v1050 = vld [vmem:[#allocation2 + $0x1f0] sm:$0xff]
    %v1051 = vld [vmem:[#allocation2 + $0x1f8] sm:$0xff]
    %v1052 = vld [vmem:[#allocation2 + $0x200] sm:$0xff]
    %v1053 = vld [vmem:[#allocation2 + $0x208] sm:$0xff]
    %v1054 = vld [vmem:[#allocation2 + $0x210] sm:$0xff]
    %v1055 = vld [vmem:[#allocation2 + $0x218] sm:$0xff]
    %v1056 = vld [vmem:[#allocation2 + $0x220] sm:$0xff]
    %v1057 = vld [vmem:[#allocation2 + $0x228] sm:$0xff]
    %v1058 = vld [vmem:[#allocation2 + $0x230] sm:$0xff]
    %v1059 = vld [vmem:[#allocation2 + $0x238] sm:$0xff]
    %v1060 = vld [vmem:[#allocation2 + $0x240] sm:$0xff]
    %v1061 = vld [vmem:[#allocation2 + $0x248] sm:$0xff]
    %v1062 = vld [vmem:[#allocation2 + $0x250] sm:$0xff]
    %v1063 = vld [vmem:[#allocation2 + $0x258] sm:$0xff]
    %v1064 = vld [vmem:[#allocation2 + $0x260] sm:$0xff]
    %v1065 = vld [vmem:[#allocation2 + $0x268] sm:$0xff]
    %v1066 = vld [vmem:[#allocation2 + $0x270] sm:$0xff]
    %v1067 = vld [vmem:[#allocation2 + $0x278] sm:$0xff]
    %v1068 = vld [vmem:[#allocation2 + $0x280] sm:$0xff]
    %v1069 = vld [vmem:[#allocation2 + $0x288] sm:$0xff]
    %v1070 = vld [vmem:[#allocation2 + $0x290] sm:$0xff]
    %v1071 = vld [vmem:[#allocation2 + $0x298] sm:$0xff]
    %v1072 = vld [vmem:[#allocation2 + $0x2a0] sm:$0xff]
    %v1073 = vld [vmem:[#allocation2 + $0x2a8] sm:$0xff]
    %v1074 = vld [vmem:[#allocation2 + $0x2b0] sm:$0xff]
    %v1075 = vld [vmem:[#allocation2 + $0x2b8] sm:$0xff]
    %v1076 = vld [vmem:[#allocation2 + $0x2c0] sm:$0xff]
    %v1077 = vld [vmem:[#allocation2 + $0x2c8] sm:$0xff]
    %v1078 = vld [vmem:[#allocation2 + $0x2d0] sm:$0xff]
    %v1079 = vld [vmem:[#allocation2 + $0x2d8] sm:$0xff]
    %v1080 = vld [vmem:[#allocation2 + $0x2e0] sm:$0xff]
    %v1081 = vld [vmem:[#allocation2 + $0x2e8] sm:$0xff]
    %v1082 = vld [vmem:[#allocation2 + $0x2f0] sm:$0xff]
    %v1083 = vld [vmem:[#allocation2 + $0x2f8] sm:$0xff]
    %v1084 = vld [vmem:[#allocation2 + $0x300] sm:$0xff]
    %v1085 = vld [vmem:[#allocation2 + $0x308] sm:$0xff]
    %v1086 = vld [vmem:[#allocation2 + $0x310] sm:$0xff]
    %v1087 = vld [vmem:[#allocation2 + $0x318] sm:$0xff]
    %v1088 = vld [vmem:[#allocation2 + $0x320] sm:$0xff]
    %v1089 = vld [vmem:[#allocation2 + $0x328] sm:$0xff]
    %v1090 = vld [vmem:[#allocation2 + $0x330] sm:$0xff]
    %v1091 = vld [vmem:[#allocation2 + $0x338] sm:$0xff]
    %v1092 = vld [vmem:[#allocation2 + $0x340] sm:$0xff]
    %v1093 = vld [vmem:[#allocation2 + $0x348] sm:$0xff]
    %v1094 = vld [vmem:[#allocation2 + $0x350] sm:$0xff]
    %v1095 = vld [vmem:[#allocation2 + $0x358] sm:$0xff]
    %v1096 = vld [vmem:[#allocation2 + $0x360] sm:$0xff]
    %v1097 = vld [vmem:[#allocation2 + $0x368] sm:$0xff]
    %v1098 = vld [vmem:[#allocation2 + $0x370] sm:$0xff]
    %v1099 = vld [vmem:[#allocation2 + $0x378] sm:$0xff]
    %v1100 = vld [vmem:[#allocation2 + $0x380] sm:$0xff]
    %v1101 = vld [vmem:[#allocation2 + $0x388] sm:$0xff]
    %v1102 = vld [vmem:[#allocation2 + $0x390] sm:$0xff]
    %v1103 = vld [vmem:[#allocation2 + $0x398] sm:$0xff]
    %v1104 = vld [vmem:[#allocation2 + $0x3a0] sm:$0xff]
    %v1105 = vld [vmem:[#allocation2 + $0x3a8] sm:$0xff]
    %v1106 = vld [vmem:[#allocation2 + $0x3b0] sm:$0xff]
    %v1107 = vld [vmem:[#allocation2 + $0x3b8] sm:$0xff]
    %v1108 = vld [vmem:[#allocation2 + $0x3c0] sm:$0xff]
    %v1109 = vld [vmem:[#allocation2 + $0x3c8] sm:$0xff]
    %v1110 = vld [vmem:[#allocation2 + $0x3d0] sm:$0xff]
    %v1111 = vld [vmem:[#allocation2 + $0x3d8] sm:$0xff]
    %v1112 = vld [vmem:[#allocation2 + $0x3e0] sm:$0xff]
    %v1113 = vld [vmem:[#allocation2 + $0x3e8] sm:$0xff]
    %v1114 = vld [vmem:[#allocation2 + $0x3f0] sm:$0xff]
    %v1115 = vld [vmem:[#allocation2 + $0x3f8] sm:$0xff]
    %v1116 = vld [vmem:[#allocation2 + $0x400] sm:$0xff]
    %v1117 = vld [vmem:[#allocation2 + $0x408] sm:$0xff]
    %v1118 = vld [vmem:[#allocation2 + $0x410] sm:$0xff]
    %v1119 = vld [vmem:[#allocation2 + $0x418] sm:$0xff]
    %v1120 = vld [vmem:[#allocation2 + $0x420] sm:$0xff]
    %v1121 = vld [vmem:[#allocation2 + $0x428] sm:$0xff]
    %v1122 = vld [vmem:[#allocation2 + $0x430] sm:$0xff]
    %v1123 = vld [vmem:[#allocation2 + $0x438] sm:$0xff]
    %v1124 = vld [vmem:[#allocation2 + $0x440] sm:$0xff]
    %v1125 = vld [vmem:[#allocation2 + $0x448] sm:$0xff]
    %v1126 = vld [vmem:[#allocation2 + $0x450] sm:$0xff]
    %v1127 = vld [vmem:[#allocation2 + $0x458] sm:$0xff]
    %v1128 = vld [vmem:[#allocation2 + $0x460] sm:$0xff]
    %v1129 = vld [vmem:[#allocation2 + $0x468] sm:$0xff]
    %v1130 = vld [vmem:[#allocation2 + $0x470] sm:$0xff]
    %v1131 = vld [vmem:[#allocation2 + $0x478] sm:$0xff]
    %v1132 = vld [vmem:[#allocation2 + $0x480] sm:$0xff]
    %v1133 = vld [vmem:[#allocation2 + $0x488] sm:$0xff]
    %v1134 = vld [vmem:[#allocation2 + $0x490] sm:$0xff]
    %v1135 = vld [vmem:[#allocation2 + $0x498] sm:$0xff]
    %v1136 = vld [vmem:[#allocation2 + $0x4a0] sm:$0xff]
    %v1137 = vld [vmem:[#allocation2 + $0x4a8] sm:$0xff]
    %v1138 = vld [vmem:[#allocation2 + $0x4b0] sm:$0xff]
    %v1139 = vld [vmem:[#allocation2 + $0x4b8] sm:$0xff]
    %v1140 = vld [vmem:[#allocation2 + $0x4c0] sm:$0xff]
    %v1141 = vld [vmem:[#allocation2 + $0x4c8] sm:$0xff]
    %v1142 = vld [vmem:[#allocation2 + $0x4d0] sm:$0xff]
    %v1143 = vld [vmem:[#allocation2 + $0x4d8] sm:$0xff]
    %v1144 = vld [vmem:[#allocation2 + $0x4e0] sm:$0xff]
    %v1145 = vld [vmem:[#allocation2 + $0x4e8] sm:$0xff]
    %v1146 = vld [vmem:[#allocation2 + $0x4f0] sm:$0xff]
    %v1147 = vld [vmem:[#allocation2 + $0x4f8] sm:$0xff]
    %v1148 = vld [vmem:[#allocation2 + $0x500] sm:$0xff]
    %v1149 = vld [vmem:[#allocation2 + $0x508] sm:$0xff]
    %v1150 = vld [vmem:[#allocation2 + $0x510] sm:$0xff]
    %v1151 = vld [vmem:[#allocation2 + $0x518] sm:$0xff]
    %v1152 = vld [vmem:[#allocation2 + $0x520] sm:$0xff]
    %v1153 = vld [vmem:[#allocation2 + $0x528] sm:$0xff]
    %v1154 = vld [vmem:[#allocation2 + $0x530] sm:$0xff]
    %v1155 = vld [vmem:[#allocation2 + $0x538] sm:$0xff]
    %v1156 = vld [vmem:[#allocation2 + $0x540] sm:$0xff]
    %v1157 = vld [vmem:[#allocation2 + $0x548] sm:$0xff]
    %v1158 = vld [vmem:[#allocation2 + $0x550] sm:$0xff]
    %v1159 = vld [vmem:[#allocation2 + $0x558] sm:$0xff]
    %v1160 = vld [vmem:[#allocation2 + $0x560] sm:$0xff]
    %v1161 = vld [vmem:[#allocation2 + $0x568] sm:$0xff]
    %v1162 = vld [vmem:[#allocation2 + $0x570] sm:$0xff]
    %v1163 = vld [vmem:[#allocation2 + $0x578] sm:$0xff]
    %v1164 = vld [vmem:[#allocation2 + $0x580] sm:$0xff]
    %v1165 = vld [vmem:[#allocation2 + $0x588] sm:$0xff]
    %v1166 = vld [vmem:[#allocation2 + $0x590] sm:$0xff]
    %v1167 = vld [vmem:[#allocation2 + $0x598] sm:$0xff]
    %v1168 = vld [vmem:[#allocation2 + $0x5a0] sm:$0xff]
    %v1169 = vld [vmem:[#allocation2 + $0x5a8] sm:$0xff]
    %v1170 = vld [vmem:[#allocation2 + $0x5b0] sm:$0xff]
    %v1171 = vld [vmem:[#allocation2 + $0x5b8] sm:$0xff]
    %v1172 = vld [vmem:[#allocation2 + $0x5c0] sm:$0xff]
    %v1173 = vld [vmem:[#allocation2 + $0x5c8] sm:$0xff]
    %v1174 = vld [vmem:[#allocation2 + $0x5d0] sm:$0xff]
    %v1175 = vld [vmem:[#allocation2 + $0x5d8] sm:$0xff]
    %v1176 = vld [vmem:[#allocation2 + $0x5e0] sm:$0xff]
    %v1177 = vld [vmem:[#allocation2 + $0x5e8] sm:$0xff]
    %v1178 = vld [vmem:[#allocation2 + $0x5f0] sm:$0xff]
    %v1179 = vld [vmem:[#allocation2 + $0x5f8] sm:$0xff]
    %v1180 = vld [vmem:[#allocation2 + $0x600] sm:$0xff]
    %v1181 = vld [vmem:[#allocation2 + $0x608] sm:$0xff]
    %v1182 = vld [vmem:[#allocation2 + $0x610] sm:$0xff]
    %v1183 = vld [vmem:[#allocation2 + $0x618] sm:$0xff]
    %v1184 = vld [vmem:[#allocation2 + $0x620] sm:$0xff]
    %v1185 = vld [vmem:[#allocation2 + $0x628] sm:$0xff]
    %v1186 = vld [vmem:[#allocation2 + $0x630] sm:$0xff]
    %v1187 = vld [vmem:[#allocation2 + $0x638] sm:$0xff]
    %v1188 = vld [vmem:[#allocation2 + $0x640] sm:$0xff]
    %v1189 = vld [vmem:[#allocation2 + $0x648] sm:$0xff]
    %v1190 = vld [vmem:[#allocation2 + $0x650] sm:$0xff]
    %v1191 = vld [vmem:[#allocation2 + $0x658] sm:$0xff]
    %v1192 = vld [vmem:[#allocation2 + $0x660] sm:$0xff]
    %v1193 = vld [vmem:[#allocation2 + $0x668] sm:$0xff]
    %v1194 = vld [vmem:[#allocation2 + $0x670] sm:$0xff]
    %v1195 = vld [vmem:[#allocation2 + $0x678] sm:$0xff]
    %v1196 = vld [vmem:[#allocation2 + $0x680] sm:$0xff]
    %v1197 = vld [vmem:[#allocation2 + $0x688] sm:$0xff]
    %v1198 = vld [vmem:[#allocation2 + $0x690] sm:$0xff]
    %v1199 = vld [vmem:[#allocation2 + $0x698] sm:$0xff]
    %v1200 = vld [vmem:[#allocation2 + $0x6a0] sm:$0xff]
    %v1201 = vld [vmem:[#allocation2 + $0x6a8] sm:$0xff]
    %v1202 = vld [vmem:[#allocation2 + $0x6b0] sm:$0xff]
    %v1203 = vld [vmem:[#allocation2 + $0x6b8] sm:$0xff]
    %v1204 = vld [vmem:[#allocation2 + $0x6c0] sm:$0xff]
    %v1205 = vld [vmem:[#allocation2 + $0x6c8] sm:$0xff]
    %v1206 = vld [vmem:[#allocation2 + $0x6d0] sm:$0xff]
    %v1207 = vld [vmem:[#allocation2 + $0x6d8] sm:$0xff]
    %v1208 = vld [vmem:[#allocation2 + $0x6e0] sm:$0xff]
    %v1209 = vld [vmem:[#allocation2 + $0x6e8] sm:$0xff]
    %v1210 = vld [vmem:[#allocation2 + $0x6f0] sm:$0xff]
    %v1211 = vld [vmem:[#allocation2 + $0x6f8] sm:$0xff]
    %v1212 = vld [vmem:[#allocation2 + $0x700] sm:$0xff]
    %v1213 = vld [vmem:[#allocation2 + $0x708] sm:$0xff]
    %v1214 = vld [vmem:[#allocation2 + $0x710] sm:$0xff]
    %v1215 = vld [vmem:[#allocation2 + $0x718] sm:$0xff]
    %v1216 = vld [vmem:[#allocation2 + $0x720] sm:$0xff]
    %v1217 = vld [vmem:[#allocation2 + $0x728] sm:$0xff]
    %v1218 = vld [vmem:[#allocation2 + $0x730] sm:$0xff]
    %v1219 = vld [vmem:[#allocation2 + $0x738] sm:$0xff]
    %v1220 = vld [vmem:[#allocation2 + $0x740] sm:$0xff]
    %v1221 = vld [vmem:[#allocation2 + $0x748] sm:$0xff]
    %v1222 = vld [vmem:[#allocation2 + $0x750] sm:$0xff]
    %v1223 = vld [vmem:[#allocation2 + $0x758] sm:$0xff]
    %v1224 = vld [vmem:[#allocation2 + $0x760] sm:$0xff]
    %v1225 = vld [vmem:[#allocation2 + $0x768] sm:$0xff]
    %v1226 = vld [vmem:[#allocation2 + $0x770] sm:$0xff]
    %v1227 = vld [vmem:[#allocation2 + $0x778] sm:$0xff]
    %v1228 = vld [vmem:[#allocation2 + $0x780] sm:$0xff]
    %v1229 = vld [vmem:[#allocation2 + $0x788] sm:$0xff]
    %v1230 = vld [vmem:[#allocation2 + $0x790] sm:$0xff]
    %v1231 = vld [vmem:[#allocation2 + $0x798] sm:$0xff]
    %v1232 = vld [vmem:[#allocation2 + $0x7a0] sm:$0xff]
    %v1233 = vld [vmem:[#allocation2 + $0x7a8] sm:$0xff]
    %v1234 = vld [vmem:[#allocation2 + $0x7b0] sm:$0xff]
    %v1235 = vld [vmem:[#allocation2 + $0x7b8] sm:$0xff]
    %v1236 = vld [vmem:[#allocation2 + $0x7c0] sm:$0xff]
    %v1237 = vld [vmem:[#allocation2 + $0x7c8] sm:$0xff]
    %v1238 = vld [vmem:[#allocation2 + $0x7d0] sm:$0xff]
    %v1239 = vld [vmem:[#allocation2 + $0x7d8] sm:$0xff]
    %v1240 = vld [vmem:[#allocation2 + $0x7e0] sm:$0xff]
    %v1241 = vld [vmem:[#allocation2 + $0x7e8] sm:$0xff]
    %v1242 = vld [vmem:[#allocation2 + $0x7f0] sm:$0xff]
    %v1243 = vld [vmem:[#allocation2 + $0x7f8] sm:$0xff]
    %v1500 = vunpack.c.l.b16 %v988
    %v1501 = vunpack.c.h.b16 %v988
    %v1502 = vunpack.c.l.b16 %v989
    %v1503 = vunpack.c.h.b16 %v989
    %v1504 = vunpack.c.l.b16 %v990
    %v1505 = vunpack.c.h.b16 %v990
    %v1506 = vunpack.c.l.b16 %v991
    %v1507 = vunpack.c.h.b16 %v991
    %v1508 = vunpack.c.l.b16 %v992
    %v1509 = vunpack.c.h.b16 %v992
    %v1510 = vunpack.c.l.b16 %v993
    %v1511 = vunpack.c.h.b16 %v993
    %v1512 = vunpack.c.l.b16 %v994
    %v1513 = vunpack.c.h.b16 %v994
    %v1514 = vunpack.c.l.b16 %v995
    %v1515 = vunpack.c.h.b16 %v995
    %v1516 = vunpack.c.l.b16 %v996
    %v1517 = vunpack.c.h.b16 %v996
    %v1518 = vunpack.c.l.b16 %v997
    %v1519 = vunpack.c.h.b16 %v997
    %v1520 = vunpack.c.l.b16 %v998
    %v1521 = vunpack.c.h.b16 %v998
    %v1522 = vunpack.c.l.b16 %v999
    %v1523 = vunpack.c.h.b16 %v999
    %v1524 = vunpack.c.l.b16 %v1000
    %v1525 = vunpack.c.h.b16 %v1000
    %v1526 = vunpack.c.l.b16 %v1001
    %v1527 = vunpack.c.h.b16 %v1001
    %v1528 = vunpack.c.l.b16 %v1002
    %v1529 = vunpack.c.h.b16 %v1002
    %v1530 = vunpack.c.l.b16 %v1003
    %v1531 = vunpack.c.h.b16 %v1003
    %v1532 = vunpack.c.l.b16 %v1004
    %v1533 = vunpack.c.h.b16 %v1004
    %v1534 = vunpack.c.l.b16 %v1005
    %v1535 = vunpack.c.h.b16 %v1005
    %v1536 = vunpack.c.l.b16 %v1006
    %v1537 = vunpack.c.h.b16 %v1006
    %v1538 = vunpack.c.l.b16 %v1007
    %v1539 = vunpack.c.h.b16 %v1007
    %v1540 = vunpack.c.l.b16 %v1008
    %v1541 = vunpack.c.h.b16 %v1008
    %v1542 = vunpack.c.l.b16 %v1009
    %v1543 = vunpack.c.h.b16 %v1009
    %v1544 = vunpack.c.l.b16 %v1010
    %v1545 = vunpack.c.h.b16 %v1010
    %v1546 = vunpack.c.l.b16 %v1011
    %v1547 = vunpack.c.h.b16 %v1011
    %v1548 = vunpack.c.l.b16 %v1012
    %v1549 = vunpack.c.h.b16 %v1012
    %v1550 = vunpack.c.l.b16 %v1013
    %v1551 = vunpack.c.h.b16 %v1013
    %v1552 = vunpack.c.l.b16 %v1014
    %v1553 = vunpack.c.h.b16 %v1014
    %v1554 = vunpack.c.l.b16 %v1015
    %v1555 = vunpack.c.h.b16 %v1015
    %v1556 = vunpack.c.l.b16 %v1016
    %v1557 = vunpack.c.h.b16 %v1016
    %v1558 = vunpack.c.l.b16 %v1017
    %v1559 = vunpack.c.h.b16 %v1017
    %v1560 = vunpack.c.l.b16 %v1018
    %v1561 = vunpack.c.h.b16 %v1018
    %v1562 = vunpack.c.l.b16 %v1019
    %v1563 = vunpack.c.h.b16 %v1019
    %v1564 = vunpack.c.l.b16 %v1020
    %v1565 = vunpack.c.h.b16 %v1020
    %v1566 = vunpack.c.l.b16 %v1021
    %v1567 = vunpack.c.h.b16 %v1021
    %v1568 = vunpack.c.l.b16 %v1022
    %v1569 = vunpack.c.h.b16 %v1022
    %v1570 = vunpack.c.l.b16 %v1023
    %v1571 = vunpack.c.h.b16 %v1023
    %v1572 = vunpack.c.l.b16 %v1024
    %v1573 = vunpack.c.h.b16 %v1024
    %v1574 = vunpack.c.l.b16 %v1025
    %v1575 = vunpack.c.h.b16 %v1025
    %v1576 = vunpack.c.l.b16 %v1026
    %v1577 = vunpack.c.h.b16 %v1026
    %v1578 = vunpack.c.l.b16 %v1027
    %v1579 = vunpack.c.h.b16 %v1027
    %v1580 = vunpack.c.l.b16 %v1028
    %v1581 = vunpack.c.h.b16 %v1028
    %v1582 = vunpack.c.l.b16 %v1029
    %v1583 = vunpack.c.h.b16 %v1029
    %v1584 = vunpack.c.l.b16 %v1030
    %v1585 = vunpack.c.h.b16 %v1030
    %v1586 = vunpack.c.l.b16 %v1031
    %v1587 = vunpack.c.h.b16 %v1031
    %v1588 = vunpack.c.l.b16 %v1032
    %v1589 = vunpack.c.h.b16 %v1032
    %v1590 = vunpack.c.l.b16 %v1033
    %v1591 = vunpack.c.h.b16 %v1033
    %v1592 = vunpack.c.l.b16 %v1034
    %v1593 = vunpack.c.h.b16 %v1034
    %v1594 = vunpack.c.l.b16 %v1035
    %v1595 = vunpack.c.h.b16 %v1035
    %v1596 = vunpack.c.l.b16 %v1036
    %v1597 = vunpack.c.h.b16 %v1036
    %v1598 = vunpack.c.l.b16 %v1037
    %v1599 = vunpack.c.h.b16 %v1037
    %v1600 = vunpack.c.l.b16 %v1038
    %v1601 = vunpack.c.h.b16 %v1038
    %v1602 = vunpack.c.l.b16 %v1039
    %v1603 = vunpack.c.h.b16 %v1039
    %v1604 = vunpack.c.l.b16 %v1040
    %v1605 = vunpack.c.h.b16 %v1040
    %v1606 = vunpack.c.l.b16 %v1041
    %v1607 = vunpack.c.h.b16 %v1041
    %v1608 = vunpack.c.l.b16 %v1042
    %v1609 = vunpack.c.h.b16 %v1042
    %v1610 = vunpack.c.l.b16 %v1043
    %v1611 = vunpack.c.h.b16 %v1043
    %v1612 = vunpack.c.l.b16 %v1044
    %v1613 = vunpack.c.h.b16 %v1044
    %v1614 = vunpack.c.l.b16 %v1045
    %v1615 = vunpack.c.h.b16 %v1045
    %v1616 = vunpack.c.l.b16 %v1046
    %v1617 = vunpack.c.h.b16 %v1046
    %v1618 = vunpack.c.l.b16 %v1047
    %v1619 = vunpack.c.h.b16 %v1047
    %v1620 = vunpack.c.l.b16 %v1048
    %v1621 = vunpack.c.h.b16 %v1048
    %v1622 = vunpack.c.l.b16 %v1049
    %v1623 = vunpack.c.h.b16 %v1049
    %v1624 = vunpack.c.l.b16 %v1050
    %v1625 = vunpack.c.h.b16 %v1050
    %v1626 = vunpack.c.l.b16 %v1051
    %v1627 = vunpack.c.h.b16 %v1051
    %v1628 = vunpack.c.l.b16 %v1052
    %v1629 = vunpack.c.h.b16 %v1052
    %v1630 = vunpack.c.l.b16 %v1053
    %v1631 = vunpack.c.h.b16 %v1053
    %v1632 = vunpack.c.l.b16 %v1054
    %v1633 = vunpack.c.h.b16 %v1054
    %v1634 = vunpack.c.l.b16 %v1055
    %v1635 = vunpack.c.h.b16 %v1055
    %v1636 = vunpack.c.l.b16 %v1056
    %v1637 = vunpack.c.h.b16 %v1056
    %v1638 = vunpack.c.l.b16 %v1057
    %v1639 = vunpack.c.h.b16 %v1057
    %v1640 = vunpack.c.l.b16 %v1058
    %v1641 = vunpack.c.h.b16 %v1058
    %v1642 = vunpack.c.l.b16 %v1059
    %v1643 = vunpack.c.h.b16 %v1059
    %v1644 = vunpack.c.l.b16 %v1060
    %v1645 = vunpack.c.h.b16 %v1060
    %v1646 = vunpack.c.l.b16 %v1061
    %v1647 = vunpack.c.h.b16 %v1061
    %v1648 = vunpack.c.l.b16 %v1062
    %v1649 = vunpack.c.h.b16 %v1062
    %v1650 = vunpack.c.l.b16 %v1063
    %v1651 = vunpack.c.h.b16 %v1063
    %v1652 = vunpack.c.l.b16 %v1064
    %v1653 = vunpack.c.h.b16 %v1064
    %v1654 = vunpack.c.l.b16 %v1065
    %v1655 = vunpack.c.h.b16 %v1065
    %v1656 = vunpack.c.l.b16 %v1066
    %v1657 = vunpack.c.h.b16 %v1066
    %v1658 = vunpack.c.l.b16 %v1067
    %v1659 = vunpack.c.h.b16 %v1067
    %v1660 = vunpack.c.l.b16 %v1068
    %v1661 = vunpack.c.h.b16 %v1068
    %v1662 = vunpack.c.l.b16 %v1069
    %v1663 = vunpack.c.h.b16 %v1069
    %v1664 = vunpack.c.l.b16 %v1070
    %v1665 = vunpack.c.h.b16 %v1070
    %v1666 = vunpack.c.l.b16 %v1071
    %v1667 = vunpack.c.h.b16 %v1071
    %v1668 = vunpack.c.l.b16 %v1072
    %v1669 = vunpack.c.h.b16 %v1072
    %v1670 = vunpack.c.l.b16 %v1073
    %v1671 = vunpack.c.h.b16 %v1073
    %v1672 = vunpack.c.l.b16 %v1074
    %v1673 = vunpack.c.h.b16 %v1074
    %v1674 = vunpack.c.l.b16 %v1075
    %v1675 = vunpack.c.h.b16 %v1075
    %v1676 = vunpack.c.l.b16 %v1076
    %v1677 = vunpack.c.h.b16 %v1076
    %v1678 = vunpack.c.l.b16 %v1077
    %v1679 = vunpack.c.h.b16 %v1077
    %v1680 = vunpack.c.l.b16 %v1078
    %v1681 = vunpack.c.h.b16 %v1078
    %v1682 = vunpack.c.l.b16 %v1079
    %v1683 = vunpack.c.h.b16 %v1079
    %v1684 = vunpack.c.l.b16 %v1080
    %v1685 = vunpack.c.h.b16 %v1080
    %v1686 = vunpack.c.l.b16 %v1081
    %v1687 = vunpack.c.h.b16 %v1081
    %v1688 = vunpack.c.l.b16 %v1082
    %v1689 = vunpack.c.h.b16 %v1082
    %v1690 = vunpack.c.l.b16 %v1083
    %v1691 = vunpack.c.h.b16 %v1083
    %v1692 = vunpack.c.l.b16 %v1084
    %v1693 = vunpack.c.h.b16 %v1084
    %v1694 = vunpack.c.l.b16 %v1085
    %v1695 = vunpack.c.h.b16 %v1085
    %v1696 = vunpack.c.l.b16 %v1086
    %v1697 = vunpack.c.h.b16 %v1086
    %v1698 = vunpack.c.l.b16 %v1087
    %v1699 = vunpack.c.h.b16 %v1087
    %v1700 = vunpack.c.l.b16 %v1088
    %v1701 = vunpack.c.h.b16 %v1088
    %v1702 = vunpack.c.l.b16 %v1089
    %v1703 = vunpack.c.h.b16 %v1089
    %v1704 = vunpack.c.l.b16 %v1090
    %v1705 = vunpack.c.h.b16 %v1090
    %v1706 = vunpack.c.l.b16 %v1091
    %v1707 = vunpack.c.h.b16 %v1091
    %v1708 = vunpack.c.l.b16 %v1092
    %v1709 = vunpack.c.h.b16 %v1092
    %v1710 = vunpack.c.l.b16 %v1093
    %v1711 = vunpack.c.h.b16 %v1093
    %v1712 = vunpack.c.l.b16 %v1094
    %v1713 = vunpack.c.h.b16 %v1094
    %v1714 = vunpack.c.l.b16 %v1095
    %v1715 = vunpack.c.h.b16 %v1095
    %v1716 = vunpack.c.l.b16 %v1096
    %v1717 = vunpack.c.h.b16 %v1096
    %v1718 = vunpack.c.l.b16 %v1097
    %v1719 = vunpack.c.h.b16 %v1097
    %v1720 = vunpack.c.l.b16 %v1098
    %v1721 = vunpack.c.h.b16 %v1098
    %v1722 = vunpack.c.l.b16 %v1099
    %v1723 = vunpack.c.h.b16 %v1099
    %v1724 = vunpack.c.l.b16 %v1100
    %v1725 = vunpack.c.h.b16 %v1100
    %v1726 = vunpack.c.l.b16 %v1101
    %v1727 = vunpack.c.h.b16 %v1101
    %v1728 = vunpack.c.l.b16 %v1102
    %v1729 = vunpack.c.h.b16 %v1102
    %v1730 = vunpack.c.l.b16 %v1103
    %v1731 = vunpack.c.h.b16 %v1103
    %v1732 = vunpack.c.l.b16 %v1104
    %v1733 = vunpack.c.h.b16 %v1104
    %v1734 = vunpack.c.l.b16 %v1105
    %v1735 = vunpack.c.h.b16 %v1105
    %v1736 = vunpack.c.l.b16 %v1106
    %v1737 = vunpack.c.h.b16 %v1106
    %v1738 = vunpack.c.l.b16 %v1107
    %v1739 = vunpack.c.h.b16 %v1107
    %v1740 = vunpack.c.l.b16 %v1108
    %v1741 = vunpack.c.h.b16 %v1108
    %v1742 = vunpack.c.l.b16 %v1109
    %v1743 = vunpack.c.h.b16 %v1109
    %v1744 = vunpack.c.l.b16 %v1110
    %v1745 = vunpack.c.h.b16 %v1110
    %v1746 = vunpack.c.l.b16 %v1111
    %v1747 = vunpack.c.h.b16 %v1111
    %v1748 = vunpack.c.l.b16 %v1112
    %v1749 = vunpack.c.h.b16 %v1112
    %v1750 = vunpack.c.l.b16 %v1113
    %v1751 = vunpack.c.h.b16 %v1113
    %v1752 = vunpack.c.l.b16 %v1114
    %v1753 = vunpack.c.h.b16 %v1114
    %v1754 = vunpack.c.l.b16 %v1115
    %v1755 = vunpack.c.h.b16 %v1115
    %v1756 = vunpack.c.l.b16 %v1116
    %v1757 = vunpack.c.h.b16 %v1116
    %v1758 = vunpack.c.l.b16 %v1117
    %v1759 = vunpack.c.h.b16 %v1117
    %v1760 = vunpack.c.l.b16 %v1118
    %v1761 = vunpack.c.h.b16 %v1118
    %v1762 = vunpack.c.l.b16 %v1119
    %v1763 = vunpack.c.h.b16 %v1119
    %v1764 = vunpack.c.l.b16 %v1120
    %v1765 = vunpack.c.h.b16 %v1120
    %v1766 = vunpack.c.l.b16 %v1121
    %v1767 = vunpack.c.h.b16 %v1121
    %v1768 = vunpack.c.l.b16 %v1122
    %v1769 = vunpack.c.h.b16 %v1122
    %v1770 = vunpack.c.l.b16 %v1123
    %v1771 = vunpack.c.h.b16 %v1123
    %v1772 = vunpack.c.l.b16 %v1124
    %v1773 = vunpack.c.h.b16 %v1124
    %v1774 = vunpack.c.l.b16 %v1125
    %v1775 = vunpack.c.h.b16 %v1125
    %v1776 = vunpack.c.l.b16 %v1126
    %v1777 = vunpack.c.h.b16 %v1126
    %v1778 = vunpack.c.l.b16 %v1127
    %v1779 = vunpack.c.h.b16 %v1127
    %v1780 = vunpack.c.l.b16 %v1128
    %v1781 = vunpack.c.h.b16 %v1128
    %v1782 = vunpack.c.l.b16 %v1129
    %v1783 = vunpack.c.h.b16 %v1129
    %v1784 = vunpack.c.l.b16 %v1130
    %v1785 = vunpack.c.h.b16 %v1130
    %v1786 = vunpack.c.l.b16 %v1131
    %v1787 = vunpack.c.h.b16 %v1131
    %v1788 = vunpack.c.l.b16 %v1132
    %v1789 = vunpack.c.h.b16 %v1132
    %v1790 = vunpack.c.l.b16 %v1133
    %v1791 = vunpack.c.h.b16 %v1133
    %v1792 = vunpack.c.l.b16 %v1134
    %v1793 = vunpack.c.h.b16 %v1134
    %v1794 = vunpack.c.l.b16 %v1135
    %v1795 = vunpack.c.h.b16 %v1135
    %v1796 = vunpack.c.l.b16 %v1136
    %v1797 = vunpack.c.h.b16 %v1136
    %v1798 = vunpack.c.l.b16 %v1137
    %v1799 = vunpack.c.h.b16 %v1137
    %v1800 = vunpack.c.l.b16 %v1138
    %v1801 = vunpack.c.h.b16 %v1138
    %v1802 = vunpack.c.l.b16 %v1139
    %v1803 = vunpack.c.h.b16 %v1139
    %v1804 = vunpack.c.l.b16 %v1140
    %v1805 = vunpack.c.h.b16 %v1140
    %v1806 = vunpack.c.l.b16 %v1141
    %v1807 = vunpack.c.h.b16 %v1141
    %v1808 = vunpack.c.l.b16 %v1142
    %v1809 = vunpack.c.h.b16 %v1142
    %v1810 = vunpack.c.l.b16 %v1143
    %v1811 = vunpack.c.h.b16 %v1143
    %v1812 = vunpack.c.l.b16 %v1144
    %v1813 = vunpack.c.h.b16 %v1144
    %v1814 = vunpack.c.l.b16 %v1145
    %v1815 = vunpack.c.h.b16 %v1145
    %v1816 = vunpack.c.l.b16 %v1146
    %v1817 = vunpack.c.h.b16 %v1146
    %v1818 = vunpack.c.l.b16 %v1147
    %v1819 = vunpack.c.h.b16 %v1147
    %v1820 = vunpack.c.l.b16 %v1148
    %v1821 = vunpack.c.h.b16 %v1148
    %v1822 = vunpack.c.l.b16 %v1149
    %v1823 = vunpack.c.h.b16 %v1149
    %v1824 = vunpack.c.l.b16 %v1150
    %v1825 = vunpack.c.h.b16 %v1150
    %v1826 = vunpack.c.l.b16 %v1151
    %v1827 = vunpack.c.h.b16 %v1151
    %v1828 = vunpack.c.l.b16 %v1152
    %v1829 = vunpack.c.h.b16 %v1152
    %v1830 = vunpack.c.l.b16 %v1153
    %v1831 = vunpack.c.h.b16 %v1153
    %v1832 = vunpack.c.l.b16 %v1154
    %v1833 = vunpack.c.h.b16 %v1154
    %v1834 = vunpack.c.l.b16 %v1155
    %v1835 = vunpack.c.h.b16 %v1155
    %v1836 = vunpack.c.l.b16 %v1156
    %v1837 = vunpack.c.h.b16 %v1156
    %v1838 = vunpack.c.l.b16 %v1157
    %v1839 = vunpack.c.h.b16 %v1157
    %v1840 = vunpack.c.l.b16 %v1158
    %v1841 = vunpack.c.h.b16 %v1158
    %v1842 = vunpack.c.l.b16 %v1159
    %v1843 = vunpack.c.h.b16 %v1159
    %v1844 = vunpack.c.l.b16 %v1160
    %v1845 = vunpack.c.h.b16 %v1160
    %v1846 = vunpack.c.l.b16 %v1161
    %v1847 = vunpack.c.h.b16 %v1161
    %v1848 = vunpack.c.l.b16 %v1162
    %v1849 = vunpack.c.h.b16 %v1162
    %v1850 = vunpack.c.l.b16 %v1163
    %v1851 = vunpack.c.h.b16 %v1163
    %v1852 = vunpack.c.l.b16 %v1164
    %v1853 = vunpack.c.h.b16 %v1164
    %v1854 = vunpack.c.l.b16 %v1165
    %v1855 = vunpack.c.h.b16 %v1165
    %v1856 = vunpack.c.l.b16 %v1166
    %v1857 = vunpack.c.h.b16 %v1166
    %v1858 = vunpack.c.l.b16 %v1167
    %v1859 = vunpack.c.h.b16 %v1167
    %v1860 = vunpack.c.l.b16 %v1168
    %v1861 = vunpack.c.h.b16 %v1168
    %v1862 = vunpack.c.l.b16 %v1169
    %v1863 = vunpack.c.h.b16 %v1169
    %v1864 = vunpack.c.l.b16 %v1170
    %v1865 = vunpack.c.h.b16 %v1170
    %v1866 = vunpack.c.l.b16 %v1171
    %v1867 = vunpack.c.h.b16 %v1171
    %v1868 = vunpack.c.l.b16 %v1172
    %v1869 = vunpack.c.h.b16 %v1172
    %v1870 = vunpack.c.l.b16 %v1173
    %v1871 = vunpack.c.h.b16 %v1173
    %v1872 = vunpack.c.l.b16 %v1174
    %v1873 = vunpack.c.h.b16 %v1174
    %v1874 = vunpack.c.l.b16 %v1175
    %v1875 = vunpack.c.h.b16 %v1175
    %v1876 = vunpack.c.l.b16 %v1176
    %v1877 = vunpack.c.h.b16 %v1176
    %v1878 = vunpack.c.l.b16 %v1177
    %v1879 = vunpack.c.h.b16 %v1177
    %v1880 = vunpack.c.l.b16 %v1178
    %v1881 = vunpack.c.h.b16 %v1178
    %v1882 = vunpack.c.l.b16 %v1179
    %v1883 = vunpack.c.h.b16 %v1179
    %v1884 = vunpack.c.l.b16 %v1180
    %v1885 = vunpack.c.h.b16 %v1180
    %v1886 = vunpack.c.l.b16 %v1181
    %v1887 = vunpack.c.h.b16 %v1181
    %v1888 = vunpack.c.l.b16 %v1182
    %v1889 = vunpack.c.h.b16 %v1182
    %v1890 = vunpack.c.l.b16 %v1183
    %v1891 = vunpack.c.h.b16 %v1183
    %v1892 = vunpack.c.l.b16 %v1184
    %v1893 = vunpack.c.h.b16 %v1184
    %v1894 = vunpack.c.l.b16 %v1185
    %v1895 = vunpack.c.h.b16 %v1185
    %v1896 = vunpack.c.l.b16 %v1186
    %v1897 = vunpack.c.h.b16 %v1186
    %v1898 = vunpack.c.l.b16 %v1187
    %v1899 = vunpack.c.h.b16 %v1187
    %v1900 = vunpack.c.l.b16 %v1188
    %v1901 = vunpack.c.h.b16 %v1188
    %v1902 = vunpack.c.l.b16 %v1189
    %v1903 = vunpack.c.h.b16 %v1189
    %v1904 = vunpack.c.l.b16 %v1190
    %v1905 = vunpack.c.h.b16 %v1190
    %v1906 = vunpack.c.l.b16 %v1191
    %v1907 = vunpack.c.h.b16 %v1191
    %v1908 = vunpack.c.l.b16 %v1192
    %v1909 = vunpack.c.h.b16 %v1192
    %v1910 = vunpack.c.l.b16 %v1193
    %v1911 = vunpack.c.h.b16 %v1193
    %v1912 = vunpack.c.l.b16 %v1194
    %v1913 = vunpack.c.h.b16 %v1194
    %v1914 = vunpack.c.l.b16 %v1195
    %v1915 = vunpack.c.h.b16 %v1195
    %v1916 = vunpack.c.l.b16 %v1196
    %v1917 = vunpack.c.h.b16 %v1196
    %v1918 = vunpack.c.l.b16 %v1197
    %v1919 = vunpack.c.h.b16 %v1197
    %v1920 = vunpack.c.l.b16 %v1198
    %v1921 = vunpack.c.h.b16 %v1198
    %v1922 = vunpack.c.l.b16 %v1199
    %v1923 = vunpack.c.h.b16 %v1199
    %v1924 = vunpack.c.l.b16 %v1200
    %v1925 = vunpack.c.h.b16 %v1200
    %v1926 = vunpack.c.l.b16 %v1201
    %v1927 = vunpack.c.h.b16 %v1201
    %v1928 = vunpack.c.l.b16 %v1202
    %v1929 = vunpack.c.h.b16 %v1202
    %v1930 = vunpack.c.l.b16 %v1203
    %v1931 = vunpack.c.h.b16 %v1203
    %v1932 = vunpack.c.l.b16 %v1204
    %v1933 = vunpack.c.h.b16 %v1204
    %v1934 = vunpack.c.l.b16 %v1205
    %v1935 = vunpack.c.h.b16 %v1205
    %v1936 = vunpack.c.l.b16 %v1206
    %v1937 = vunpack.c.h.b16 %v1206
    %v1938 = vunpack.c.l.b16 %v1207
    %v1939 = vunpack.c.h.b16 %v1207
    %v1940 = vunpack.c.l.b16 %v1208
    %v1941 = vunpack.c.h.b16 %v1208
    %v1942 = vunpack.c.l.b16 %v1209
    %v1943 = vunpack.c.h.b16 %v1209
    %v1944 = vunpack.c.l.b16 %v1210
    %v1945 = vunpack.c.h.b16 %v1210
    %v1946 = vunpack.c.l.b16 %v1211
    %v1947 = vunpack.c.h.b16 %v1211
    %v1948 = vunpack.c.l.b16 %v1212
    %v1949 = vunpack.c.h.b16 %v1212
    %v1950 = vunpack.c.l.b16 %v1213
    %v1951 = vunpack.c.h.b16 %v1213
    %v1952 = vunpack.c.l.b16 %v1214
    %v1953 = vunpack.c.h.b16 %v1214
    %v1954 = vunpack.c.l.b16 %v1215
    %v1955 = vunpack.c.h.b16 %v1215
    %v1956 = vunpack.c.l.b16 %v1216
    %v1957 = vunpack.c.h.b16 %v1216
    %v1958 = vunpack.c.l.b16 %v1217
    %v1959 = vunpack.c.h.b16 %v1217
    %v1960 = vunpack.c.l.b16 %v1218
    %v1961 = vunpack.c.h.b16 %v1218
    %v1962 = vunpack.c.l.b16 %v1219
    %v1963 = vunpack.c.h.b16 %v1219
    %v1964 = vunpack.c.l.b16 %v1220
    %v1965 = vunpack.c.h.b16 %v1220
    %v1966 = vunpack.c.l.b16 %v1221
    %v1967 = vunpack.c.h.b16 %v1221
    %v1968 = vunpack.c.l.b16 %v1222
    %v1969 = vunpack.c.h.b16 %v1222
    %v1970 = vunpack.c.l.b16 %v1223
    %v1971 = vunpack.c.h.b16 %v1223
    %v1972 = vunpack.c.l.b16 %v1224
    %v1973 = vunpack.c.h.b16 %v1224
    %v1974 = vunpack.c.l.b16 %v1225
    %v1975 = vunpack.c.h.b16 %v1225
    %v1976 = vunpack.c.l.b16 %v1226
    %v1977 = vunpack.c.h.b16 %v1226
    %v1978 = vunpack.c.l.b16 %v1227
    %v1979 = vunpack.c.h.b16 %v1227
    %v1980 = vunpack.c.l.b16 %v1228
    %v1981 = vunpack.c.h.b16 %v1228
    %v1982 = vunpack.c.l.b16 %v1229
    %v1983 = vunpack.c.h.b16 %v1229
    %v1984 = vunpack.c.l.b16 %v1230
    %v1985 = vunpack.c.h.b16 %v1230
    %v1986 = vunpack.c.l.b16 %v1231
    %v1987 = vunpack.c.h.b16 %v1231
    %v1988 = vunpack.c.l.b16 %v1232
    %v1989 = vunpack.c.h.b16 %v1232
    %v1990 = vunpack.c.l.b16 %v1233
    %v1991 = vunpack.c.h.b16 %v1233
    %v1992 = vunpack.c.l.b16 %v1234
    %v1993 = vunpack.c.h.b16 %v1234
    %v1994 = vunpack.c.l.b16 %v1235
    %v1995 = vunpack.c.h.b16 %v1235
    %v1996 = vunpack.c.l.b16 %v1236
    %v1997 = vunpack.c.h.b16 %v1236
    %v1998 = vunpack.c.l.b16 %v1237
    %v1999 = vunpack.c.h.b16 %v1237
    %v2000 = vunpack.c.l.b16 %v1238
    %v2001 = vunpack.c.h.b16 %v1238
    %v2002 = vunpack.c.l.b16 %v1239
    %v2003 = vunpack.c.h.b16 %v1239
    %v2004 = vunpack.c.l.b16 %v1240
    %v2005 = vunpack.c.h.b16 %v1240
    %v2006 = vunpack.c.l.b16 %v1241
    %v2007 = vunpack.c.h.b16 %v1241
    %v2008 = vunpack.c.l.b16 %v1242
    %v2009 = vunpack.c.h.b16 %v1242
    %v2010 = vunpack.c.l.b16 %v1243
    %v2011 = vunpack.c.h.b16 %v1243
    %v2012 = vpack.c.b16 %v1508, %v1500
    %v2013 = vpack.c.b16 %v1509, %v1501
    %v2014 = vpack.c.b16 %v1510, %v1502
    %v2015 = vpack.c.b16 %v1511, %v1503
    %v2016 = vpack.c.b16 %v1512, %v1504
    %v2017 = vpack.c.b16 %v1513, %v1505
    %v2018 = vpack.c.b16 %v1514, %v1506
    %v2019 = vpack.c.b16 %v1515, %v1507
    %v2020 = vpack.c.b16 %v1524, %v1516
    %v2021 = vpack.c.b16 %v1525, %v1517
    %v2022 = vpack.c.b16 %v1526, %v1518
    %v2023 = vpack.c.b16 %v1527, %v1519
    %v2024 = vpack.c.b16 %v1528, %v1520
    %v2025 = vpack.c.b16 %v1529, %v1521
    %v2026 = vpack.c.b16 %v1530, %v1522
    %v2027 = vpack.c.b16 %v1531, %v1523
    %v2028 = vpack.c.b16 %v1540, %v1532
    %v2029 = vpack.c.b16 %v1541, %v1533
    %v2030 = vpack.c.b16 %v1542, %v1534
    %v2031 = vpack.c.b16 %v1543, %v1535
    %v2032 = vpack.c.b16 %v1544, %v1536
    %v2033 = vpack.c.b16 %v1545, %v1537
    %v2034 = vpack.c.b16 %v1546, %v1538
    %v2035 = vpack.c.b16 %v1547, %v1539
    %v2036 = vpack.c.b16 %v1556, %v1548
    %v2037 = vpack.c.b16 %v1557, %v1549
    %v2038 = vpack.c.b16 %v1558, %v1550
    %v2039 = vpack.c.b16 %v1559, %v1551
    %v2040 = vpack.c.b16 %v1560, %v1552
    %v2041 = vpack.c.b16 %v1561, %v1553
    %v2042 = vpack.c.b16 %v1562, %v1554
    %v2043 = vpack.c.b16 %v1563, %v1555
    %v2044 = vpack.c.b16 %v1572, %v1564
    %v2045 = vpack.c.b16 %v1573, %v1565
    %v2046 = vpack.c.b16 %v1574, %v1566
    %v2047 = vpack.c.b16 %v1575, %v1567
    %v2048 = vpack.c.b16 %v1576, %v1568
    %v2049 = vpack.c.b16 %v1577, %v1569
    %v2050 = vpack.c.b16 %v1578, %v1570
    %v2051 = vpack.c.b16 %v1579, %v1571
    %v2052 = vpack.c.b16 %v1588, %v1580
    %v2053 = vpack.c.b16 %v1589, %v1581
    %v2054 = vpack.c.b16 %v1590, %v1582
    %v2055 = vpack.c.b16 %v1591, %v1583
    %v2056 = vpack.c.b16 %v1592, %v1584
    %v2057 = vpack.c.b16 %v1593, %v1585
    %v2058 = vpack.c.b16 %v1594, %v1586
    %v2059 = vpack.c.b16 %v1595, %v1587
    %v2060 = vpack.c.b16 %v1604, %v1596
    %v2061 = vpack.c.b16 %v1605, %v1597
    %v2062 = vpack.c.b16 %v1606, %v1598
    %v2063 = vpack.c.b16 %v1607, %v1599
    %v2064 = vpack.c.b16 %v1608, %v1600
    %v2065 = vpack.c.b16 %v1609, %v1601
    %v2066 = vpack.c.b16 %v1610, %v1602
    %v2067 = vpack.c.b16 %v1611, %v1603
    %v2068 = vpack.c.b16 %v1620, %v1612
    %v2069 = vpack.c.b16 %v1621, %v1613
    %v2070 = vpack.c.b16 %v1622, %v1614
    %v2071 = vpack.c.b16 %v1623, %v1615
    %v2072 = vpack.c.b16 %v1624, %v1616
    %v2073 = vpack.c.b16 %v1625, %v1617
    %v2074 = vpack.c.b16 %v1626, %v1618
    %v2075 = vpack.c.b16 %v1627, %v1619
    %v2076 = vpack.c.b16 %v1636, %v1628
    %v2077 = vpack.c.b16 %v1637, %v1629
    %v2078 = vpack.c.b16 %v1638, %v1630
    %v2079 = vpack.c.b16 %v1639, %v1631
    %v2080 = vpack.c.b16 %v1640, %v1632
    %v2081 = vpack.c.b16 %v1641, %v1633
    %v2082 = vpack.c.b16 %v1642, %v1634
    %v2083 = vpack.c.b16 %v1643, %v1635
    %v2084 = vpack.c.b16 %v1652, %v1644
    %v2085 = vpack.c.b16 %v1653, %v1645
    %v2086 = vpack.c.b16 %v1654, %v1646
    %v2087 = vpack.c.b16 %v1655, %v1647
    %v2088 = vpack.c.b16 %v1656, %v1648
    %v2089 = vpack.c.b16 %v1657, %v1649
    %v2090 = vpack.c.b16 %v1658, %v1650
    %v2091 = vpack.c.b16 %v1659, %v1651
    %v2092 = vpack.c.b16 %v1668, %v1660
    %v2093 = vpack.c.b16 %v1669, %v1661
    %v2094 = vpack.c.b16 %v1670, %v1662
    %v2095 = vpack.c.b16 %v1671, %v1663
    %v2096 = vpack.c.b16 %v1672, %v1664
    %v2097 = vpack.c.b16 %v1673, %v1665
    %v2098 = vpack.c.b16 %v1674, %v1666
    %v2099 = vpack.c.b16 %v1675, %v1667
    %v2100 = vpack.c.b16 %v1684, %v1676
    %v2101 = vpack.c.b16 %v1685, %v1677
    %v2102 = vpack.c.b16 %v1686, %v1678
    %v2103 = vpack.c.b16 %v1687, %v1679
    %v2104 = vpack.c.b16 %v1688, %v1680
    %v2105 = vpack.c.b16 %v1689, %v1681
    %v2106 = vpack.c.b16 %v1690, %v1682
    %v2107 = vpack.c.b16 %v1691, %v1683
    %v2108 = vpack.c.b16 %v1700, %v1692
    %v2109 = vpack.c.b16 %v1701, %v1693
    %v2110 = vpack.c.b16 %v1702, %v1694
    %v2111 = vpack.c.b16 %v1703, %v1695
    %v2112 = vpack.c.b16 %v1704, %v1696
    %v2113 = vpack.c.b16 %v1705, %v1697
    %v2114 = vpack.c.b16 %v1706, %v1698
    %v2115 = vpack.c.b16 %v1707, %v1699
    %v2116 = vpack.c.b16 %v1716, %v1708
    %v2117 = vpack.c.b16 %v1717, %v1709
    %v2118 = vpack.c.b16 %v1718, %v1710
    %v2119 = vpack.c.b16 %v1719, %v1711
    %v2120 = vpack.c.b16 %v1720, %v1712
    %v2121 = vpack.c.b16 %v1721, %v1713
    %v2122 = vpack.c.b16 %v1722, %v1714
    %v2123 = vpack.c.b16 %v1723, %v1715
    %v2124 = vpack.c.b16 %v1732, %v1724
    %v2125 = vpack.c.b16 %v1733, %v1725
    %v2126 = vpack.c.b16 %v1734, %v1726
    %v2127 = vpack.c.b16 %v1735, %v1727
    %v2128 = vpack.c.b16 %v1736, %v1728
    %v2129 = vpack.c.b16 %v1737, %v1729
    %v2130 = vpack.c.b16 %v1738, %v1730
    %v2131 = vpack.c.b16 %v1739, %v1731
    %v2132 = vpack.c.b16 %v1748, %v1740
    %v2133 = vpack.c.b16 %v1749, %v1741
    %v2134 = vpack.c.b16 %v1750, %v1742
    %v2135 = vpack.c.b16 %v1751, %v1743
    %v2136 = vpack.c.b16 %v1752, %v1744
    %v2137 = vpack.c.b16 %v1753, %v1745
    %v2138 = vpack.c.b16 %v1754, %v1746
    %v2139 = vpack.c.b16 %v1755, %v1747
    %v2140 = vpack.c.b16 %v1764, %v1756
    %v2141 = vpack.c.b16 %v1765, %v1757
    %v2142 = vpack.c.b16 %v1766, %v1758
    %v2143 = vpack.c.b16 %v1767, %v1759
    %v2144 = vpack.c.b16 %v1768, %v1760
    %v2145 = vpack.c.b16 %v1769, %v1761
    %v2146 = vpack.c.b16 %v1770, %v1762
    %v2147 = vpack.c.b16 %v1771, %v1763
    %v2148 = vpack.c.b16 %v1780, %v1772
    %v2149 = vpack.c.b16 %v1781, %v1773
    %v2150 = vpack.c.b16 %v1782, %v1774
    %v2151 = vpack.c.b16 %v1783, %v1775
    %v2152 = vpack.c.b16 %v1784, %v1776
    %v2153 = vpack.c.b16 %v1785, %v1777
    %v2154 = vpack.c.b16 %v1786, %v1778
    %v2155 = vpack.c.b16 %v1787, %v1779
    %v2156 = vpack.c.b16 %v1796, %v1788
    %v2157 = vpack.c.b16 %v1797, %v1789
    %v2158 = vpack.c.b16 %v1798, %v1790
    %v2159 = vpack.c.b16 %v1799, %v1791
    %v2160 = vpack.c.b16 %v1800, %v1792
    %v2161 = vpack.c.b16 %v1801, %v1793
    %v2162 = vpack.c.b16 %v1802, %v1794
    %v2163 = vpack.c.b16 %v1803, %v1795
    %v2164 = vpack.c.b16 %v1812, %v1804
    %v2165 = vpack.c.b16 %v1813, %v1805
    %v2166 = vpack.c.b16 %v1814, %v1806
    %v2167 = vpack.c.b16 %v1815, %v1807
    %v2168 = vpack.c.b16 %v1816, %v1808
    %v2169 = vpack.c.b16 %v1817, %v1809
    %v2170 = vpack.c.b16 %v1818, %v1810
    %v2171 = vpack.c.b16 %v1819, %v1811
    %v2172 = vpack.c.b16 %v1828, %v1820
    %v2173 = vpack.c.b16 %v1829, %v1821
    %v2174 = vpack.c.b16 %v1830, %v1822
    %v2175 = vpack.c.b16 %v1831, %v1823
    %v2176 = vpack.c.b16 %v1832, %v1824
    %v2177 = vpack.c.b16 %v1833, %v1825
    %v2178 = vpack.c.b16 %v1834, %v1826
    %v2179 = vpack.c.b16 %v1835, %v1827
    %v2180 = vpack.c.b16 %v1844, %v1836
    %v2181 = vpack.c.b16 %v1845, %v1837
    %v2182 = vpack.c.b16 %v1846, %v1838
    %v2183 = vpack.c.b16 %v1847, %v1839
    %v2184 = vpack.c.b16 %v1848, %v1840
    %v2185 = vpack.c.b16 %v1849, %v1841
    %v2186 = vpack.c.b16 %v1850, %v1842
    %v2187 = vpack.c.b16 %v1851, %v1843
    %v2188 = vpack.c.b16 %v1860, %v1852
    %v2189 = vpack.c.b16 %v1861, %v1853
    %v2190 = vpack.c.b16 %v1862, %v1854
    %v2191 = vpack.c.b16 %v1863, %v1855
    %v2192 = vpack.c.b16 %v1864, %v1856
    %v2193 = vpack.c.b16 %v1865, %v1857
    %v2194 = vpack.c.b16 %v1866, %v1858
    %v2195 = vpack.c.b16 %v1867, %v1859
    %v2196 = vpack.c.b16 %v1876, %v1868
    %v2197 = vpack.c.b16 %v1877, %v1869
    %v2198 = vpack.c.b16 %v1878, %v1870
    %v2199 = vpack.c.b16 %v1879, %v1871
    %v2200 = vpack.c.b16 %v1880, %v1872
    %v2201 = vpack.c.b16 %v1881, %v1873
    %v2202 = vpack.c.b16 %v1882, %v1874
    %v2203 = vpack.c.b16 %v1883, %v1875
    %v2204 = vpack.c.b16 %v1892, %v1884
    %v2205 = vpack.c.b16 %v1893, %v1885
    %v2206 = vpack.c.b16 %v1894, %v1886
    %v2207 = vpack.c.b16 %v1895, %v1887
    %v2208 = vpack.c.b16 %v1896, %v1888
    %v2209 = vpack.c.b16 %v1897, %v1889
    %v2210 = vpack.c.b16 %v1898, %v1890
    %v2211 = vpack.c.b16 %v1899, %v1891
    %v2212 = vpack.c.b16 %v1908, %v1900
    %v2213 = vpack.c.b16 %v1909, %v1901
    %v2214 = vpack.c.b16 %v1910, %v1902
    %v2215 = vpack.c.b16 %v1911, %v1903
    %v2216 = vpack.c.b16 %v1912, %v1904
    %v2217 = vpack.c.b16 %v1913, %v1905
    %v2218 = vpack.c.b16 %v1914, %v1906
    %v2219 = vpack.c.b16 %v1915, %v1907
    %v2220 = vpack.c.b16 %v1924, %v1916
    %v2221 = vpack.c.b16 %v1925, %v1917
    %v2222 = vpack.c.b16 %v1926, %v1918
    %v2223 = vpack.c.b16 %v1927, %v1919
    %v2224 = vpack.c.b16 %v1928, %v1920
    %v2225 = vpack.c.b16 %v1929, %v1921
    %v2226 = vpack.c.b16 %v1930, %v1922
    %v2227 = vpack.c.b16 %v1931, %v1923
    %v2228 = vpack.c.b16 %v1940, %v1932
    %v2229 = vpack.c.b16 %v1941, %v1933
    %v2230 = vpack.c.b16 %v1942, %v1934
    %v2231 = vpack.c.b16 %v1943, %v1935
    %v2232 = vpack.c.b16 %v1944, %v1936
    %v2233 = vpack.c.b16 %v1945, %v1937
    %v2234 = vpack.c.b16 %v1946, %v1938
    %v2235 = vpack.c.b16 %v1947, %v1939
    %v2236 = vpack.c.b16 %v1956, %v1948
    %v2237 = vpack.c.b16 %v1957, %v1949
    %v2238 = vpack.c.b16 %v1958, %v1950
    %v2239 = vpack.c.b16 %v1959, %v1951
    %v2240 = vpack.c.b16 %v1960, %v1952
    %v2241 = vpack.c.b16 %v1961, %v1953
    %v2242 = vpack.c.b16 %v1962, %v1954
    %v2243 = vpack.c.b16 %v1963, %v1955
    %v2244 = vpack.c.b16 %v1972, %v1964
    %v2245 = vpack.c.b16 %v1973, %v1965
    %v2246 = vpack.c.b16 %v1974, %v1966
    %v2247 = vpack.c.b16 %v1975, %v1967
    %v2248 = vpack.c.b16 %v1976, %v1968
    %v2249 = vpack.c.b16 %v1977, %v1969
    %v2250 = vpack.c.b16 %v1978, %v1970
    %v2251 = vpack.c.b16 %v1979, %v1971
    %v2252 = vpack.c.b16 %v1988, %v1980
    %v2253 = vpack.c.b16 %v1989, %v1981
    %v2254 = vpack.c.b16 %v1990, %v1982
    %v2255 = vpack.c.b16 %v1991, %v1983
    %v2256 = vpack.c.b16 %v1992, %v1984
    %v2257 = vpack.c.b16 %v1993, %v1985
    %v2258 = vpack.c.b16 %v1994, %v1986
    %v2259 = vpack.c.b16 %v1995, %v1987
    %v2260 = vpack.c.b16 %v2004, %v1996
    %v2261 = vpack.c.b16 %v2005, %v1997
    %v2262 = vpack.c.b16 %v2006, %v1998
    %v2263 = vpack.c.b16 %v2007, %v1999
    %v2264 = vpack.c.b16 %v2008, %v2000
    %v2265 = vpack.c.b16 %v2009, %v2001
    %v2266 = vpack.c.b16 %v2010, %v2002
    %v2267 = vpack.c.b16 %v2011, %v2003
    %2524 = vmatpush.bf16.msra.mxu0 %v2068
    %2525 = vmatpush.bf16.msra.mxu0 %v2060
    %2526 = vmatpush.bf16.msra.mxu0 %v2052
    %2527 = vmatpush.bf16.msra.mxu0 %v2044
    %2528 = vmatpush.bf16.msra.mxu0 %v2036
    %2529 = vmatpush.bf16.msra.mxu0 %v2028
    %2530 = vmatpush.bf16.msra.mxu0 %v2020
    %2531 = vmatpush.bf16.msra.mxu0 %v2012
    %2532 = vmatmul.bf16.gmra.mxu0 %v984
    %v2533 = vpop.f32.mrf.mxu0
    %v2534 = vadd.f32 0.0, %v2533
    %v2535 = vpop.f32.mrf.mxu0
    %2536 = vdwg.mxu0
    %2537 = vmatpush.bf16.msra.mxu0 %v2132
    %2538 = vmatpush.bf16.msra.mxu0 %v2124
    %2539 = vmatpush.bf16.msra.mxu0 %v2116
    %2540 = vmatpush.bf16.msra.mxu0 %v2108
    %2541 = vmatpush.bf16.msra.mxu0 %v2100
    %2542 = vmatpush.bf16.msra.mxu0 %v2092
    %2543 = vmatpush.bf16.msra.mxu0 %v2084
    %2544 = vmatpush.bf16.msra.mxu0 %v2076
    %2545 = vmatmul.bf16.gmra.mxu0 %v985
    %v2546 = vpop.f32.mrf.mxu0
    %v2547 = vadd.f32 %v2534, %v2546
    %v2548 = vpop.f32.mrf.mxu0
    %2549 = vdwg.mxu0
    %2550 = vmatpush.bf16.msra.mxu0 %v2196
    %2551 = vmatpush.bf16.msra.mxu0 %v2188
    %2552 = vmatpush.bf16.msra.mxu0 %v2180
    %2553 = vmatpush.bf16.msra.mxu0 %v2172
    %2554 = vmatpush.bf16.msra.mxu0 %v2164
    %2555 = vmatpush.bf16.msra.mxu0 %v2156
    %2556 = vmatpush.bf16.msra.mxu0 %v2148
    %2557 = vmatpush.bf16.msra.mxu0 %v2140
    %2558 = vmatmul.bf16.gmra.mxu0 %v986
    %v2559 = vpop.f32.mrf.mxu0
    %v2560 = vadd.f32 %v2547, %v2559
    %v2561 = vpop.f32.mrf.mxu0
    %2562 = vdwg.mxu0
    %2563 = vmatpush.bf16.msra.mxu0 %v2260
    %2564 = vmatpush.bf16.msra.mxu0 %v2252
    %2565 = vmatpush.bf16.msra.mxu0 %v2244
    %2566 = vmatpush.bf16.msra.mxu0 %v2236
    %2567 = vmatpush.bf16.msra.mxu0 %v2228
    %2568 = vmatpush.bf16.msra.mxu0 %v2220
    %2569 = vmatpush.bf16.msra.mxu0 %v2212
    %2570 = vmatpush.bf16.msra.mxu0 %v2204
    %2571 = vmatmul.bf16.gmra.mxu0 %v987
    %v2572 = vpop.f32.mrf.mxu0
    %v2573 = vadd.f32 %v2560, %v2572
    %v2574 = vpop.f32.mrf.mxu0
    %2575 = vdwg.mxu0
    %2576 = vmatpush.bf16.msra.mxu0 %v2069
    %2577 = vmatpush.bf16.msra.mxu0 %v2061
    %2578 = vmatpush.bf16.msra.mxu0 %v2053
    %2579 = vmatpush.bf16.msra.mxu0 %v2045
    %2580 = vmatpush.bf16.msra.mxu0 %v2037
    %2581 = vmatpush.bf16.msra.mxu0 %v2029
    %2582 = vmatpush.bf16.msra.mxu0 %v2021
    %2583 = vmatpush.bf16.msra.mxu0 %v2013
    %2584 = vmatmul.bf16.gmra.mxu0 %v984
    %v2585 = vpop.f32.mrf.mxu0
    %v2586 = vadd.f32 0.0, %v2585
    %v2587 = vpop.f32.mrf.mxu0
    %2588 = vdwg.mxu0
    %2589 = vmatpush.bf16.msra.mxu0 %v2133
    %2590 = vmatpush.bf16.msra.mxu0 %v2125
    %2591 = vmatpush.bf16.msra.mxu0 %v2117
    %2592 = vmatpush.bf16.msra.mxu0 %v2109
    %2593 = vmatpush.bf16.msra.mxu0 %v2101
    %2594 = vmatpush.bf16.msra.mxu0 %v2093
    %2595 = vmatpush.bf16.msra.mxu0 %v2085
    %2596 = vmatpush.bf16.msra.mxu0 %v2077
    %2597 = vmatmul.bf16.gmra.mxu0 %v985
    %v2598 = vpop.f32.mrf.mxu0
    %v2599 = vadd.f32 %v2586, %v2598
    %v2600 = vpop.f32.mrf.mxu0
    %2601 = vdwg.mxu0
    %2602 = vmatpush.bf16.msra.mxu0 %v2197
    %2603 = vmatpush.bf16.msra.mxu0 %v2189
    %2604 = vmatpush.bf16.msra.mxu0 %v2181
    %2605 = vmatpush.bf16.msra.mxu0 %v2173
    %2606 = vmatpush.bf16.msra.mxu0 %v2165
    %2607 = vmatpush.bf16.msra.mxu0 %v2157
    %2608 = vmatpush.bf16.msra.mxu0 %v2149
    %2609 = vmatpush.bf16.msra.mxu0 %v2141
    %2610 = vmatmul.bf16.gmra.mxu0 %v986
    %v2611 = vpop.f32.mrf.mxu0
    %v2612 = vadd.f32 %v2599, %v2611
    %v2613 = vpop.f32.mrf.mxu0
    %2614 = vdwg.mxu0
    %2615 = vmatpush.bf16.msra.mxu0 %v2261
    %2616 = vmatpush.bf16.msra.mxu0 %v2253
    %2617 = vmatpush.bf16.msra.mxu0 %v2245
    %2618 = vmatpush.bf16.msra.mxu0 %v2237
    %2619 = vmatpush.bf16.msra.mxu0 %v2229
    %2620 = vmatpush.bf16.msra.mxu0 %v2221
    %2621 = vmatpush.bf16.msra.mxu0 %v2213
    %2622 = vmatpush.bf16.msra.mxu0 %v2205
    %2623 = vmatmul.bf16.gmra.mxu0 %v987
    %v2624 = vpop.f32.mrf.mxu0
    %v2625 = vadd.f32 %v2612, %v2624
    %v2626 = vpop.f32.mrf.mxu0
    %2627 = vdwg.mxu0
    %2628 = vmatpush.bf16.msra.mxu0 %v2070
    %2629 = vmatpush.bf16.msra.mxu0 %v2062
    %2630 = vmatpush.bf16.msra.mxu0 %v2054
    %2631 = vmatpush.bf16.msra.mxu0 %v2046
    %2632 = vmatpush.bf16.msra.mxu0 %v2038
    %2633 = vmatpush.bf16.msra.mxu0 %v2030
    %2634 = vmatpush.bf16.msra.mxu0 %v2022
    %2635 = vmatpush.bf16.msra.mxu0 %v2014
    %2636 = vmatmul.bf16.gmra.mxu0 %v984
    %v2637 = vpop.f32.mrf.mxu0
    %v2638 = vadd.f32 0.0, %v2637
    %v2639 = vpop.f32.mrf.mxu0
    %2640 = vdwg.mxu0
    %2641 = vmatpush.bf16.msra.mxu0 %v2134
    %2642 = vmatpush.bf16.msra.mxu0 %v2126
    %2643 = vmatpush.bf16.msra.mxu0 %v2118
    %2644 = vmatpush.bf16.msra.mxu0 %v2110
    %2645 = vmatpush.bf16.msra.mxu0 %v2102
    %2646 = vmatpush.bf16.msra.mxu0 %v2094
    %2647 = vmatpush.bf16.msra.mxu0 %v2086
    %2648 = vmatpush.bf16.msra.mxu0 %v2078
    %2649 = vmatmul.bf16.gmra.mxu0 %v985
    %v2650 = vpop.f32.mrf.mxu0
    %v2651 = vadd.f32 %v2638, %v2650
    %v2652 = vpop.f32.mrf.mxu0
    %2653 = vdwg.mxu0
    %2654 = vmatpush.bf16.msra.mxu0 %v2198
    %2655 = vmatpush.bf16.msra.mxu0 %v2190
    %2656 = vmatpush.bf16.msra.mxu0 %v2182
    %2657 = vmatpush.bf16.msra.mxu0 %v2174
    %2658 = vmatpush.bf16.msra.mxu0 %v2166
    %2659 = vmatpush.bf16.msra.mxu0 %v2158
    %2660 = vmatpush.bf16.msra.mxu0 %v2150
    %2661 = vmatpush.bf16.msra.mxu0 %v2142
    %2662 = vmatmul.bf16.gmra.mxu0 %v986
    %v2663 = vpop.f32.mrf.mxu0
    %v2664 = vadd.f32 %v2651, %v2663
    %v2665 = vpop.f32.mrf.mxu0
    %2666 = vdwg.mxu0
    %2667 = vmatpush.bf16.msra.mxu0 %v2262
    %2668 = vmatpush.bf16.msra.mxu0 %v2254
    %2669 = vmatpush.bf16.msra.mxu0 %v2246
    %2670 = vmatpush.bf16.msra.mxu0 %v2238
    %2671 = vmatpush.bf16.msra.mxu0 %v2230
    %2672 = vmatpush.bf16.msra.mxu0 %v2222
    %2673 = vmatpush.bf16.msra.mxu0 %v2214
    %2674 = vmatpush.bf16.msra.mxu0 %v2206
    %2675 = vmatmul.bf16.gmra.mxu0 %v987
    %v2676 = vpop.f32.mrf.mxu0
    %v2677 = vadd.f32 %v2664, %v2676
    %v2678 = vpop.f32.mrf.mxu0
    %2679 = vdwg.mxu0
    %2680 = vmatpush.bf16.msra.mxu0 %v2071
    %2681 = vmatpush.bf16.msra.mxu0 %v2063
    %2682 = vmatpush.bf16.msra.mxu0 %v2055
    %2683 = vmatpush.bf16.msra.mxu0 %v2047
    %2684 = vmatpush.bf16.msra.mxu0 %v2039
    %2685 = vmatpush.bf16.msra.mxu0 %v2031
    %2686 = vmatpush.bf16.msra.mxu0 %v2023
    %2687 = vmatpush.bf16.msra.mxu0 %v2015
    %2688 = vmatmul.bf16.gmra.mxu0 %v984
    %v2689 = vpop.f32.mrf.mxu0
    %v2690 = vadd.f32 0.0, %v2689
    %v2691 = vpop.f32.mrf.mxu0
    %2692 = vdwg.mxu0
    %2693 = vmatpush.bf16.msra.mxu0 %v2135
    %2694 = vmatpush.bf16.msra.mxu0 %v2127
    %2695 = vmatpush.bf16.msra.mxu0 %v2119
    %2696 = vmatpush.bf16.msra.mxu0 %v2111
    %2697 = vmatpush.bf16.msra.mxu0 %v2103
    %2698 = vmatpush.bf16.msra.mxu0 %v2095
    %2699 = vmatpush.bf16.msra.mxu0 %v2087
    %2700 = vmatpush.bf16.msra.mxu0 %v2079
    %2701 = vmatmul.bf16.gmra.mxu0 %v985
    %v2702 = vpop.f32.mrf.mxu0
    %v2703 = vadd.f32 %v2690, %v2702
    %v2704 = vpop.f32.mrf.mxu0
    %2705 = vdwg.mxu0
    %2706 = vmatpush.bf16.msra.mxu0 %v2199
    %2707 = vmatpush.bf16.msra.mxu0 %v2191
    %2708 = vmatpush.bf16.msra.mxu0 %v2183
    %2709 = vmatpush.bf16.msra.mxu0 %v2175
    %2710 = vmatpush.bf16.msra.mxu0 %v2167
    %2711 = vmatpush.bf16.msra.mxu0 %v2159
    %2712 = vmatpush.bf16.msra.mxu0 %v2151
    %2713 = vmatpush.bf16.msra.mxu0 %v2143
    %2714 = vmatmul.bf16.gmra.mxu0 %v986
    %v2715 = vpop.f32.mrf.mxu0
    %v2716 = vadd.f32 %v2703, %v2715
    %v2717 = vpop.f32.mrf.mxu0
    %2718 = vdwg.mxu0
    %2719 = vmatpush.bf16.msra.mxu0 %v2263
    %2720 = vmatpush.bf16.msra.mxu0 %v2255
    %2721 = vmatpush.bf16.msra.mxu0 %v2247
    %2722 = vmatpush.bf16.msra.mxu0 %v2239
    %2723 = vmatpush.bf16.msra.mxu0 %v2231
    %2724 = vmatpush.bf16.msra.mxu0 %v2223
    %2725 = vmatpush.bf16.msra.mxu0 %v2215
    %2726 = vmatpush.bf16.msra.mxu0 %v2207
    %2727 = vmatmul.bf16.gmra.mxu0 %v987
    %v2728 = vpop.f32.mrf.mxu0
    %v2729 = vadd.f32 %v2716, %v2728
    %v2730 = vpop.f32.mrf.mxu0
    %2731 = vdwg.mxu0
    %2732 = vmatpush.bf16.msra.mxu0 %v2072
    %2733 = vmatpush.bf16.msra.mxu0 %v2064
    %2734 = vmatpush.bf16.msra.mxu0 %v2056
    %2735 = vmatpush.bf16.msra.mxu0 %v2048
    %2736 = vmatpush.bf16.msra.mxu0 %v2040
    %2737 = vmatpush.bf16.msra.mxu0 %v2032
    %2738 = vmatpush.bf16.msra.mxu0 %v2024
    %2739 = vmatpush.bf16.msra.mxu0 %v2016
    %2740 = vmatmul.bf16.gmra.mxu0 %v984
    %v2741 = vpop.f32.mrf.mxu0
    %v2742 = vadd.f32 0.0, %v2741
    %v2743 = vpop.f32.mrf.mxu0
    %2744 = vdwg.mxu0
    %2745 = vmatpush.bf16.msra.mxu0 %v2136
    %2746 = vmatpush.bf16.msra.mxu0 %v2128
    %2747 = vmatpush.bf16.msra.mxu0 %v2120
    %2748 = vmatpush.bf16.msra.mxu0 %v2112
    %2749 = vmatpush.bf16.msra.mxu0 %v2104
    %2750 = vmatpush.bf16.msra.mxu0 %v2096
    %2751 = vmatpush.bf16.msra.mxu0 %v2088
    %2752 = vmatpush.bf16.msra.mxu0 %v2080
    %2753 = vmatmul.bf16.gmra.mxu0 %v985
    %v2754 = vpop.f32.mrf.mxu0
    %v2755 = vadd.f32 %v2742, %v2754
    %v2756 = vpop.f32.mrf.mxu0
    %2757 = vdwg.mxu0
    %2758 = vmatpush.bf16.msra.mxu0 %v2200
    %2759 = vmatpush.bf16.msra.mxu0 %v2192
    %2760 = vmatpush.bf16.msra.mxu0 %v2184
    %2761 = vmatpush.bf16.msra.mxu0 %v2176
    %2762 = vmatpush.bf16.msra.mxu0 %v2168
    %2763 = vmatpush.bf16.msra.mxu0 %v2160
    %2764 = vmatpush.bf16.msra.mxu0 %v2152
    %2765 = vmatpush.bf16.msra.mxu0 %v2144
    %2766 = vmatmul.bf16.gmra.mxu0 %v986
    %v2767 = vpop.f32.mrf.mxu0
    %v2768 = vadd.f32 %v2755, %v2767
    %v2769 = vpop.f32.mrf.mxu0
    %2770 = vdwg.mxu0
    %2771 = vmatpush.bf16.msra.mxu0 %v2264
    %2772 = vmatpush.bf16.msra.mxu0 %v2256
    %2773 = vmatpush.bf16.msra.mxu0 %v2248
    %2774 = vmatpush.bf16.msra.mxu0 %v2240
    %2775 = vmatpush.bf16.msra.mxu0 %v2232
    %2776 = vmatpush.bf16.msra.mxu0 %v2224
    %2777 = vmatpush.bf16.msra.mxu0 %v2216
    %2778 = vmatpush.bf16.msra.mxu0 %v2208
    %2779 = vmatmul.bf16.gmra.mxu0 %v987
    %v2780 = vpop.f32.mrf.mxu0
    %v2781 = vadd.f32 %v2768, %v2780
    %v2782 = vpop.f32.mrf.mxu0
    %2783 = vdwg.mxu0
    %2784 = vmatpush.bf16.msra.mxu0 %v2073
    %2785 = vmatpush.bf16.msra.mxu0 %v2065
    %2786 = vmatpush.bf16.msra.mxu0 %v2057
    %2787 = vmatpush.bf16.msra.mxu0 %v2049
    %2788 = vmatpush.bf16.msra.mxu0 %v2041
    %2789 = vmatpush.bf16.msra.mxu0 %v2033
    %2790 = vmatpush.bf16.msra.mxu0 %v2025
    %2791 = vmatpush.bf16.msra.mxu0 %v2017
    %2792 = vmatmul.bf16.gmra.mxu0 %v984
    %v2793 = vpop.f32.mrf.mxu0
    %v2794 = vadd.f32 0.0, %v2793
    %v2795 = vpop.f32.mrf.mxu0
    %2796 = vdwg.mxu0
    %2797 = vmatpush.bf16.msra.mxu0 %v2137
    %2798 = vmatpush.bf16.msra.mxu0 %v2129
    %2799 = vmatpush.bf16.msra.mxu0 %v2121
    %2800 = vmatpush.bf16.msra.mxu0 %v2113
    %2801 = vmatpush.bf16.msra.mxu0 %v2105
    %2802 = vmatpush.bf16.msra.mxu0 %v2097
    %2803 = vmatpush.bf16.msra.mxu0 %v2089
    %2804 = vmatpush.bf16.msra.mxu0 %v2081
    %2805 = vmatmul.bf16.gmra.mxu0 %v985
    %v2806 = vpop.f32.mrf.mxu0
    %v2807 = vadd.f32 %v2794, %v2806
    %v2808 = vpop.f32.mrf.mxu0
    %2809 = vdwg.mxu0
    %2810 = vmatpush.bf16.msra.mxu0 %v2201
    %2811 = vmatpush.bf16.msra.mxu0 %v2193
    %2812 = vmatpush.bf16.msra.mxu0 %v2185
    %2813 = vmatpush.bf16.msra.mxu0 %v2177
    %2814 = vmatpush.bf16.msra.mxu0 %v2169
    %2815 = vmatpush.bf16.msra.mxu0 %v2161
    %2816 = vmatpush.bf16.msra.mxu0 %v2153
    %2817 = vmatpush.bf16.msra.mxu0 %v2145
    %2818 = vmatmul.bf16.gmra.mxu0 %v986
    %v2819 = vpop.f32.mrf.mxu0
    %v2820 = vadd.f32 %v2807, %v2819
    %v2821 = vpop.f32.mrf.mxu0
    %2822 = vdwg.mxu0
    %2823 = vmatpush.bf16.msra.mxu0 %v2265
    %2824 = vmatpush.bf16.msra.mxu0 %v2257
    %2825 = vmatpush.bf16.msra.mxu0 %v2249
    %2826 = vmatpush.bf16.msra.mxu0 %v2241
    %2827 = vmatpush.bf16.msra.mxu0 %v2233
    %2828 = vmatpush.bf16.msra.mxu0 %v2225
    %2829 = vmatpush.bf16.msra.mxu0 %v2217
    %2830 = vmatpush.bf16.msra.mxu0 %v2209
    %2831 = vmatmul.bf16.gmra.mxu0 %v987
    %v2832 = vpop.f32.mrf.mxu0
    %v2833 = vadd.f32 %v2820, %v2832
    %v2834 = vpop.f32.mrf.mxu0
    %2835 = vdwg.mxu0
    %2836 = vmatpush.bf16.msra.mxu0 %v2074
    %2837 = vmatpush.bf16.msra.mxu0 %v2066
    %2838 = vmatpush.bf16.msra.mxu0 %v2058
    %2839 = vmatpush.bf16.msra.mxu0 %v2050
    %2840 = vmatpush.bf16.msra.mxu0 %v2042
    %2841 = vmatpush.bf16.msra.mxu0 %v2034
    %2842 = vmatpush.bf16.msra.mxu0 %v2026
    %2843 = vmatpush.bf16.msra.mxu0 %v2018
    %2844 = vmatmul.bf16.gmra.mxu0 %v984
    %v2845 = vpop.f32.mrf.mxu0
    %v2846 = vadd.f32 0.0, %v2845
    %v2847 = vpop.f32.mrf.mxu0
    %2848 = vdwg.mxu0
    %2849 = vmatpush.bf16.msra.mxu0 %v2138
    %2850 = vmatpush.bf16.msra.mxu0 %v2130
    %2851 = vmatpush.bf16.msra.mxu0 %v2122
    %2852 = vmatpush.bf16.msra.mxu0 %v2114
    %2853 = vmatpush.bf16.msra.mxu0 %v2106
    %2854 = vmatpush.bf16.msra.mxu0 %v2098
    %2855 = vmatpush.bf16.msra.mxu0 %v2090
    %2856 = vmatpush.bf16.msra.mxu0 %v2082
    %2857 = vmatmul.bf16.gmra.mxu0 %v985
    %v2858 = vpop.f32.mrf.mxu0
    %v2859 = vadd.f32 %v2846, %v2858
    %v2860 = vpop.f32.mrf.mxu0
    %2861 = vdwg.mxu0
    %2862 = vmatpush.bf16.msra.mxu0 %v2202
    %2863 = vmatpush.bf16.msra.mxu0 %v2194
    %2864 = vmatpush.bf16.msra.mxu0 %v2186
    %2865 = vmatpush.bf16.msra.mxu0 %v2178
    %2866 = vmatpush.bf16.msra.mxu0 %v2170
    %2867 = vmatpush.bf16.msra.mxu0 %v2162
    %2868 = vmatpush.bf16.msra.mxu0 %v2154
    %2869 = vmatpush.bf16.msra.mxu0 %v2146
    %2870 = vmatmul.bf16.gmra.mxu0 %v986
    %v2871 = vpop.f32.mrf.mxu0
    %v2872 = vadd.f32 %v2859, %v2871
    %v2873 = vpop.f32.mrf.mxu0
    %2874 = vdwg.mxu0
    %2875 = vmatpush.bf16.msra.mxu0 %v2266
    %2876 = vmatpush.bf16.msra.mxu0 %v2258
    %2877 = vmatpush.bf16.msra.mxu0 %v2250
    %2878 = vmatpush.bf16.msra.mxu0 %v2242
    %2879 = vmatpush.bf16.msra.mxu0 %v2234
    %2880 = vmatpush.bf16.msra.mxu0 %v2226
    %2881 = vmatpush.bf16.msra.mxu0 %v2218
    %2882 = vmatpush.bf16.msra.mxu0 %v2210
    %2883 = vmatmul.bf16.gmra.mxu0 %v987
    %v2884 = vpop.f32.mrf.mxu0
    %v2885 = vadd.f32 %v2872, %v2884
    %v2886 = vpop.f32.mrf.mxu0
    %2887 = vdwg.mxu0
    %2888 = vmatpush.bf16.msra.mxu0 %v2075
    %2889 = vmatpush.bf16.msra.mxu0 %v2067
    %2890 = vmatpush.bf16.msra.mxu0 %v2059
    %2891 = vmatpush.bf16.msra.mxu0 %v2051
    %2892 = vmatpush.bf16.msra.mxu0 %v2043
    %2893 = vmatpush.bf16.msra.mxu0 %v2035
    %2894 = vmatpush.bf16.msra.mxu0 %v2027
    %2895 = vmatpush.bf16.msra.mxu0 %v2019
    %2896 = vmatmul.bf16.gmra.mxu0 %v984
    %v2897 = vpop.f32.mrf.mxu0
    %v2898 = vadd.f32 0.0, %v2897
    %v2899 = vpop.f32.mrf.mxu0
    %2900 = vdwg.mxu0
    %2901 = vmatpush.bf16.msra.mxu0 %v2139
    %2902 = vmatpush.bf16.msra.mxu0 %v2131
    %2903 = vmatpush.bf16.msra.mxu0 %v2123
    %2904 = vmatpush.bf16.msra.mxu0 %v2115
    %2905 = vmatpush.bf16.msra.mxu0 %v2107
    %2906 = vmatpush.bf16.msra.mxu0 %v2099
    %2907 = vmatpush.bf16.msra.mxu0 %v2091
    %2908 = vmatpush.bf16.msra.mxu0 %v2083
    %2909 = vmatmul.bf16.gmra.mxu0 %v985
    %v2910 = vpop.f32.mrf.mxu0
    %v2911 = vadd.f32 %v2898, %v2910
    %v2912 = vpop.f32.mrf.mxu0
    %2913 = vdwg.mxu0
    %2914 = vmatpush.bf16.msra.mxu0 %v2203
    %2915 = vmatpush.bf16.msra.mxu0 %v2195
    %2916 = vmatpush.bf16.msra.mxu0 %v2187
    %2917 = vmatpush.bf16.msra.mxu0 %v2179
    %2918 = vmatpush.bf16.msra.mxu0 %v2171
    %2919 = vmatpush.bf16.msra.mxu0 %v2163
    %2920 = vmatpush.bf16.msra.mxu0 %v2155
    %2921 = vmatpush.bf16.msra.mxu0 %v2147
    %2922 = vmatmul.bf16.gmra.mxu0 %v986
    %v2923 = vpop.f32.mrf.mxu0
    %v2924 = vadd.f32 %v2911, %v2923
    %v2925 = vpop.f32.mrf.mxu0
    %2926 = vdwg.mxu0
    %2927 = vmatpush.bf16.msra.mxu0 %v2267
    %2928 = vmatpush.bf16.msra.mxu0 %v2259
    %2929 = vmatpush.bf16.msra.mxu0 %v2251
    %2930 = vmatpush.bf16.msra.mxu0 %v2243
    %2931 = vmatpush.bf16.msra.mxu0 %v2235
    %2932 = vmatpush.bf16.msra.mxu0 %v2227
    %2933 = vmatpush.bf16.msra.mxu0 %v2219
    %2934 = vmatpush.bf16.msra.mxu0 %v2211
    %2935 = vmatmul.bf16.gmra.mxu0 %v987
    %v2936 = vpop.f32.mrf.mxu0
    %v2937 = vadd.f32 %v2924, %v2936
    %v2938 = vpop.f32.mrf.mxu0
    %2939 = vdwg.mxu0
    %v2940 = vrot.slane %v2573, 4
    %v2941 = vadd.f32 %v2573, %v2940
    %v2942 = vrot.slane %v2941, 2
    %v2943 = vadd.f32 %v2941, %v2942
    %v2944 = vrot.slane %v2943, 1
    %v2945 = vadd.f32 %v2943, %v2944
    %v2946 = vrot.slane %v2625, 4
    %v2947 = vadd.f32 %v2625, %v2946
    %v2948 = vrot.slane %v2947, 2
    %v2949 = vadd.f32 %v2947, %v2948
    %v2950 = vrot.slane %v2949, 1
    %v2951 = vadd.f32 %v2949, %v2950
    %v2952 = vrot.slane %v2677, 4
    %v2953 = vadd.f32 %v2677, %v2952
    %v2954 = vrot.slane %v2953, 2
    %v2955 = vadd.f32 %v2953, %v2954
    %v2956 = vrot.slane %v2955, 1
    %v2957 = vadd.f32 %v2955, %v2956
    %v2958 = vrot.slane %v2729, 4
    %v2959 = vadd.f32 %v2729, %v2958
    %v2960 = vrot.slane %v2959, 2
    %v2961 = vadd.f32 %v2959, %v2960
    %v2962 = vrot.slane %v2961, 1
    %v2963 = vadd.f32 %v2961, %v2962
    %v2964 = vrot.slane %v2781, 4
    %v2965 = vadd.f32 %v2781, %v2964
    %v2966 = vrot.slane %v2965, 2
    %v2967 = vadd.f32 %v2965, %v2966
    %v2968 = vrot.slane %v2967, 1
    %v2969 = vadd.f32 %v2967, %v2968
    %v2970 = vrot.slane %v2833, 4
    %v2971 = vadd.f32 %v2833, %v2970
    %v2972 = vrot.slane %v2971, 2
    %v2973 = vadd.f32 %v2971, %v2972
    %v2974 = vrot.slane %v2973, 1
    %v2975 = vadd.f32 %v2973, %v2974
    %v2976 = vrot.slane %v2885, 4
    %v2977 = vadd.f32 %v2885, %v2976
    %v2978 = vrot.slane %v2977, 2
    %v2979 = vadd.f32 %v2977, %v2978
    %v2980 = vrot.slane %v2979, 1
    %v2981 = vadd.f32 %v2979, %v2980
    %v2982 = vrot.slane %v2937, 4
    %v2983 = vadd.f32 %v2937, %v2982
    %v2984 = vrot.slane %v2983, 2
    %v2985 = vadd.f32 %v2983, %v2984
    %v2986 = vrot.slane %v2985, 1
    %v2987 = vadd.f32 %v2985, %v2986
    %v2988 = vmul.f32 %v2945, %v248
    %v2989 = vmul.f32 %v2951, %v248
    %v2990 = vmul.f32 %v2957, %v248
    %v2991 = vmul.f32 %v2963, %v248
    %v2992 = vmul.f32 %v2969, %v248
    %v2993 = vmul.f32 %v2975, %v248
    %v2994 = vmul.f32 %v2981, %v248
    %v2995 = vmul.f32 %v2987, %v248
    %v2996 = vmul.f32 %v2573, %v2573
    %v2997 = vmul.f32 %v2625, %v2625
    %v2998 = vmul.f32 %v2677, %v2677
    %v2999 = vmul.f32 %v2729, %v2729
    %v3000 = vmul.f32 %v2781, %v2781
    %v3001 = vmul.f32 %v2833, %v2833
    %v3002 = vmul.f32 %v2885, %v2885
    %v3003 = vmul.f32 %v2937, %v2937
    %v3004 = vrot.slane %v2996, 4
    %v3005 = vadd.f32 %v2996, %v3004
    %v3006 = vrot.slane %v3005, 2
    %v3007 = vadd.f32 %v3005, %v3006
    %v3008 = vrot.slane %v3007, 1
    %v3009 = vadd.f32 %v3007, %v3008
    %v3010 = vrot.slane %v2997, 4
    %v3011 = vadd.f32 %v2997, %v3010
    %v3012 = vrot.slane %v3011, 2
    %v3013 = vadd.f32 %v3011, %v3012
    %v3014 = vrot.slane %v3013, 1
    %v3015 = vadd.f32 %v3013, %v3014
    %v3016 = vrot.slane %v2998, 4
    %v3017 = vadd.f32 %v2998, %v3016
    %v3018 = vrot.slane %v3017, 2
    %v3019 = vadd.f32 %v3017, %v3018
    %v3020 = vrot.slane %v3019, 1
    %v3021 = vadd.f32 %v3019, %v3020
    %v3022 = vrot.slane %v2999, 4
    %v3023 = vadd.f32 %v2999, %v3022
    %v3024 = vrot.slane %v3023, 2
    %v3025 = vadd.f32 %v3023, %v3024
    %v3026 = vrot.slane %v3025, 1
    %v3027 = vadd.f32 %v3025, %v3026
    %v3028 = vrot.slane %v3000, 4
    %v3029 = vadd.f32 %v3000, %v3028
    %v3030 = vrot.slane %v3029, 2
    %v3031 = vadd.f32 %v3029, %v3030
    %v3032 = vrot.slane %v3031, 1
    %v3033 = vadd.f32 %v3031, %v3032
    %v3034 = vrot.slane %v3001, 4
    %v3035 = vadd.f32 %v3001, %v3034
    %v3036 = vrot.slane %v3035, 2
    %v3037 = vadd.f32 %v3035, %v3036
    %v3038 = vrot.slane %v3037, 1
    %v3039 = vadd.f32 %v3037, %v3038
    %v3040 = vrot.slane %v3002, 4
    %v3041 = vadd.f32 %v3002, %v3040
    %v3042 = vrot.slane %v3041, 2
    %v3043 = vadd.f32 %v3041, %v3042
    %v3044 = vrot.slane %v3043, 1
    %v3045 = vadd.f32 %v3043, %v3044
    %v3046 = vrot.slane %v3003, 4
    %v3047 = vadd.f32 %v3003, %v3046
    %v3048 = vrot.slane %v3047, 2
    %v3049 = vadd.f32 %v3047, %v3048
    %v3050 = vrot.slane %v3049, 1
    %v3051 = vadd.f32 %v3049, %v3050
    %v3052 = vmul.f32 %v3009, %v248
    %v3053 = vmul.f32 %v3015, %v248
    %v3054 = vmul.f32 %v3021, %v248
    %v3055 = vmul.f32 %v3027, %v248
    %v3056 = vmul.f32 %v3033, %v248
    %v3057 = vmul.f32 %v3039, %v248
    %v3058 = vmul.f32 %v3045, %v248
    %v3059 = vmul.f32 %v3051, %v248
    %v3060 = vmul.f32 %v2988, %v2988
    %v3061 = vmul.f32 %v2989, %v2989
    %v3062 = vmul.f32 %v2990, %v2990
    %v3063 = vmul.f32 %v2991, %v2991
    %v3064 = vmul.f32 %v2992, %v2992
    %v3065 = vmul.f32 %v2993, %v2993
    %v3066 = vmul.f32 %v2994, %v2994
    %v3067 = vmul.f32 %v2995, %v2995
    %v3068 = vsub.f32 %v3052, %v3060
    %v3069 = vsub.f32 %v3053, %v3061
    %v3070 = vsub.f32 %v3054, %v3062
    %v3071 = vsub.f32 %v3055, %v3063
    %v3072 = vsub.f32 %v3056, %v3064
    %v3073 = vsub.f32 %v3057, %v3065
    %v3074 = vsub.f32 %v3058, %v3066
    %v3075 = vsub.f32 %v3059, %v3067
    %v3076 = vld [vmem:[%s10] sm:$0xff]
    %v3077 = vadd.f32 %v3068, 0.8
    %v3078 = vadd.f32 %v3069, 0.8
    %v3079 = vadd.f32 %v3070, 0.8
    %v3080 = vadd.f32 %v3071, 0.8
    %v3081 = vadd.f32 %v3072, 0.8
    %v3082 = vadd.f32 %v3073, 0.8
    %v3083 = vadd.f32 %v3074, 0.8
    %v3084 = vadd.f32 %v3075, 0.8
    %v3085 = vrsqrt.pop %v3077
    %v3086 = vmul.f32 %v3085, %v3077
    %v3087 = vmul.f32 %v3086, %v3085
    %v3088 = vmul.f32 0.5, %v3087
    %v3089 = vsub.f32 1.5, %v3088
    %v3090 = vmul.f32 %v3085, %v3089
    %vm3091 = vweird.f32 %v3077
    %vm3092 = vweird.f32 %v3085
    %vm3093 = vmor %vm3091, %vm3092
    %v3094 = vsel %vm3093, %v3085, %v3090
    %v3095 = vrsqrt.pop %v3078
    %v3096 = vmul.f32 %v3095, %v3078
    %v3097 = vmul.f32 %v3096, %v3095
    %v3098 = vmul.f32 0.5, %v3097
    %v3099 = vsub.f32 1.5, %v3098
    %v3100 = vmul.f32 %v3095, %v3099
    %vm3101 = vweird.f32 %v3078
    %vm3102 = vweird.f32 %v3095
    %vm3103 = vmor %vm3101, %vm3102
    %v3104 = vsel %vm3103, %v3095, %v3100
    %v3105 = vrsqrt.pop %v3079
    %v3106 = vmul.f32 %v3105, %v3079
    %v3107 = vmul.f32 %v3106, %v3105
    %v3108 = vmul.f32 0.5, %v3107
    %v3109 = vsub.f32 1.5, %v3108
    %v3110 = vmul.f32 %v3105, %v3109
    %vm3111 = vweird.f32 %v3079
    %vm3112 = vweird.f32 %v3105
    %vm3113 = vmor %vm3111, %vm3112
    %v3114 = vsel %vm3113, %v3105, %v3110
    %v3115 = vrsqrt.pop %v3080
    %v3116 = vmul.f32 %v3115, %v3080
    %v3117 = vmul.f32 %v3116, %v3115
    %v3118 = vmul.f32 0.5, %v3117
    %v3119 = vsub.f32 1.5, %v3118
    %v3120 = vmul.f32 %v3115, %v3119
    %vm3121 = vweird.f32 %v3080
    %vm3122 = vweird.f32 %v3115
    %vm3123 = vmor %vm3121, %vm3122
    %v3124 = vsel %vm3123, %v3115, %v3120
    %v3125 = vrsqrt.pop %v3081
    %v3126 = vmul.f32 %v3125, %v3081
    %v3127 = vmul.f32 %v3126, %v3125
    %v3128 = vmul.f32 0.5, %v3127
    %v3129 = vsub.f32 1.5, %v3128
    %v3130 = vmul.f32 %v3125, %v3129
    %vm3131 = vweird.f32 %v3081
    %vm3132 = vweird.f32 %v3125
    %vm3133 = vmor %vm3131, %vm3132
    %v3134 = vsel %vm3133, %v3125, %v3130
    %v3135 = vrsqrt.pop %v3082
    %v3136 = vmul.f32 %v3135, %v3082
    %v3137 = vmul.f32 %v3136, %v3135
    %v3138 = vmul.f32 0.5, %v3137
    %v3139 = vsub.f32 1.5, %v3138
    %v3140 = vmul.f32 %v3135, %v3139
    %vm3141 = vweird.f32 %v3082
    %vm3142 = vweird.f32 %v3135
    %vm3143 = vmor %vm3141, %vm3142
    %v3144 = vsel %vm3143, %v3135, %v3140
    %v3145 = vrsqrt.pop %v3083
    %v3146 = vmul.f32 %v3145, %v3083
    %v3147 = vmul.f32 %v3146, %v3145
    %v3148 = vmul.f32 0.5, %v3147
    %v3149 = vsub.f32 1.5, %v3148
    %v3150 = vmul.f32 %v3145, %v3149
    %vm3151 = vweird.f32 %v3083
    %vm3152 = vweird.f32 %v3145
    %vm3153 = vmor %vm3151, %vm3152
    %v3154 = vsel %vm3153, %v3145, %v3150
    %v3155 = vrsqrt.pop %v3084
    %v3156 = vmul.f32 %v3155, %v3084
    %v3157 = vmul.f32 %v3156, %v3155
    %v3158 = vmul.f32 0.5, %v3157
    %v3159 = vsub.f32 1.5, %v3158
    %v3160 = vmul.f32 %v3155, %v3159
    %vm3161 = vweird.f32 %v3084
    %vm3162 = vweird.f32 %v3155
    %vm3163 = vmor %vm3161, %vm3162
    %v3164 = vsel %vm3163, %v3155, %v3160
    %v3173 = vrot.slane %v3104, 7
    %v3174 = vrot.slane %v3114, 6
    %v3175 = vrot.slane %v3124, 5
    %v3176 = vrot.slane %v3134, 4
    %v3177 = vrot.slane %v3144, 3
    %v3178 = vrot.slane %v3154, 2
    %v3179 = vrot.slane %v3164, 1
    %v3180 = vsel %vm297, %v3094, %v3173
    %v3181 = vsel %vm935, %v3174, %v3175
    %v3182 = vsel %vm937, %v3180, %v3181
    %vm3183 = vcmask 1044484
    %v3184 = vsel %vm3183, %v3176, %v3177
    %vm3185 = vcmask 1046534
    %v3186 = vsel %vm3185, %v3178, %v3179
    %vm3187 = vcmask 1045508
    %v3188 = vsel %vm3187, %v3184, %v3186
    %vm3189 = vcmask 1043456
    %v3190 = vsel %vm3189, %v3182, %v3188
    %v3192 = vmul.f32 %v3076, %v3190
    %v3193 = vsub.f32 %v2573, %v2988
    %v3194 = vsub.f32 %v2625, %v2989
    %v3195 = vsub.f32 %v2677, %v2990
    %v3196 = vsub.f32 %v2729, %v2991
    %v3197 = vsub.f32 %v2781, %v2992
    %v3198 = vsub.f32 %v2833, %v2993
    %v3199 = vsub.f32 %v2885, %v2994
    %v3200 = vsub.f32 %v2937, %v2995
    %v3202 = vperm.slane %v3192, 0
    %v3203 = vperm.slane %v3192, 1
    %v3204 = vperm.slane %v3192, 2
    %v3205 = vperm.slane %v3192, 3
    %v3206 = vperm.slane %v3192, 4
    %v3207 = vperm.slane %v3192, 5
    %v3208 = vperm.slane %v3192, 6
    %v3209 = vperm.slane %v3192, 7
    %v3218 = vmul.f32 %v3193, %v3202
    %v3219 = vmul.f32 %v3194, %v3203
    %v3220 = vmul.f32 %v3195, %v3204
    %v3221 = vmul.f32 %v3196, %v3205
    %v3222 = vmul.f32 %v3197, %v3206
    %v3223 = vmul.f32 %v3198, %v3207
    %v3224 = vmul.f32 %v3199, %v3208
    %v3225 = vmul.f32 %v3200, %v3209
    %v3226 = vld [vmem:[%s11] sm:$0xff]
    %v3228 = vperm.slane %v3226, 0
    %v3229 = vperm.slane %v3226, 1
    %v3230 = vperm.slane %v3226, 2
    %v3231 = vperm.slane %v3226, 3
    %v3232 = vperm.slane %v3226, 4
    %v3233 = vperm.slane %v3226, 5
    %v3234 = vperm.slane %v3226, 6
    %v3235 = vperm.slane %v3226, 7
    %v3244 = vadd.f32 %v3218, %v3228
    %v3245 = vadd.f32 %v3219, %v3229
    %v3246 = vadd.f32 %v3220, %v3230
    %v3247 = vadd.f32 %v3221, %v3231
    %v3248 = vadd.f32 %v3222, %v3232
    %v3249 = vadd.f32 %v3223, %v3233
    %v3250 = vadd.f32 %v3224, %v3234
    %v3251 = vadd.f32 %v3225, %v3235
    %vm3252 = vcmp.gt.f32.partialorder %v3244, 0.0
    %vm3253 = vcmp.gt.f32.partialorder %v3245, 0.0
    %vm3254 = vcmp.gt.f32.partialorder %v3246, 0.0
    %vm3255 = vcmp.gt.f32.partialorder %v3247, 0.0
    %vm3256 = vcmp.gt.f32.partialorder %v3248, 0.0
    %vm3257 = vcmp.gt.f32.partialorder %v3249, 0.0
    %vm3258 = vcmp.gt.f32.partialorder %v3250, 0.0
    %vm3259 = vcmp.gt.f32.partialorder %v3251, 0.0
    %v3260 = vmul.f32 %v3244, 0.2
    %v3261 = vmul.f32 %v3245, 0.2
    %v3262 = vmul.f32 %v3246, 0.2
    %v3263 = vmul.f32 %v3247, 0.2
    %v3264 = vmul.f32 %v3248, 0.2
    %v3265 = vmul.f32 %v3249, 0.2
    %v3266 = vmul.f32 %v3250, 0.2
    %v3267 = vmul.f32 %v3251, 0.2
    %v3268 = vsel %vm3252, %v3244, %v3260
    %v3269 = vsel %vm3253, %v3245, %v3261
    %v3270 = vsel %vm3254, %v3246, %v3262
    %v3271 = vsel %vm3255, %v3247, %v3263
    %v3272 = vsel %vm3256, %v3248, %v3264
    %v3273 = vsel %vm3257, %v3249, %v3265
    %v3274 = vsel %vm3258, %v3250, %v3266
    %v3275 = vsel %vm3259, %v3251, %v3267
    %v3276 = vpack.c.bf16 %v3268, %v3268
    %v3277 = vpack.c.bf16 %v3269, %v3269
    %v3278 = vpack.c.bf16 %v3270, %v3270
    %v3279 = vpack.c.bf16 %v3271, %v3271
    %v3280 = vpack.c.bf16 %v3272, %v3272
    %v3281 = vpack.c.bf16 %v3273, %v3273
    %v3282 = vpack.c.bf16 %v3274, %v3274
    %v3283 = vpack.c.bf16 %v3275, %v3275
    %v3284 = vld [vmem:[%s12] sm:$0xf]
    %v3285 = vld [vmem:[%s12 + $0x4] sm:$0xf]
    %v3286 = vld [vmem:[%s12 + $0x8] sm:$0xf]
    %v3287 = vld [vmem:[%s12 + $0xc] sm:$0xf]
    %v3288 = vld [vmem:[%s12 + $0x10] sm:$0xf]
    %v3289 = vld [vmem:[%s12 + $0x14] sm:$0xf]
    %v3290 = vld [vmem:[%s12 + $0x18] sm:$0xf]
    %v3291 = vld [vmem:[%s12 + $0x1c] sm:$0xf]
    %v3292 = vld [vmem:[%s12 + $0x20] sm:$0xf]
    %v3293 = vld [vmem:[%s12 + $0x24] sm:$0xf]
    %v3294 = vld [vmem:[%s12 + $0x28] sm:$0xf]
    %v3295 = vld [vmem:[%s12 + $0x2c] sm:$0xf]
    %v3296 = vld [vmem:[%s12 + $0x30] sm:$0xf]
    %v3297 = vld [vmem:[%s12 + $0x34] sm:$0xf]
    %v3298 = vld [vmem:[%s12 + $0x38] sm:$0xf]
    %v3299 = vld [vmem:[%s12 + $0x3c] sm:$0xf]
    %v3300 = vld [vmem:[%s12 + $0x40] sm:$0xf]
    %v3301 = vld [vmem:[%s12 + $0x44] sm:$0xf]
    %v3302 = vld [vmem:[%s12 + $0x48] sm:$0xf]
    %v3303 = vld [vmem:[%s12 + $0x4c] sm:$0xf]
    %v3304 = vld [vmem:[%s12 + $0x50] sm:$0xf]
    %v3305 = vld [vmem:[%s12 + $0x54] sm:$0xf]
    %v3306 = vld [vmem:[%s12 + $0x58] sm:$0xf]
    %v3307 = vld [vmem:[%s12 + $0x5c] sm:$0xf]
    %v3308 = vld [vmem:[%s12 + $0x60] sm:$0xf]
    %v3309 = vld [vmem:[%s12 + $0x64] sm:$0xf]
    %v3310 = vld [vmem:[%s12 + $0x68] sm:$0xf]
    %v3311 = vld [vmem:[%s12 + $0x6c] sm:$0xf]
    %v3312 = vld [vmem:[%s12 + $0x70] sm:$0xf]
    %v3313 = vld [vmem:[%s12 + $0x74] sm:$0xf]
    %v3314 = vld [vmem:[%s12 + $0x78] sm:$0xf]
    %v3315 = vld [vmem:[%s12 + $0x7c] sm:$0xf]
    %v3316 = vld [vmem:[%s12 + $0x80] sm:$0xf]
    %v3317 = vld [vmem:[%s12 + $0x84] sm:$0xf]
    %v3318 = vld [vmem:[%s12 + $0x88] sm:$0xf]
    %v3319 = vld [vmem:[%s12 + $0x8c] sm:$0xf]
    %v3320 = vld [vmem:[%s12 + $0x90] sm:$0xf]
    %v3321 = vld [vmem:[%s12 + $0x94] sm:$0xf]
    %v3322 = vld [vmem:[%s12 + $0x98] sm:$0xf]
    %v3323 = vld [vmem:[%s12 + $0x9c] sm:$0xf]
    %v3324 = vld [vmem:[%s12 + $0xa0] sm:$0xf]
    %v3325 = vld [vmem:[%s12 + $0xa4] sm:$0xf]
    %v3326 = vld [vmem:[%s12 + $0xa8] sm:$0xf]
    %v3327 = vld [vmem:[%s12 + $0xac] sm:$0xf]
    %v3328 = vld [vmem:[%s12 + $0xb0] sm:$0xf]
    %v3329 = vld [vmem:[%s12 + $0xb4] sm:$0xf]
    %v3330 = vld [vmem:[%s12 + $0xb8] sm:$0xf]
    %v3331 = vld [vmem:[%s12 + $0xbc] sm:$0xf]
    %v3332 = vld [vmem:[%s12 + $0xc0] sm:$0xf]
    %v3333 = vld [vmem:[%s12 + $0xc4] sm:$0xf]
    %v3334 = vld [vmem:[%s12 + $0xc8] sm:$0xf]
    %v3335 = vld [vmem:[%s12 + $0xcc] sm:$0xf]
    %v3336 = vld [vmem:[%s12 + $0xd0] sm:$0xf]
    %v3337 = vld [vmem:[%s12 + $0xd4] sm:$0xf]
    %v3338 = vld [vmem:[%s12 + $0xd8] sm:$0xf]
    %v3339 = vld [vmem:[%s12 + $0xdc] sm:$0xf]
    %v3340 = vld [vmem:[%s12 + $0xe0] sm:$0xf]
    %v3341 = vld [vmem:[%s12 + $0xe4] sm:$0xf]
    %v3342 = vld [vmem:[%s12 + $0xe8] sm:$0xf]
    %v3343 = vld [vmem:[%s12 + $0xec] sm:$0xf]
    %v3344 = vld [vmem:[%s12 + $0xf0] sm:$0xf]
    %v3345 = vld [vmem:[%s12 + $0xf4] sm:$0xf]
    %v3346 = vld [vmem:[%s12 + $0xf8] sm:$0xf]
    %v3347 = vld [vmem:[%s12 + $0xfc] sm:$0xf]
    %v3348 = vld [vmem:[%s12 + $0x100] sm:$0xf]
    %v3349 = vld [vmem:[%s12 + $0x104] sm:$0xf]
    %v3350 = vld [vmem:[%s12 + $0x108] sm:$0xf]
    %v3351 = vld [vmem:[%s12 + $0x10c] sm:$0xf]
    %v3352 = vld [vmem:[%s12 + $0x110] sm:$0xf]
    %v3353 = vld [vmem:[%s12 + $0x114] sm:$0xf]
    %v3354 = vld [vmem:[%s12 + $0x118] sm:$0xf]
    %v3355 = vld [vmem:[%s12 + $0x11c] sm:$0xf]
    %v3356 = vld [vmem:[%s12 + $0x120] sm:$0xf]
    %v3357 = vld [vmem:[%s12 + $0x124] sm:$0xf]
    %v3358 = vld [vmem:[%s12 + $0x128] sm:$0xf]
    %v3359 = vld [vmem:[%s12 + $0x12c] sm:$0xf]
    %v3360 = vld [vmem:[%s12 + $0x130] sm:$0xf]
    %v3361 = vld [vmem:[%s12 + $0x134] sm:$0xf]
    %v3362 = vld [vmem:[%s12 + $0x138] sm:$0xf]
    %v3363 = vld [vmem:[%s12 + $0x13c] sm:$0xf]
    %v3364 = vld [vmem:[%s12 + $0x140] sm:$0xf]
    %v3365 = vld [vmem:[%s12 + $0x144] sm:$0xf]
    %v3366 = vld [vmem:[%s12 + $0x148] sm:$0xf]
    %v3367 = vld [vmem:[%s12 + $0x14c] sm:$0xf]
    %v3368 = vld [vmem:[%s12 + $0x150] sm:$0xf]
    %v3369 = vld [vmem:[%s12 + $0x154] sm:$0xf]
    %v3370 = vld [vmem:[%s12 + $0x158] sm:$0xf]
    %v3371 = vld [vmem:[%s12 + $0x15c] sm:$0xf]
    %v3372 = vld [vmem:[%s12 + $0x160] sm:$0xf]
    %v3373 = vld [vmem:[%s12 + $0x164] sm:$0xf]
    %v3374 = vld [vmem:[%s12 + $0x168] sm:$0xf]
    %v3375 = vld [vmem:[%s12 + $0x16c] sm:$0xf]
    %v3376 = vld [vmem:[%s12 + $0x170] sm:$0xf]
    %v3377 = vld [vmem:[%s12 + $0x174] sm:$0xf]
    %v3378 = vld [vmem:[%s12 + $0x178] sm:$0xf]
    %v3379 = vld [vmem:[%s12 + $0x17c] sm:$0xf]
    %v3380 = vld [vmem:[%s12 + $0x180] sm:$0xf]
    %v3381 = vld [vmem:[%s12 + $0x184] sm:$0xf]
    %v3382 = vld [vmem:[%s12 + $0x188] sm:$0xf]
    %v3383 = vld [vmem:[%s12 + $0x18c] sm:$0xf]
    %v3384 = vld [vmem:[%s12 + $0x190] sm:$0xf]
    %v3385 = vld [vmem:[%s12 + $0x194] sm:$0xf]
    %v3386 = vld [vmem:[%s12 + $0x198] sm:$0xf]
    %v3387 = vld [vmem:[%s12 + $0x19c] sm:$0xf]
    %v3388 = vld [vmem:[%s12 + $0x1a0] sm:$0xf]
    %v3389 = vld [vmem:[%s12 + $0x1a4] sm:$0xf]
    %v3390 = vld [vmem:[%s12 + $0x1a8] sm:$0xf]
    %v3391 = vld [vmem:[%s12 + $0x1ac] sm:$0xf]
    %v3392 = vld [vmem:[%s12 + $0x1b0] sm:$0xf]
    %v3393 = vld [vmem:[%s12 + $0x1b4] sm:$0xf]
    %v3394 = vld [vmem:[%s12 + $0x1b8] sm:$0xf]
    %v3395 = vld [vmem:[%s12 + $0x1bc] sm:$0xf]
    %v3396 = vld [vmem:[%s12 + $0x1c0] sm:$0xf]
    %v3397 = vld [vmem:[%s12 + $0x1c4] sm:$0xf]
    %v3398 = vld [vmem:[%s12 + $0x1c8] sm:$0xf]
    %v3399 = vld [vmem:[%s12 + $0x1cc] sm:$0xf]
    %v3400 = vld [vmem:[%s12 + $0x1d0] sm:$0xf]
    %v3401 = vld [vmem:[%s12 + $0x1d4] sm:$0xf]
    %v3402 = vld [vmem:[%s12 + $0x1d8] sm:$0xf]
    %v3403 = vld [vmem:[%s12 + $0x1dc] sm:$0xf]
    %v3404 = vld [vmem:[%s12 + $0x1e0] sm:$0xf]
    %v3405 = vld [vmem:[%s12 + $0x1e4] sm:$0xf]
    %v3406 = vld [vmem:[%s12 + $0x1e8] sm:$0xf]
    %v3407 = vld [vmem:[%s12 + $0x1ec] sm:$0xf]
    %v3408 = vld [vmem:[%s12 + $0x1f0] sm:$0xf]
    %v3409 = vld [vmem:[%s12 + $0x1f4] sm:$0xf]
    %v3410 = vld [vmem:[%s12 + $0x1f8] sm:$0xf]
    %v3411 = vld [vmem:[%s12 + $0x1fc] sm:$0xf]
    %v3412 = vld [vmem:[%s13] sm:$0x1]
    %v3414 = vperm.slane %v3412, 0
    %v3544 = vunpack.c.l.b16 %v3284
    %v3545 = vunpack.c.l.b16 %v3285
    %v3546 = vunpack.c.l.b16 %v3286
    %v3547 = vunpack.c.l.b16 %v3287
    %v3548 = vunpack.c.l.b16 %v3288
    %v3549 = vunpack.c.l.b16 %v3289
    %v3550 = vunpack.c.l.b16 %v3290
    %v3551 = vunpack.c.l.b16 %v3291
    %v3552 = vunpack.c.l.b16 %v3292
    %v3553 = vunpack.c.l.b16 %v3293
    %v3554 = vunpack.c.l.b16 %v3294
    %v3555 = vunpack.c.l.b16 %v3295
    %v3556 = vunpack.c.l.b16 %v3296
    %v3557 = vunpack.c.l.b16 %v3297
    %v3558 = vunpack.c.l.b16 %v3298
    %v3559 = vunpack.c.l.b16 %v3299
    %v3560 = vunpack.c.l.b16 %v3300
    %v3561 = vunpack.c.l.b16 %v3301
    %v3562 = vunpack.c.l.b16 %v3302
    %v3563 = vunpack.c.l.b16 %v3303
    %v3564 = vunpack.c.l.b16 %v3304
    %v3565 = vunpack.c.l.b16 %v3305
    %v3566 = vunpack.c.l.b16 %v3306
    %v3567 = vunpack.c.l.b16 %v3307
    %v3568 = vunpack.c.l.b16 %v3308
    %v3569 = vunpack.c.l.b16 %v3309
    %v3570 = vunpack.c.l.b16 %v3310
    %v3571 = vunpack.c.l.b16 %v3311
    %v3572 = vunpack.c.l.b16 %v3312
    %v3573 = vunpack.c.l.b16 %v3313
    %v3574 = vunpack.c.l.b16 %v3314
    %v3575 = vunpack.c.l.b16 %v3315
    %v3576 = vunpack.c.l.b16 %v3316
    %v3577 = vunpack.c.l.b16 %v3317
    %v3578 = vunpack.c.l.b16 %v3318
    %v3579 = vunpack.c.l.b16 %v3319
    %v3580 = vunpack.c.l.b16 %v3320
    %v3581 = vunpack.c.l.b16 %v3321
    %v3582 = vunpack.c.l.b16 %v3322
    %v3583 = vunpack.c.l.b16 %v3323
    %v3584 = vunpack.c.l.b16 %v3324
    %v3585 = vunpack.c.l.b16 %v3325
    %v3586 = vunpack.c.l.b16 %v3326
    %v3587 = vunpack.c.l.b16 %v3327
    %v3588 = vunpack.c.l.b16 %v3328
    %v3589 = vunpack.c.l.b16 %v3329
    %v3590 = vunpack.c.l.b16 %v3330
    %v3591 = vunpack.c.l.b16 %v3331
    %v3592 = vunpack.c.l.b16 %v3332
    %v3593 = vunpack.c.l.b16 %v3333
    %v3594 = vunpack.c.l.b16 %v3334
    %v3595 = vunpack.c.l.b16 %v3335
    %v3596 = vunpack.c.l.b16 %v3336
    %v3597 = vunpack.c.l.b16 %v3337
    %v3598 = vunpack.c.l.b16 %v3338
    %v3599 = vunpack.c.l.b16 %v3339
    %v3600 = vunpack.c.l.b16 %v3340
    %v3601 = vunpack.c.l.b16 %v3341
    %v3602 = vunpack.c.l.b16 %v3342
    %v3603 = vunpack.c.l.b16 %v3343
    %v3604 = vunpack.c.l.b16 %v3344
    %v3605 = vunpack.c.l.b16 %v3345
    %v3606 = vunpack.c.l.b16 %v3346
    %v3607 = vunpack.c.l.b16 %v3347
    %v3608 = vunpack.c.l.b16 %v3348
    %v3609 = vunpack.c.l.b16 %v3349
    %v3610 = vunpack.c.l.b16 %v3350
    %v3611 = vunpack.c.l.b16 %v3351
    %v3612 = vunpack.c.l.b16 %v3352
    %v3613 = vunpack.c.l.b16 %v3353
    %v3614 = vunpack.c.l.b16 %v3354
    %v3615 = vunpack.c.l.b16 %v3355
    %v3616 = vunpack.c.l.b16 %v3356
    %v3617 = vunpack.c.l.b16 %v3357
    %v3618 = vunpack.c.l.b16 %v3358
    %v3619 = vunpack.c.l.b16 %v3359
    %v3620 = vunpack.c.l.b16 %v3360
    %v3621 = vunpack.c.l.b16 %v3361
    %v3622 = vunpack.c.l.b16 %v3362
    %v3623 = vunpack.c.l.b16 %v3363
    %v3624 = vunpack.c.l.b16 %v3364
    %v3625 = vunpack.c.l.b16 %v3365
    %v3626 = vunpack.c.l.b16 %v3366
    %v3627 = vunpack.c.l.b16 %v3367
    %v3628 = vunpack.c.l.b16 %v3368
    %v3629 = vunpack.c.l.b16 %v3369
    %v3630 = vunpack.c.l.b16 %v3370
    %v3631 = vunpack.c.l.b16 %v3371
    %v3632 = vunpack.c.l.b16 %v3372
    %v3633 = vunpack.c.l.b16 %v3373
    %v3634 = vunpack.c.l.b16 %v3374
    %v3635 = vunpack.c.l.b16 %v3375
    %v3636 = vunpack.c.l.b16 %v3376
    %v3637 = vunpack.c.l.b16 %v3377
    %v3638 = vunpack.c.l.b16 %v3378
    %v3639 = vunpack.c.l.b16 %v3379
    %v3640 = vunpack.c.l.b16 %v3380
    %v3641 = vunpack.c.l.b16 %v3381
    %v3642 = vunpack.c.l.b16 %v3382
    %v3643 = vunpack.c.l.b16 %v3383
    %v3644 = vunpack.c.l.b16 %v3384
    %v3645 = vunpack.c.l.b16 %v3385
    %v3646 = vunpack.c.l.b16 %v3386
    %v3647 = vunpack.c.l.b16 %v3387
    %v3648 = vunpack.c.l.b16 %v3388
    %v3649 = vunpack.c.l.b16 %v3389
    %v3650 = vunpack.c.l.b16 %v3390
    %v3651 = vunpack.c.l.b16 %v3391
    %v3652 = vunpack.c.l.b16 %v3392
    %v3653 = vunpack.c.l.b16 %v3393
    %v3654 = vunpack.c.l.b16 %v3394
    %v3655 = vunpack.c.l.b16 %v3395
    %v3656 = vunpack.c.l.b16 %v3396
    %v3657 = vunpack.c.l.b16 %v3397
    %v3658 = vunpack.c.l.b16 %v3398
    %v3659 = vunpack.c.l.b16 %v3399
    %v3660 = vunpack.c.l.b16 %v3400
    %v3661 = vunpack.c.l.b16 %v3401
    %v3662 = vunpack.c.l.b16 %v3402
    %v3663 = vunpack.c.l.b16 %v3403
    %v3664 = vunpack.c.l.b16 %v3404
    %v3665 = vunpack.c.l.b16 %v3405
    %v3666 = vunpack.c.l.b16 %v3406
    %v3667 = vunpack.c.l.b16 %v3407
    %v3668 = vunpack.c.l.b16 %v3408
    %v3669 = vunpack.c.l.b16 %v3409
    %v3670 = vunpack.c.l.b16 %v3410
    %v3671 = vunpack.c.l.b16 %v3411
    %v3672 = vpack.c.b16 %v3545, %v3544
    %v3673 = vpack.c.b16 %v3547, %v3546
    %v3674 = vpack.c.b16 %v3549, %v3548
    %v3675 = vpack.c.b16 %v3551, %v3550
    %v3676 = vpack.c.b16 %v3553, %v3552
    %v3677 = vpack.c.b16 %v3555, %v3554
    %v3678 = vpack.c.b16 %v3557, %v3556
    %v3679 = vpack.c.b16 %v3559, %v3558
    %v3680 = vpack.c.b16 %v3561, %v3560
    %v3681 = vpack.c.b16 %v3563, %v3562
    %v3682 = vpack.c.b16 %v3565, %v3564
    %v3683 = vpack.c.b16 %v3567, %v3566
    %v3684 = vpack.c.b16 %v3569, %v3568
    %v3685 = vpack.c.b16 %v3571, %v3570
    %v3686 = vpack.c.b16 %v3573, %v3572
    %v3687 = vpack.c.b16 %v3575, %v3574
    %v3688 = vpack.c.b16 %v3577, %v3576
    %v3689 = vpack.c.b16 %v3579, %v3578
    %v3690 = vpack.c.b16 %v3581, %v3580
    %v3691 = vpack.c.b16 %v3583, %v3582
    %v3692 = vpack.c.b16 %v3585, %v3584
    %v3693 = vpack.c.b16 %v3587, %v3586
    %v3694 = vpack.c.b16 %v3589, %v3588
    %v3695 = vpack.c.b16 %v3591, %v3590
    %v3696 = vpack.c.b16 %v3593, %v3592
    %v3697 = vpack.c.b16 %v3595, %v3594
    %v3698 = vpack.c.b16 %v3597, %v3596
    %v3699 = vpack.c.b16 %v3599, %v3598
    %v3700 = vpack.c.b16 %v3601, %v3600
    %v3701 = vpack.c.b16 %v3603, %v3602
    %v3702 = vpack.c.b16 %v3605, %v3604
    %v3703 = vpack.c.b16 %v3607, %v3606
    %v3704 = vpack.c.b16 %v3609, %v3608
    %v3705 = vpack.c.b16 %v3611, %v3610
    %v3706 = vpack.c.b16 %v3613, %v3612
    %v3707 = vpack.c.b16 %v3615, %v3614
    %v3708 = vpack.c.b16 %v3617, %v3616
    %v3709 = vpack.c.b16 %v3619, %v3618
    %v3710 = vpack.c.b16 %v3621, %v3620
    %v3711 = vpack.c.b16 %v3623, %v3622
    %v3712 = vpack.c.b16 %v3625, %v3624
    %v3713 = vpack.c.b16 %v3627, %v3626
    %v3714 = vpack.c.b16 %v3629, %v3628
    %v3715 = vpack.c.b16 %v3631, %v3630
    %v3716 = vpack.c.b16 %v3633, %v3632
    %v3717 = vpack.c.b16 %v3635, %v3634
    %v3718 = vpack.c.b16 %v3637, %v3636
    %v3719 = vpack.c.b16 %v3639, %v3638
    %v3720 = vpack.c.b16 %v3641, %v3640
    %v3721 = vpack.c.b16 %v3643, %v3642
    %v3722 = vpack.c.b16 %v3645, %v3644
    %v3723 = vpack.c.b16 %v3647, %v3646
    %v3724 = vpack.c.b16 %v3649, %v3648
    %v3725 = vpack.c.b16 %v3651, %v3650
    %v3726 = vpack.c.b16 %v3653, %v3652
    %v3727 = vpack.c.b16 %v3655, %v3654
    %v3728 = vpack.c.b16 %v3657, %v3656
    %v3729 = vpack.c.b16 %v3659, %v3658
    %v3730 = vpack.c.b16 %v3661, %v3660
    %v3731 = vpack.c.b16 %v3663, %v3662
    %v3732 = vpack.c.b16 %v3665, %v3664
    %v3733 = vpack.c.b16 %v3667, %v3666
    %v3734 = vpack.c.b16 %v3669, %v3668
    %v3735 = vpack.c.b16 %v3671, %v3670
    %3800 = vmatpush.bf16.msra.mxu0 %v3679
    %3801 = vmatpush.bf16.msra.mxu0 %v3678
    %3802 = vmatpush.bf16.msra.mxu0 %v3677
    %3803 = vmatpush.bf16.msra.mxu0 %v3676
    %3804 = vmatpush.bf16.msra.mxu0 %v3675
    %3805 = vmatpush.bf16.msra.mxu0 %v3674
    %3806 = vmatpush.bf16.msra.mxu0 %v3673
    %3807 = vmatpush.bf16.msra.mxu0 %v3672
    %3808 = vmatmul.bf16.gmra.mxu0 %v3276
    %v3809 = vpop.f32.mrf.mxu0
    %v3810 = vadd.f32 %v3414, %v3809
    %v3811 = vpop.f32.mrf.mxu0
    %3812 = vdwg.mxu0
    %3813 = vmatpush.bf16.msra.mxu0 %v3687
    %3814 = vmatpush.bf16.msra.mxu0 %v3686
    %3815 = vmatpush.bf16.msra.mxu0 %v3685
    %3816 = vmatpush.bf16.msra.mxu0 %v3684
    %3817 = vmatpush.bf16.msra.mxu0 %v3683
    %3818 = vmatpush.bf16.msra.mxu0 %v3682
    %3819 = vmatpush.bf16.msra.mxu0 %v3681
    %3820 = vmatpush.bf16.msra.mxu0 %v3680
    %3821 = vmatmul.bf16.gmra.mxu0 %v3277
    %v3822 = vpop.f32.mrf.mxu0
    %v3823 = vadd.f32 %v3810, %v3822
    %v3824 = vpop.f32.mrf.mxu0
    %3825 = vdwg.mxu0
    %3826 = vmatpush.bf16.msra.mxu0 %v3695
    %3827 = vmatpush.bf16.msra.mxu0 %v3694
    %3828 = vmatpush.bf16.msra.mxu0 %v3693
    %3829 = vmatpush.bf16.msra.mxu0 %v3692
    %3830 = vmatpush.bf16.msra.mxu0 %v3691
    %3831 = vmatpush.bf16.msra.mxu0 %v3690
    %3832 = vmatpush.bf16.msra.mxu0 %v3689
    %3833 = vmatpush.bf16.msra.mxu0 %v3688
    %3834 = vmatmul.bf16.gmra.mxu0 %v3278
    %v3835 = vpop.f32.mrf.mxu0
    %v3836 = vadd.f32 %v3823, %v3835
    %v3837 = vpop.f32.mrf.mxu0
    %3838 = vdwg.mxu0
    %3839 = vmatpush.bf16.msra.mxu0 %v3703
    %3840 = vmatpush.bf16.msra.mxu0 %v3702
    %3841 = vmatpush.bf16.msra.mxu0 %v3701
    %3842 = vmatpush.bf16.msra.mxu0 %v3700
    %3843 = vmatpush.bf16.msra.mxu0 %v3699
    %3844 = vmatpush.bf16.msra.mxu0 %v3698
    %3845 = vmatpush.bf16.msra.mxu0 %v3697
    %3846 = vmatpush.bf16.msra.mxu0 %v3696
    %3847 = vmatmul.bf16.gmra.mxu0 %v3279
    %v3848 = vpop.f32.mrf.mxu0
    %v3849 = vadd.f32 %v3836, %v3848
    %v3850 = vpop.f32.mrf.mxu0
    %3851 = vdwg.mxu0
    %3852 = vmatpush.bf16.msra.mxu0 %v3711
    %3853 = vmatpush.bf16.msra.mxu0 %v3710
    %3854 = vmatpush.bf16.msra.mxu0 %v3709
    %3855 = vmatpush.bf16.msra.mxu0 %v3708
    %3856 = vmatpush.bf16.msra.mxu0 %v3707
    %3857 = vmatpush.bf16.msra.mxu0 %v3706
    %3858 = vmatpush.bf16.msra.mxu0 %v3705
    %3859 = vmatpush.bf16.msra.mxu0 %v3704
    %3860 = vmatmul.bf16.gmra.mxu0 %v3280
    %v3861 = vpop.f32.mrf.mxu0
    %v3862 = vadd.f32 %v3849, %v3861
    %v3863 = vpop.f32.mrf.mxu0
    %3864 = vdwg.mxu0
    %3865 = vmatpush.bf16.msra.mxu0 %v3719
    %3866 = vmatpush.bf16.msra.mxu0 %v3718
    %3867 = vmatpush.bf16.msra.mxu0 %v3717
    %3868 = vmatpush.bf16.msra.mxu0 %v3716
    %3869 = vmatpush.bf16.msra.mxu0 %v3715
    %3870 = vmatpush.bf16.msra.mxu0 %v3714
    %3871 = vmatpush.bf16.msra.mxu0 %v3713
    %3872 = vmatpush.bf16.msra.mxu0 %v3712
    %3873 = vmatmul.bf16.gmra.mxu0 %v3281
    %v3874 = vpop.f32.mrf.mxu0
    %v3875 = vadd.f32 %v3862, %v3874
    %v3876 = vpop.f32.mrf.mxu0
    %3877 = vdwg.mxu0
    %3878 = vmatpush.bf16.msra.mxu0 %v3727
    %3879 = vmatpush.bf16.msra.mxu0 %v3726
    %3880 = vmatpush.bf16.msra.mxu0 %v3725
    %3881 = vmatpush.bf16.msra.mxu0 %v3724
    %3882 = vmatpush.bf16.msra.mxu0 %v3723
    %3883 = vmatpush.bf16.msra.mxu0 %v3722
    %3884 = vmatpush.bf16.msra.mxu0 %v3721
    %3885 = vmatpush.bf16.msra.mxu0 %v3720
    %3886 = vmatmul.bf16.gmra.mxu0 %v3282
    %v3887 = vpop.f32.mrf.mxu0
    %v3888 = vadd.f32 %v3875, %v3887
    %v3889 = vpop.f32.mrf.mxu0
    %3890 = vdwg.mxu0
    %3891 = vmatpush.bf16.msra.mxu0 %v3735
    %3892 = vmatpush.bf16.msra.mxu0 %v3734
    %3893 = vmatpush.bf16.msra.mxu0 %v3733
    %3894 = vmatpush.bf16.msra.mxu0 %v3732
    %3895 = vmatpush.bf16.msra.mxu0 %v3731
    %3896 = vmatpush.bf16.msra.mxu0 %v3730
    %3897 = vmatpush.bf16.msra.mxu0 %v3729
    %3898 = vmatpush.bf16.msra.mxu0 %v3728
    %3899 = vmatmul.bf16.gmra.mxu0 %v3283
    %v3900 = vpop.f32.mrf.mxu0
    %v3901 = vadd.f32 %v3888, %v3900
    %v3902 = vpop.f32.mrf.mxu0
    %3903 = vdwg.mxu0
    %vm3904 = vcmask 523264
    %3905 = vst.msk [vmem:[#allocation5] sm:$0xff] %vm3904, %v3901
    // Predicated region
    $region62: #{generator_forward.1} parent=1 // pred_check
      _
    $region63: #{generator_forward.1} parent=1 // pred_check_branch
      %3907 = sbr.rel (0) target = $region65
    $region64: #{generator_forward.1} parent=1 // pred_region
      %3909 = vsyncadd [#allocation4], 0
      %s3911 = sshll.u32 [#allocation5], 4
      %s3912 = int_to_ptr.vmem [resolvable:$true] %s3911
      %s3913 = sshll.u32 %s14, 4
      %s3914 = int_to_ptr.hbm [resolvable:$true] %s3913
      %3916 = dma.vmem_to_hbm [thread:$0]  %s3912, 128, %s3914, [#allocation4]
    $region65: #{generator_forward.1} parent=1 // pred_fallthru
      _
    // Predicated region
    $region66: #{generator_forward.1} parent=1 // pred_check
      _
    $region67: #{generator_forward.1} parent=1 // pred_check_branch
      %3918 = sbr.rel (0) target = $region69
    $region68: #{generator_forward.1} parent=1 // pred_region
      %3920 = dma.done [#allocation4], 128
    $region69: #{generator_forward.1} parent=1 // pred_fallthru
      _
    %3921 = vsyncpa [#allocation3], 1
    %3922 = vsyncpa [#allocation4], 1

</llo_original>
